<compile_context>
chip_gen: v5e
topology: v5e:2x2
jax: 0.10.0
libtpu: 0.0.40
codegen_flags: <defaults>
</compile_context>

<pallas_src>
import functools

import jax
import jax.numpy as jnp
import numpy as np
from jax import lax
from jax.experimental import pallas as pl
from jax.experimental.pallas import tpu as pltpu

LEAKY_SLOPE = 0.01   # nn.LeakyReLU default
BN_EPS = 1e-5        # nn.BatchNorm2d default

# Sub-pixel phase tap selection for ConvTranspose2d(k=4, stride=2, pad=1):
# _TAP_SEL[r][dh] = kernel row used by output phase r at padded-window row dh
# (None = tap unused by that phase).  Same table applies to columns.
_TAP_SEL = ((3, 1, None), (None, 2, 0))


# ------------------------------- small helpers ------------------------------
def _largest_divisor(n, cap):
    cap = max(1, min(cap, n))
    for d in range(cap, 0, -1):
        if n % d == 0:
            return d
    return 1


def _pick_band(n, h, w, target_rows=256, min_steps=4):
    """Rows-per-band bh (a divisor of H) so bh*W <= target_rows and the
    (batch, band) grid has >= min_steps steps when possible."""
    cap_rows = max(1, target_rows // max(w, 1))
    cap_steps = max(1, (n * h) // min_steps)
    return _largest_divisor(h, min(cap_rows, cap_steps))


def _pick_tile(m, cap=512, min_steps=4):
    return _largest_divisor(m, min(cap, max(8, m // min_steps)))


def _vmem_limit(block_bytes, extra_bytes=0):
    """Explicit scoped-VMEM request: double-buffered blocks + temporaries,
    clamped to [32 MiB, 64 MiB] (64 MiB = v7x physical VMEM per core)."""
    est = int(3 * block_bytes + extra_bytes) + (4 << 20)
    return int(min(max(est, 32 << 20), 64 << 20))


# ----------------------------- Pallas kernels ------------------------------
def _deconv_gather_stats_kernel(xp_ref, w_ref, y_ref, s_ref, q_ref, *,
                                bh, wsp, cin, nl):
    """Fused 3x3 tap gather (in VMEM) + phase matmul + partial BN stats.

    xp_ref : (1, H+2, W+2, Cin) bf16 -- whole 1-padded image of one batch elem
    w_ref  : (9, Cin, 4*Cout)   bf16 -- per-tap phase-major deconv weight
    y_ref  : (bh*W, 4*Cout)     bf16 -- pre-BN rows of this (batch, band) tile
    s_ref  : (8, 4*Cout)        f32  -- per-tile partial sum   (sublane groups)
    q_ref  : (8, 4*Cout)        f32  -- per-tile partial sumsq (sublane groups)
    """
    b = pl.program_id(1)
    rows = bh * wsp
    # Output rows [b*bh, b*bh+bh) need padded input rows [b*bh, b*bh+bh+2).
    band = xp_ref[0, pl.ds(b * bh, bh + 2)]            # (bh+2, W+2, Cin) bf16

    # Tap-decomposed deconv: 9 accumulating matmuls entirely in vregs -- the
    # (rows, 9*Cin) im2col never exists, neither in VMEM nor in HBM.
    y = None
    t = 0
    for dh in range(3):
        for dw in range(3):
            tap = band[dh:dh + bh, dw:dw + wsp, :].reshape(rows, cin)
            part = jnp.dot(tap, w_ref[t], preferred_element_type=jnp.float32)
            y = part if y is None else y + part
            t += 1

    y_ref[...] = y.astype(y_ref.dtype)                 # bf16 intermediate

    # Partial BN statistics while the tile is still in vregs.  Only a
    # sublane-grouped (rows//8 -> 8) VALU reduction happens in-kernel; the
    # final 8->1 and cross-tile reductions run in plain JAX on tiny arrays.
    if rows % 8 == 0:
        s_ref[...] = jnp.sum(y.reshape(rows // 8, 8, nl), axis=0)
        q_ref[...] = jnp.sum((y * y).reshape(rows // 8, 8, nl), axis=0)
    else:
        pad7 = jnp.zeros((7, nl), jnp.float32)
        s_ref[...] = jnp.concatenate(
            [jnp.sum(y, axis=0, keepdims=True), pad7], axis=0)
        q_ref[...] = jnp.concatenate(
            [jnp.sum(y * y, axis=0, keepdims=True), pad7], axis=0)


def _bn_leaky_kernel(y_ref, scale_ref, shift_ref, o_ref):
    """BN-apply + LeakyReLU.  bf16 in / bf16 out, f32 arithmetic."""
    z = y_ref[...].astype(jnp.float32) * scale_ref[...] + shift_ref[...]
    o_ref[...] = jnp.where(z >= 0, z, LEAKY_SLOPE * z).astype(o_ref.dtype)


def _bn_leaky_conv_kernel(y_ref, scale_ref, shift_ref, wc_ref, bc_ref, o_ref):
    """BN-apply + LeakyReLU + fused final 1x1 conv (block-diag over phases,
    output padded to a 128-lane-dense, unmasked store)."""
    z = y_ref[...].astype(jnp.float32) * scale_ref[...] + shift_ref[...]
    z = jnp.where(z >= 0, z, LEAKY_SLOPE * z)
    o_ref[...] = (jnp.dot(z.astype(wc_ref.dtype), wc_ref[...],
                          preferred_element_type=jnp.float32) + bc_ref[...])


# ------------------------------ Pallas wrappers -----------------------------
def _pallas_deconv_stats(xp, w_tap, n, h, w, cin, cout, bh):
    hp, wp = h + 2, w + 2
    nl = 4 * cout
    rows = bh * w
    n_bands = h // bh
    m = n * h * w
    g = n * n_bands

    block_bytes = (hp * wp * cin * 2          # padded image block (bf16)
                   + 9 * cin * nl * 2         # per-tap weight (bf16)
                   + rows * nl * 2            # y tile (bf16)
                   + 2 * 8 * nl * 4)          # partial stats (f32)
    extra = rows * nl * 8 + 9 * rows * cin * 2 + (bh + 2) * wp * cin * 2
    kern = functools.partial(_deconv_gather_stats_kernel,
                             bh=bh, wsp=w, cin=cin, nl=nl)
    return pl.pallas_call(
        kern,
        out_shape=(jax.ShapeDtypeStruct((m, nl), jnp.bfloat16),
                   jax.ShapeDtypeStruct((g * 8, nl), jnp.float32),
                   jax.ShapeDtypeStruct((g * 8, nl), jnp.float32)),
        grid_spec=pltpu.PrefetchScalarGridSpec(
            num_scalar_prefetch=0,
            grid=(n, n_bands),
            in_specs=[pl.BlockSpec((1, hp, wp, cin),
                                   lambda i, b: (i, 0, 0, 0)),
                      pl.BlockSpec((9, cin, nl), lambda i, b: (0, 0, 0))],
            out_specs=(pl.BlockSpec((rows, nl),
                                    lambda i, b: (i * n_bands + b, 0)),
                       pl.BlockSpec((8, nl),
                                    lambda i, b: (i * n_bands + b, 0)),
                       pl.BlockSpec((8, nl),
                                    lambda i, b: (i * n_bands + b, 0)))),
        compiler_params=pltpu.CompilerParams(
            dimension_semantics=("parallel", "parallel"),
            vmem_limit_bytes=_vmem_limit(block_bytes, extra)),
    )(xp, w_tap)


def _pallas_bn_leaky(y, scale_l, shift_l, tm):
    m, nl = y.shape
    block_bytes = 2 * tm * nl * 2 + 2 * nl * 4
    return pl.pallas_call(
        _bn_leaky_kernel,
        out_shape=jax.ShapeDtypeStruct((m, nl), jnp.bfloat16),
        grid_spec=pltpu.PrefetchScalarGridSpec(
            num_scalar_prefetch=0,
            grid=(m // tm,),
            in_specs=[pl.BlockSpec((tm, nl), lambda i: (i, 0)),
                      pl.BlockSpec((1, nl), lambda i: (0, 0)),
                      pl.BlockSpec((1, nl), lambda i: (0, 0))],
            out_specs=pl.BlockSpec((tm, nl), lambda i: (i, 0))),
        compiler_params=pltpu.CompilerParams(
            dimension_semantics=("parallel",),
            vmem_limit_bytes=_vmem_limit(block_bytes, 2 * tm * nl * 4)),
    )(y, scale_l, shift_l)


def _pallas_bn_leaky_conv(y, scale_l, shift_l, wc, bc, tm):
    m, nl = y.shape
    no = wc.shape[1]
    block_bytes = tm * nl * 2 + 2 * nl * 4 + nl * no * 2 + no * 4 + tm * no * 4
    return pl.pallas_call(
        _bn_leaky_conv_kernel,
        out_shape=jax.ShapeDtypeStruct((m, no), jnp.float32),
        grid_spec=pltpu.PrefetchScalarGridSpec(
            num_scalar_prefetch=0,
            grid=(m // tm,),
            in_specs=[pl.BlockSpec((tm, nl), lambda i: (i, 0)),
                      pl.BlockSpec((1, nl), lambda i: (0, 0)),
                      pl.BlockSpec((1, nl), lambda i: (0, 0)),
                      pl.BlockSpec((nl, no), lambda i: (0, 0)),
                      pl.BlockSpec((1, no), lambda i: (0, 0))],
            out_specs=pl.BlockSpec((tm, no), lambda i: (i, 0))),
        compiler_params=pltpu.CompilerParams(
            dimension_semantics=("parallel",),
            vmem_limit_bytes=_vmem_limit(block_bytes, 2 * tm * nl * 4)),
    )(y, scale_l, shift_l, wc, bc)


# ------------------------- layer glue (plain JAX) ---------------------------
def _phase_weight(w):
    """(Cin, Cout, 4, 4) ConvTranspose2d weight -> (9, Cin, 4*Cout) per-tap
    phase matrices.  Tap index = dh*3 + dw over the 1-padded 3x3 window;
    columns are phase-major: col = (r*2 + c)*Cout + cout (lane-dense)."""
    cin, cout = w.shape[0], w.shape[1]
    wb = jnp.zeros((3, 3, cin, 2, 2, cout), jnp.float32)
    for r in range(2):
        for dh in range(3):
            kh = _TAP_SEL[r][dh]
            if kh is None:
                continue
            for c in range(2):
                for dw in range(3):
                    kw = _TAP_SEL[c][dw]
                    if kw is None:
                        continue
                    wb = wb.at[dh, dw, :, r, c, :].set(w[:, :, kh, kw])
    return wb.reshape(9, cin, 4 * cout)


def deconv_bn_lrelu_layer(x_nhwc, w, fused_conv=None):
    """ConvTranspose2d(k=4,s=2,p=1,bias=False) + BatchNorm2d(training-mode
    batch stats, gamma=1, beta=0) + LeakyReLU, optionally fused with the
    final 1x1 Conv2d(+bias).  NHWC bf16 in; NHWC out (bf16, or f32 fused)."""
    n, h, wd, cin = x_nhwc.shape
    cout = w.shape[1]
    m = n * h * wd
    nl = 4 * cout

    bh = _pick_band(n, h, wd)
    xp = jnp.pad(x_nhwc.astype(jnp.bfloat16), ((0, 0), (1, 1), (1, 1), (0, 0)))
    w_tap = _phase_weight(w).astype(jnp.bfloat16)

    y, s_p, q_p = _pallas_deconv_stats(xp, w_tap, n, h, wd, cin, cout, bh)

    # Per-channel batch statistics from the per-tile partials (tiny arrays):
    # reduce tiles and the 4 phase groups; count = N*(2H)*(2W) exactly.
    count = 4.0 * m
    s_c = jnp.sum(s_p, axis=0).reshape(4, cout).sum(axis=0)
    q_c = jnp.sum(q_p, axis=0).reshape(4, cout).sum(axis=0)
    mean = s_c / count
    # TODO(synk): single-pass E[x^2]-mean^2 loses precision when |mean|>>std
    # (real checkpoints); clamped here, a two-pass reduction would be exact.
    var = jnp.maximum(q_c / count - mean * mean, 0.0)
    scale = lax.rsqrt(var + BN_EPS)                   # BN weight init = 1
    shift = -mean * scale                             # BN bias init = 0
    scale_l = jnp.tile(scale, 4).reshape(1, nl)
    shift_l = jnp.tile(shift, 4).reshape(1, nl)

    tm = _pick_tile(m)
    if fused_conv is None:
        z = _pallas_bn_leaky(y, scale_l, shift_l, tm)
        c_out = cout
    else:
        wc, bc = fused_conv
        z = _pallas_bn_leaky_conv(y, scale_l, shift_l, wc, bc, tm)
        c_out = wc.shape[1] // 4

    # depth-to-space: lanes are (phase_r, phase_c, channel).
    # TODO(synk): this relayout + the next layer's pad still cost one XLA
    # pass over the activation per layer; folding them into the kernels'
    # store/gather index_maps is left out to keep the BlockSpecs simple.
    z = z.reshape(n, h, wd, 2, 2, c_out)
    z = z.transpose(0, 1, 3, 2, 4, 5).reshape(n, 2 * h, 2 * wd, c_out)
    return z


def deconv_head_forward(x_nchw, deconv_ws, conv_w, conv_b):
    """DeconvHead: N x [ConvTranspose2d + BN + LeakyReLU] + Conv2d(1x1,bias)."""
    x = jnp.transpose(x_nchw, (0, 2, 3, 1)).astype(jnp.bfloat16)  # NHWC once
    n_layers = len(deconv_ws)

    # Final 1x1 Conv2d folded into the last layer's BN+LeakyReLU kernel as a
    # block-diagonal (4*nf, 4*c_pad) matmul; c_pad pads each phase's output
    # channels so the fused kernel's stores are full 128-lane (unmasked).
    c_final, nf = conv_w.shape[0], conv_w.shape[1]
    c_pad = max(c_final, (-(-4 * c_final // 128) * 128) // 4)
    w1 = conv_w.reshape(c_final, nf).T.astype(jnp.float32)       # (nf, c_final)
    wc = jnp.zeros((4 * nf, 4 * c_pad), jnp.float32)
    bc = jnp.zeros((4 * c_pad,), jnp.float32)
    for p in range(4):
        wc = wc.at[p * nf:(p + 1) * nf,
                   p * c_pad:p * c_pad + c_final].set(w1)
        bc = bc.at[p * c_pad:p * c_pad + c_final].set(
            conv_b.astype(jnp.float32))
    wc = wc.astype(jnp.bfloat16)
    bc = bc.reshape(1, 4 * c_pad)

    for li, w in enumerate(deconv_ws):
        fused = (wc, bc) if li == n_layers - 1 else None
        x = deconv_bn_lrelu_layer(x, w, fused_conv=fused)

    x = x[..., :c_final]                                         # drop lane pad
    return jnp.transpose(x, (0, 3, 1, 2)).astype(jnp.float32)    # NCHW once


def inpainting_net_forward(x, deconv_ws, conv_w, conv_b):
    """InpaintingNet.forward: encode = backbone(x); decode = head(encode)."""
    # TODO(synk): the backbone is an externally supplied module in
    # InpaintingNet; the encoder features are taken to be the given input.
    encode = x
    decode = deconv_head_forward(encode, deconv_ws, conv_w, conv_b)
    return encode, decode


# --------------------------- pure-JAX reference -----------------------------
def ref_forward(x, deconv_ws, conv_w, conv_b, k=4, padding=1, output_padding=0):
    for w in deconv_ws:
        wt = jnp.transpose(w, (1, 0, 2, 3))[:, :, ::-1, ::-1]
        x = lax.conv_general_dilated(
            x, wt, window_strides=(1, 1),
            padding=[(k - 1 - padding, k - 1 - padding + output_padding)] * 2,
            lhs_dilation=(2, 2),
            dimension_numbers=("NCHW", "OIHW", "NCHW"),
            precision=lax.Precision.HIGHEST)
        mean = jnp.mean(x, axis=(0, 2, 3), keepdims=True)
        var = jnp.mean((x - mean) ** 2, axis=(0, 2, 3), keepdims=True)
        x = (x - mean) / jnp.sqrt(var + BN_EPS)
        x = jnp.where(x >= 0, x, LEAKY_SLOPE * x)
    y = lax.conv_general_dilated(
        x, conv_w, (1, 1), "VALID",
        dimension_numbers=("NCHW", "OIHW", "NCHW"),
        precision=lax.Precision.HIGHEST)
    return y + conv_b.reshape(1, -1, 1, 1)


# ------------------------------------ main -----------------------------------
if __name__ == "__main__":
    # DeconvHead config (small, synthetic):
    #   in_channels=4, num_layers=2, num_filters=32, kernel_size=4
    #   (-> padding=1, output_padding=0), conv_kernel_size=1,
    #   num_joints=4, depth_dim=2 -> 8 output channels.
    in_channels, num_layers, num_filters = 4, 2, 32
    kernel_size = 4
    num_joints, depth_dim = 4, 2
    conv_num_filters = num_joints * depth_dim

    key = jax.random.PRNGKey(0)
    keys = jax.random.split(key, num_layers + 3)

    # ConvTranspose2d weights: (in, out, k, k), normal(0, 0.001)
    deconv_ws = []
    cin = in_channels
    for i in range(num_layers):
        deconv_ws.append(0.001 * jax.random.normal(
            keys[i], (cin, num_filters, kernel_size, kernel_size), jnp.float32))
        cin = num_filters
    # Final Conv2d: weight (out, in, 1, 1), small bias to exercise the fusion.
    conv_w = 0.001 * jax.random.normal(
        keys[num_layers], (conv_num_filters, num_filters, 1, 1), jnp.float32)
    conv_b = 0.001 * jax.random.normal(
        keys[num_layers + 1], (conv_num_filters,), jnp.float32)

    x = jax.random.normal(keys[num_layers + 2], (2, in_channels, 16, 16),
                          jnp.float32)

    fwd = jax.jit(inpainting_net_forward)
    encode, decode = fwd(x, deconv_ws, conv_w, conv_b)
    decode = jax.block_until_ready(decode)
    assert decode.shape == (2, conv_num_filters, 64, 64), decode.shape

    ref = ref_forward(x, deconv_ws, conv_w, conv_b)
    np.testing.assert_allclose(np.asarray(decode), np.asarray(ref),
                               rtol=5e-2, atol=5e-4)
    np.testing.assert_allclose(np.asarray(encode), np.asarray(x))
    print("KERNEL_OK")
</pallas_src>

<mosaic_0001>
module attributes {stable_mosaic.version = 11 : i64} {
  func.func @_deconv_gather_stats_kernel(%arg0: i32, %arg1: i32, %arg2: memref<1x18x18x4xbf16, #tpu.memory_space<vmem>>, %arg3: memref<9x4x128xbf16, #tpu.memory_space<vmem>>, %arg4: memref<128x128xbf16, #tpu.memory_space<vmem>>, %arg5: memref<8x128xf32, #tpu.memory_space<vmem>>, %arg6: memref<8x128xf32, #tpu.memory_space<vmem>>) attributes {dimension_semantics = [#tpu.dimension_semantics<parallel>, #tpu.dimension_semantics<parallel>], iteration_bounds = array<i64: 2, 2>, scalar_prefetch = 0 : i64, scratch_operands = 0 : i64, tpu.core_type = #tpu.core_type<tc>, window_params = [{transform_indices = @transform_0, window_bounds = array<i64: 1, 18, 18, 4>}, {pipeline_mode = #tpu.pipeline_mode<synchronous>, transform_indices = @transform_1, window_bounds = array<i64: 9, 4, 128>}, {transform_indices = @transform_2, window_bounds = array<i64: 128, 128>}, {transform_indices = @transform_3, window_bounds = array<i64: 8, 128>}, {transform_indices = @transform_4, window_bounds = array<i64: 8, 128>}]} {
    %c8_i32 = arith.constant 8 : i32
    %0 = arith.muli %arg1, %c8_i32 : i32
    %c0 = arith.constant 0 : index
    %1 = arith.index_cast %0 : i32 to index
    %c0_0 = arith.constant 0 : index
    %c0_1 = arith.constant 0 : index
    %2 = vector.load %arg2[%c0, %1, %c0_0, %c0_1] : memref<1x18x18x4xbf16, #tpu.memory_space<vmem>>, vector<1x10x18x4xbf16>
    %3 = vector.shape_cast %2 : vector<1x10x18x4xbf16> to vector<10x18x4xbf16>
    %4 = vector.extract_strided_slice %3 {offsets = [0, 0, 0], sizes = [8, 16, 4], strides = [1, 1, 1]} : vector<10x18x4xbf16> to vector<8x16x4xbf16>
    %5 = vector.shape_cast %4 : vector<8x16x4xbf16> to vector<128x4xbf16>
    %c0_2 = arith.constant 0 : index
    %c0_3 = arith.constant 0 : index
    %c0_4 = arith.constant 0 : index
    %6 = vector.load %arg3[%c0_2, %c0_3, %c0_4] : memref<9x4x128xbf16, #tpu.memory_space<vmem>>, vector<1x4x128xbf16>
    %7 = vector.shape_cast %6 : vector<1x4x128xbf16> to vector<4x128xbf16>
    %cst = arith.constant dense<0.000000e+00> : vector<128x128xf32>
    %8 = tpu.matmul %5, %7, %cst {dimension_numbers = #tpu.dot_dimension_numbers<[1], [0], [0], [1], [0, 0, 1, 1], [], []>} : vector<128x4xbf16>, vector<4x128xbf16>, vector<128x128xf32> -> vector<128x128xf32>
    %9 = vector.extract_strided_slice %3 {offsets = [0, 1, 0], sizes = [8, 16, 4], strides = [1, 1, 1]} : vector<10x18x4xbf16> to vector<8x16x4xbf16>
    %10 = vector.shape_cast %9 : vector<8x16x4xbf16> to vector<128x4xbf16>
    %c1 = arith.constant 1 : index
    %c0_5 = arith.constant 0 : index
    %c0_6 = arith.constant 0 : index
    %11 = vector.load %arg3[%c1, %c0_5, %c0_6] : memref<9x4x128xbf16, #tpu.memory_space<vmem>>, vector<1x4x128xbf16>
    %12 = vector.shape_cast %11 : vector<1x4x128xbf16> to vector<4x128xbf16>
    %cst_7 = arith.constant dense<0.000000e+00> : vector<128x128xf32>
    %13 = tpu.matmul %10, %12, %cst_7 {dimension_numbers = #tpu.dot_dimension_numbers<[1], [0], [0], [1], [0, 0, 1, 1], [], []>} : vector<128x4xbf16>, vector<4x128xbf16>, vector<128x128xf32> -> vector<128x128xf32>
    %14 = arith.addf %8, %13 : vector<128x128xf32>
    %15 = vector.extract_strided_slice %3 {offsets = [0, 2, 0], sizes = [8, 16, 4], strides = [1, 1, 1]} : vector<10x18x4xbf16> to vector<8x16x4xbf16>
    %16 = vector.shape_cast %15 : vector<8x16x4xbf16> to vector<128x4xbf16>
    %c2 = arith.constant 2 : index
    %c0_8 = arith.constant 0 : index
    %c0_9 = arith.constant 0 : index
    %17 = vector.load %arg3[%c2, %c0_8, %c0_9] : memref<9x4x128xbf16, #tpu.memory_space<vmem>>, vector<1x4x128xbf16>
    %18 = vector.shape_cast %17 : vector<1x4x128xbf16> to vector<4x128xbf16>
    %cst_10 = arith.constant dense<0.000000e+00> : vector<128x128xf32>
    %19 = tpu.matmul %16, %18, %cst_10 {dimension_numbers = #tpu.dot_dimension_numbers<[1], [0], [0], [1], [0, 0, 1, 1], [], []>} : vector<128x4xbf16>, vector<4x128xbf16>, vector<128x128xf32> -> vector<128x128xf32>
    %20 = arith.addf %14, %19 : vector<128x128xf32>
    %21 = vector.extract_strided_slice %3 {offsets = [1, 0, 0], sizes = [8, 16, 4], strides = [1, 1, 1]} : vector<10x18x4xbf16> to vector<8x16x4xbf16>
    %22 = vector.shape_cast %21 : vector<8x16x4xbf16> to vector<128x4xbf16>
    %c3 = arith.constant 3 : index
    %c0_11 = arith.constant 0 : index
    %c0_12 = arith.constant 0 : index
    %23 = vector.load %arg3[%c3, %c0_11, %c0_12] : memref<9x4x128xbf16, #tpu.memory_space<vmem>>, vector<1x4x128xbf16>
    %24 = vector.shape_cast %23 : vector<1x4x128xbf16> to vector<4x128xbf16>
    %cst_13 = arith.constant dense<0.000000e+00> : vector<128x128xf32>
    %25 = tpu.matmul %22, %24, %cst_13 {dimension_numbers = #tpu.dot_dimension_numbers<[1], [0], [0], [1], [0, 0, 1, 1], [], []>} : vector<128x4xbf16>, vector<4x128xbf16>, vector<128x128xf32> -> vector<128x128xf32>
    %26 = arith.addf %20, %25 : vector<128x128xf32>
    %27 = vector.extract_strided_slice %3 {offsets = [1, 1, 0], sizes = [8, 16, 4], strides = [1, 1, 1]} : vector<10x18x4xbf16> to vector<8x16x4xbf16>
    %28 = vector.shape_cast %27 : vector<8x16x4xbf16> to vector<128x4xbf16>
    %c4 = arith.constant 4 : index
    %c0_14 = arith.constant 0 : index
    %c0_15 = arith.constant 0 : index
    %29 = vector.load %arg3[%c4, %c0_14, %c0_15] : memref<9x4x128xbf16, #tpu.memory_space<vmem>>, vector<1x4x128xbf16>
    %30 = vector.shape_cast %29 : vector<1x4x128xbf16> to vector<4x128xbf16>
    %cst_16 = arith.constant dense<0.000000e+00> : vector<128x128xf32>
    %31 = tpu.matmul %28, %30, %cst_16 {dimension_numbers = #tpu.dot_dimension_numbers<[1], [0], [0], [1], [0, 0, 1, 1], [], []>} : vector<128x4xbf16>, vector<4x128xbf16>, vector<128x128xf32> -> vector<128x128xf32>
    %32 = arith.addf %26, %31 : vector<128x128xf32>
    %33 = vector.extract_strided_slice %3 {offsets = [1, 2, 0], sizes = [8, 16, 4], strides = [1, 1, 1]} : vector<10x18x4xbf16> to vector<8x16x4xbf16>
    %34 = vector.shape_cast %33 : vector<8x16x4xbf16> to vector<128x4xbf16>
    %c5 = arith.constant 5 : index
    %c0_17 = arith.constant 0 : index
    %c0_18 = arith.constant 0 : index
    %35 = vector.load %arg3[%c5, %c0_17, %c0_18] : memref<9x4x128xbf16, #tpu.memory_space<vmem>>, vector<1x4x128xbf16>
    %36 = vector.shape_cast %35 : vector<1x4x128xbf16> to vector<4x128xbf16>
    %cst_19 = arith.constant dense<0.000000e+00> : vector<128x128xf32>
    %37 = tpu.matmul %34, %36, %cst_19 {dimension_numbers = #tpu.dot_dimension_numbers<[1], [0], [0], [1], [0, 0, 1, 1], [], []>} : vector<128x4xbf16>, vector<4x128xbf16>, vector<128x128xf32> -> vector<128x128xf32>
    %38 = arith.addf %32, %37 : vector<128x128xf32>
    %39 = vector.extract_strided_slice %3 {offsets = [2, 0, 0], sizes = [8, 16, 4], strides = [1, 1, 1]} : vector<10x18x4xbf16> to vector<8x16x4xbf16>
    %40 = vector.shape_cast %39 : vector<8x16x4xbf16> to vector<128x4xbf16>
    %c6 = arith.constant 6 : index
    %c0_20 = arith.constant 0 : index
    %c0_21 = arith.constant 0 : index
    %41 = vector.load %arg3[%c6, %c0_20, %c0_21] : memref<9x4x128xbf16, #tpu.memory_space<vmem>>, vector<1x4x128xbf16>
    %42 = vector.shape_cast %41 : vector<1x4x128xbf16> to vector<4x128xbf16>
    %cst_22 = arith.constant dense<0.000000e+00> : vector<128x128xf32>
    %43 = tpu.matmul %40, %42, %cst_22 {dimension_numbers = #tpu.dot_dimension_numbers<[1], [0], [0], [1], [0, 0, 1, 1], [], []>} : vector<128x4xbf16>, vector<4x128xbf16>, vector<128x128xf32> -> vector<128x128xf32>
    %44 = arith.addf %38, %43 : vector<128x128xf32>
    %45 = vector.extract_strided_slice %3 {offsets = [2, 1, 0], sizes = [8, 16, 4], strides = [1, 1, 1]} : vector<10x18x4xbf16> to vector<8x16x4xbf16>
    %46 = vector.shape_cast %45 : vector<8x16x4xbf16> to vector<128x4xbf16>
    %c7 = arith.constant 7 : index
    %c0_23 = arith.constant 0 : index
    %c0_24 = arith.constant 0 : index
    %47 = vector.load %arg3[%c7, %c0_23, %c0_24] : memref<9x4x128xbf16, #tpu.memory_space<vmem>>, vector<1x4x128xbf16>
    %48 = vector.shape_cast %47 : vector<1x4x128xbf16> to vector<4x128xbf16>
    %cst_25 = arith.constant dense<0.000000e+00> : vector<128x128xf32>
    %49 = tpu.matmul %46, %48, %cst_25 {dimension_numbers = #tpu.dot_dimension_numbers<[1], [0], [0], [1], [0, 0, 1, 1], [], []>} : vector<128x4xbf16>, vector<4x128xbf16>, vector<128x128xf32> -> vector<128x128xf32>
    %50 = arith.addf %44, %49 : vector<128x128xf32>
    %51 = vector.extract_strided_slice %3 {offsets = [2, 2, 0], sizes = [8, 16, 4], strides = [1, 1, 1]} : vector<10x18x4xbf16> to vector<8x16x4xbf16>
    %52 = vector.shape_cast %51 : vector<8x16x4xbf16> to vector<128x4xbf16>
    %c8 = arith.constant 8 : index
    %c0_26 = arith.constant 0 : index
    %c0_27 = arith.constant 0 : index
    %53 = vector.load %arg3[%c8, %c0_26, %c0_27] : memref<9x4x128xbf16, #tpu.memory_space<vmem>>, vector<1x4x128xbf16>
    %54 = vector.shape_cast %53 : vector<1x4x128xbf16> to vector<4x128xbf16>
    %cst_28 = arith.constant dense<0.000000e+00> : vector<128x128xf32>
    %55 = tpu.matmul %52, %54, %cst_28 {dimension_numbers = #tpu.dot_dimension_numbers<[1], [0], [0], [1], [0, 0, 1, 1], [], []>} : vector<128x4xbf16>, vector<4x128xbf16>, vector<128x128xf32> -> vector<128x128xf32>
    %56 = arith.addf %50, %55 : vector<128x128xf32>
    %57 = arith.truncf %56 : vector<128x128xf32> to vector<128x128xbf16>
    %c0_29 = arith.constant 0 : index
    %c0_30 = arith.constant 0 : index
    %58 = vector.load %arg4[%c0_29, %c0_30] : memref<128x128xbf16, #tpu.memory_space<vmem>>, vector<128x128xbf16>
    tpu.vector_store %arg4[%c0_29, %c0_30], %57 {strides = array<i32>} : memref<128x128xbf16, #tpu.memory_space<vmem>>, vector<128x128xbf16>,
    %59 = vector.shape_cast %56 : vector<128x128xf32> to vector<16x8x128xf32>
    %cst_31 = arith.constant dense<0.000000e+00> : vector<8x128xf32>
    %60 = vector.multi_reduction <add>, %59, %cst_31 [0] : vector<16x8x128xf32> to vector<8x128xf32>
    %c0_32 = arith.constant 0 : index
    %c0_33 = arith.constant 0 : index
    %61 = vector.load %arg5[%c0_32, %c0_33] : memref<8x128xf32, #tpu.memory_space<vmem>>, vector<8x128xf32>
    tpu.vector_store %arg5[%c0_32, %c0_33], %60 {strides = array<i32>} : memref<8x128xf32, #tpu.memory_space<vmem>>, vector<8x128xf32>,
    %62 = arith.mulf %56, %56 : vector<128x128xf32>
    %63 = vector.shape_cast %62 : vector<128x128xf32> to vector<16x8x128xf32>
    %cst_34 = arith.constant dense<0.000000e+00> : vector<8x128xf32>
    %64 = vector.multi_reduction <add>, %63, %cst_34 [0] : vector<16x8x128xf32> to vector<8x128xf32>
    %c0_35 = arith.constant 0 : index
    %c0_36 = arith.constant 0 : index
    %65 = vector.load %arg6[%c0_35, %c0_36] : memref<8x128xf32, #tpu.memory_space<vmem>>, vector<8x128xf32>
    tpu.vector_store %arg6[%c0_35, %c0_36], %64 {strides = array<i32>} : memref<8x128xf32, #tpu.memory_space<vmem>>, vector<8x128xf32>,
    return
  }
  func.func @transform_0(%arg0: i32, %arg1: i32) -> (i32, i32, i32, i32) {
    %c0_i32 = arith.constant 0 : i32
    %c0_i32_0 = arith.constant 0 : i32
    %c0_i32_1 = arith.constant 0 : i32
    %c0_i32_2 = arith.constant 0 : i32
    return %arg0, %c0_i32, %c0_i32_0, %c0_i32_1 : i32, i32, i32, i32
  }
  func.func @transform_1(%arg0: i32, %arg1: i32) -> (i32, i32, i32) {
    %c0_i32 = arith.constant 0 : i32
    %c0_i32_0 = arith.constant 0 : i32
    %c0_i32_1 = arith.constant 0 : i32
    %c0_i32_2 = arith.constant 0 : i32
    return %c0_i32, %c0_i32_0, %c0_i32_1 : i32, i32, i32
  }
  func.func @transform_2(%arg0: i32, %arg1: i32) -> (i32, i32) {
    %c2_i32 = arith.constant 2 : i32
    %0 = arith.muli %arg0, %c2_i32 : i32
    %1 = arith.addi %0, %arg1 : i32
    %c0_i32 = arith.constant 0 : i32
    %c0_i32_0 = arith.constant 0 : i32
    return %1, %c0_i32 : i32, i32
  }
  func.func @transform_3(%arg0: i32, %arg1: i32) -> (i32, i32) {
    %c2_i32 = arith.constant 2 : i32
    %0 = arith.muli %arg0, %c2_i32 : i32
    %1 = arith.addi %0, %arg1 : i32
    %c0_i32 = arith.constant 0 : i32
    %c0_i32_0 = arith.constant 0 : i32
    return %1, %c0_i32 : i32, i32
  }
  func.func @transform_4(%arg0: i32, %arg1: i32) -> (i32, i32) {
    %c2_i32 = arith.constant 2 : i32
    %0 = arith.muli %arg0, %c2_i32 : i32
    %1 = arith.addi %0, %arg1 : i32
    %c0_i32 = arith.constant 0 : i32
    %c0_i32_0 = arith.constant 0 : i32
    return %1, %c0_i32 : i32, i32
  }
}

module attributes {stable_mosaic.version = 11 : i64} {
  func.func @_bn_leaky_kernel(%arg0: i32, %arg1: memref<128x128xbf16, #tpu.memory_space<vmem>>, %arg2: memref<1x128xf32, #tpu.memory_space<vmem>>, %arg3: memref<1x128xf32, #tpu.memory_space<vmem>>, %arg4: memref<128x128xbf16, #tpu.memory_space<vmem>>) attributes {dimension_semantics = [#tpu.dimension_semantics<parallel>], iteration_bounds = array<i64: 4>, scalar_prefetch = 0 : i64, scratch_operands = 0 : i64, tpu.core_type = #tpu.core_type<tc>, window_params = [{transform_indices = @transform_0, window_bounds = array<i64: 128, 128>}, {pipeline_mode = #tpu.pipeline_mode<synchronous>, transform_indices = @transform_1, window_bounds = array<i64: 1, 128>}, {pipeline_mode = #tpu.pipeline_mode<synchronous>, transform_indices = @transform_2, window_bounds = array<i64: 1, 128>}, {transform_indices = @transform_3, window_bounds = array<i64: 128, 128>}]} {
    %c0 = arith.constant 0 : index
    %c0_0 = arith.constant 0 : index
    %0 = vector.load %arg1[%c0, %c0_0] : memref<128x128xbf16, #tpu.memory_space<vmem>>, vector<128x128xbf16>
    %1 = arith.extf %0 : vector<128x128xbf16> to vector<128x128xf32>
    %c0_1 = arith.constant 0 : index
    %c0_2 = arith.constant 0 : index
    %2 = vector.load %arg2[%c0_1, %c0_2] : memref<1x128xf32, #tpu.memory_space<vmem>>, vector<1x128xf32>
    %3 = vector.broadcast %2 : vector<1x128xf32> to vector<128x128xf32>
    %4 = arith.mulf %1, %3 : vector<128x128xf32>
    %c0_3 = arith.constant 0 : index
    %c0_4 = arith.constant 0 : index
    %5 = vector.load %arg3[%c0_3, %c0_4] : memref<1x128xf32, #tpu.memory_space<vmem>>, vector<1x128xf32>
    %6 = vector.broadcast %5 : vector<1x128xf32> to vector<128x128xf32>
    %7 = arith.addf %4, %6 : vector<128x128xf32>
    %cst = arith.constant 0.000000e+00 : f32
    %8 = vector.broadcast %cst : f32 to vector<128x128xf32>
    %9 = arith.cmpf oge, %7, %8 : vector<128x128xf32>
    %cst_5 = arith.constant 0.00999999977 : f32
    %10 = vector.broadcast %cst_5 : f32 to vector<128x128xf32>
    %11 = arith.mulf %10, %7 : vector<128x128xf32>
    %12 = arith.select %9, %7, %11 : vector<128x128xi1>, vector<128x128xf32>
    %13 = arith.truncf %12 : vector<128x128xf32> to vector<128x128xbf16>
    %c0_6 = arith.constant 0 : index
    %c0_7 = arith.constant 0 : index
    %14 = vector.load %arg4[%c0_6, %c0_7] : memref<128x128xbf16, #tpu.memory_space<vmem>>, vector<128x128xbf16>
    tpu.vector_store %arg4[%c0_6, %c0_7], %13 {strides = array<i32>} : memref<128x128xbf16, #tpu.memory_space<vmem>>, vector<128x128xbf16>,
    return
  }
  func.func @transform_0(%arg0: i32) -> (i32, i32) {
    %c0_i32 = arith.constant 0 : i32
    %c0_i32_0 = arith.constant 0 : i32
    return %arg0, %c0_i32 : i32, i32
  }
  func.func @transform_1(%arg0: i32) -> (i32, i32) {
    %c0_i32 = arith.constant 0 : i32
    %c0_i32_0 = arith.constant 0 : i32
    %c0_i32_1 = arith.constant 0 : i32
    return %c0_i32, %c0_i32_0 : i32, i32
  }
  func.func @transform_2(%arg0: i32) -> (i32, i32) {
    %c0_i32 = arith.constant 0 : i32
    %c0_i32_0 = arith.constant 0 : i32
    %c0_i32_1 = arith.constant 0 : i32
    return %c0_i32, %c0_i32_0 : i32, i32
  }
  func.func @transform_3(%arg0: i32) -> (i32, i32) {
    %c0_i32 = arith.constant 0 : i32
    %c0_i32_0 = arith.constant 0 : i32
    return %arg0, %c0_i32 : i32, i32
  }
}

module attributes {stable_mosaic.version = 11 : i64} {
  func.func @_deconv_gather_stats_kernel(%arg0: i32, %arg1: i32, %arg2: memref<1x34x34x32xbf16, #tpu.memory_space<vmem>>, %arg3: memref<9x32x128xbf16, #tpu.memory_space<vmem>>, %arg4: memref<256x128xbf16, #tpu.memory_space<vmem>>, %arg5: memref<8x128xf32, #tpu.memory_space<vmem>>, %arg6: memref<8x128xf32, #tpu.memory_space<vmem>>) attributes {dimension_semantics = [#tpu.dimension_semantics<parallel>, #tpu.dimension_semantics<parallel>], iteration_bounds = array<i64: 2, 4>, scalar_prefetch = 0 : i64, scratch_operands = 0 : i64, tpu.core_type = #tpu.core_type<tc>, window_params = [{transform_indices = @transform_0, window_bounds = array<i64: 1, 34, 34, 32>}, {pipeline_mode = #tpu.pipeline_mode<synchronous>, transform_indices = @transform_1, window_bounds = array<i64: 9, 32, 128>}, {transform_indices = @transform_2, window_bounds = array<i64: 256, 128>}, {transform_indices = @transform_3, window_bounds = array<i64: 8, 128>}, {transform_indices = @transform_4, window_bounds = array<i64: 8, 128>}]} {
    %c8_i32 = arith.constant 8 : i32
    %0 = arith.muli %arg1, %c8_i32 : i32
    %c0 = arith.constant 0 : index
    %1 = arith.index_cast %0 : i32 to index
    %c0_0 = arith.constant 0 : index
    %c0_1 = arith.constant 0 : index
    %2 = vector.load %arg2[%c0, %1, %c0_0, %c0_1] : memref<1x34x34x32xbf16, #tpu.memory_space<vmem>>, vector<1x10x34x32xbf16>
    %3 = vector.shape_cast %2 : vector<1x10x34x32xbf16> to vector<10x34x32xbf16>
    %4 = vector.extract_strided_slice %3 {offsets = [0, 0, 0], sizes = [8, 32, 32], strides = [1, 1, 1]} : vector<10x34x32xbf16> to vector<8x32x32xbf16>
    %5 = vector.shape_cast %4 : vector<8x32x32xbf16> to vector<256x32xbf16>
    %c0_2 = arith.constant 0 : index
    %c0_3 = arith.constant 0 : index
    %c0_4 = arith.constant 0 : index
    %6 = vector.load %arg3[%c0_2, %c0_3, %c0_4] : memref<9x32x128xbf16, #tpu.memory_space<vmem>>, vector<1x32x128xbf16>
    %7 = vector.shape_cast %6 : vector<1x32x128xbf16> to vector<32x128xbf16>
    %cst = arith.constant dense<0.000000e+00> : vector<256x128xf32>
    %8 = tpu.matmul %5, %7, %cst {dimension_numbers = #tpu.dot_dimension_numbers<[1], [0], [0], [1], [0, 0, 1, 1], [], []>} : vector<256x32xbf16>, vector<32x128xbf16>, vector<256x128xf32> -> vector<256x128xf32>
    %9 = vector.extract_strided_slice %3 {offsets = [0, 1, 0], sizes = [8, 32, 32], strides = [1, 1, 1]} : vector<10x34x32xbf16> to vector<8x32x32xbf16>
    %10 = vector.shape_cast %9 : vector<8x32x32xbf16> to vector<256x32xbf16>
    %c1 = arith.constant 1 : index
    %c0_5 = arith.constant 0 : index
    %c0_6 = arith.constant 0 : index
    %11 = vector.load %arg3[%c1, %c0_5, %c0_6] : memref<9x32x128xbf16, #tpu.memory_space<vmem>>, vector<1x32x128xbf16>
    %12 = vector.shape_cast %11 : vector<1x32x128xbf16> to vector<32x128xbf16>
    %cst_7 = arith.constant dense<0.000000e+00> : vector<256x128xf32>
    %13 = tpu.matmul %10, %12, %cst_7 {dimension_numbers = #tpu.dot_dimension_numbers<[1], [0], [0], [1], [0, 0, 1, 1], [], []>} : vector<256x32xbf16>, vector<32x128xbf16>, vector<256x128xf32> -> vector<256x128xf32>
    %14 = arith.addf %8, %13 : vector<256x128xf32>
    %15 = vector.extract_strided_slice %3 {offsets = [0, 2, 0], sizes = [8, 32, 32], strides = [1, 1, 1]} : vector<10x34x32xbf16> to vector<8x32x32xbf16>
    %16 = vector.shape_cast %15 : vector<8x32x32xbf16> to vector<256x32xbf16>
    %c2 = arith.constant 2 : index
    %c0_8 = arith.constant 0 : index
    %c0_9 = arith.constant 0 : index
    %17 = vector.load %arg3[%c2, %c0_8, %c0_9] : memref<9x32x128xbf16, #tpu.memory_space<vmem>>, vector<1x32x128xbf16>
    %18 = vector.shape_cast %17 : vector<1x32x128xbf16> to vector<32x128xbf16>
    %cst_10 = arith.constant dense<0.000000e+00> : vector<256x128xf32>
    %19 = tpu.matmul %16, %18, %cst_10 {dimension_numbers = #tpu.dot_dimension_numbers<[1], [0], [0], [1], [0, 0, 1, 1], [], []>} : vector<256x32xbf16>, vector<32x128xbf16>, vector<256x128xf32> -> vector<256x128xf32>
    %20 = arith.addf %14, %19 : vector<256x128xf32>
    %21 = vector.extract_strided_slice %3 {offsets = [1, 0, 0], sizes = [8, 32, 32], strides = [1, 1, 1]} : vector<10x34x32xbf16> to vector<8x32x32xbf16>
    %22 = vector.shape_cast %21 : vector<8x32x32xbf16> to vector<256x32xbf16>
    %c3 = arith.constant 3 : index
    %c0_11 = arith.constant 0 : index
    %c0_12 = arith.constant 0 : index
    %23 = vector.load %arg3[%c3, %c0_11, %c0_12] : memref<9x32x128xbf16, #tpu.memory_space<vmem>>, vector<1x32x128xbf16>
    %24 = vector.shape_cast %23 : vector<1x32x128xbf16> to vector<32x128xbf16>
    %cst_13 = arith.constant dense<0.000000e+00> : vector<256x128xf32>
    %25 = tpu.matmul %22, %24, %cst_13 {dimension_numbers = #tpu.dot_dimension_numbers<[1], [0], [0], [1], [0, 0, 1, 1], [], []>} : vector<256x32xbf16>, vector<32x128xbf16>, vector<256x128xf32> -> vector<256x128xf32>
    %26 = arith.addf %20, %25 : vector<256x128xf32>
    %27 = vector.extract_strided_slice %3 {offsets = [1, 1, 0], sizes = [8, 32, 32], strides = [1, 1, 1]} : vector<10x34x32xbf16> to vector<8x32x32xbf16>
    %28 = vector.shape_cast %27 : vector<8x32x32xbf16> to vector<256x32xbf16>
    %c4 = arith.constant 4 : index
    %c0_14 = arith.constant 0 : index
    %c0_15 = arith.constant 0 : index
    %29 = vector.load %arg3[%c4, %c0_14, %c0_15] : memref<9x32x128xbf16, #tpu.memory_space<vmem>>, vector<1x32x128xbf16>
    %30 = vector.shape_cast %29 : vector<1x32x128xbf16> to vector<32x128xbf16>
    %cst_16 = arith.constant dense<0.000000e+00> : vector<256x128xf32>
    %31 = tpu.matmul %28, %30, %cst_16 {dimension_numbers = #tpu.dot_dimension_numbers<[1], [0], [0], [1], [0, 0, 1, 1], [], []>} : vector<256x32xbf16>, vector<32x128xbf16>, vector<256x128xf32> -> vector<256x128xf32>
    %32 = arith.addf %26, %31 : vector<256x128xf32>
    %33 = vector.extract_strided_slice %3 {offsets = [1, 2, 0], sizes = [8, 32, 32], strides = [1, 1, 1]} : vector<10x34x32xbf16> to vector<8x32x32xbf16>
    %34 = vector.shape_cast %33 : vector<8x32x32xbf16> to vector<256x32xbf16>
    %c5 = arith.constant 5 : index
    %c0_17 = arith.constant 0 : index
    %c0_18 = arith.constant 0 : index
    %35 = vector.load %arg3[%c5, %c0_17, %c0_18] : memref<9x32x128xbf16, #tpu.memory_space<vmem>>, vector<1x32x128xbf16>
    %36 = vector.shape_cast %35 : vector<1x32x128xbf16> to vector<32x128xbf16>
    %cst_19 = arith.constant dense<0.000000e+00> : vector<256x128xf32>
    %37 = tpu.matmul %34, %36, %cst_19 {dimension_numbers = #tpu.dot_dimension_numbers<[1], [0], [0], [1], [0, 0, 1, 1], [], []>} : vector<256x32xbf16>, vector<32x128xbf16>, vector<256x128xf32> -> vector<256x128xf32>
    %38 = arith.addf %32, %37 : vector<256x128xf32>
    %39 = vector.extract_strided_slice %3 {offsets = [2, 0, 0], sizes = [8, 32, 32], strides = [1, 1, 1]} : vector<10x34x32xbf16> to vector<8x32x32xbf16>
    %40 = vector.shape_cast %39 : vector<8x32x32xbf16> to vector<256x32xbf16>
    %c6 = arith.constant 6 : index
    %c0_20 = arith.constant 0 : index
    %c0_21 = arith.constant 0 : index
    %41 = vector.load %arg3[%c6, %c0_20, %c0_21] : memref<9x32x128xbf16, #tpu.memory_space<vmem>>, vector<1x32x128xbf16>
    %42 = vector.shape_cast %41 : vector<1x32x128xbf16> to vector<32x128xbf16>
    %cst_22 = arith.constant dense<0.000000e+00> : vector<256x128xf32>
    %43 = tpu.matmul %40, %42, %cst_22 {dimension_numbers = #tpu.dot_dimension_numbers<[1], [0], [0], [1], [0, 0, 1, 1], [], []>} : vector<256x32xbf16>, vector<32x128xbf16>, vector<256x128xf32> -> vector<256x128xf32>
    %44 = arith.addf %38, %43 : vector<256x128xf32>
    %45 = vector.extract_strided_slice %3 {offsets = [2, 1, 0], sizes = [8, 32, 32], strides = [1, 1, 1]} : vector<10x34x32xbf16> to vector<8x32x32xbf16>
    %46 = vector.shape_cast %45 : vector<8x32x32xbf16> to vector<256x32xbf16>
    %c7 = arith.constant 7 : index
    %c0_23 = arith.constant 0 : index
    %c0_24 = arith.constant 0 : index
    %47 = vector.load %arg3[%c7, %c0_23, %c0_24] : memref<9x32x128xbf16, #tpu.memory_space<vmem>>, vector<1x32x128xbf16>
    %48 = vector.shape_cast %47 : vector<1x32x128xbf16> to vector<32x128xbf16>
    %cst_25 = arith.constant dense<0.000000e+00> : vector<256x128xf32>
    %49 = tpu.matmul %46, %48, %cst_25 {dimension_numbers = #tpu.dot_dimension_numbers<[1], [0], [0], [1], [0, 0, 1, 1], [], []>} : vector<256x32xbf16>, vector<32x128xbf16>, vector<256x128xf32> -> vector<256x128xf32>
    %50 = arith.addf %44, %49 : vector<256x128xf32>
    %51 = vector.extract_strided_slice %3 {offsets = [2, 2, 0], sizes = [8, 32, 32], strides = [1, 1, 1]} : vector<10x34x32xbf16> to vector<8x32x32xbf16>
    %52 = vector.shape_cast %51 : vector<8x32x32xbf16> to vector<256x32xbf16>
    %c8 = arith.constant 8 : index
    %c0_26 = arith.constant 0 : index
    %c0_27 = arith.constant 0 : index
    %53 = vector.load %arg3[%c8, %c0_26, %c0_27] : memref<9x32x128xbf16, #tpu.memory_space<vmem>>, vector<1x32x128xbf16>
    %54 = vector.shape_cast %53 : vector<1x32x128xbf16> to vector<32x128xbf16>
    %cst_28 = arith.constant dense<0.000000e+00> : vector<256x128xf32>
    %55 = tpu.matmul %52, %54, %cst_28 {dimension_numbers = #tpu.dot_dimension_numbers<[1], [0], [0], [1], [0, 0, 1, 1], [], []>} : vector<256x32xbf16>, vector<32x128xbf16>, vector<256x128xf32> -> vector<256x128xf32>
    %56 = arith.addf %50, %55 : vector<256x128xf32>
    %57 = arith.truncf %56 : vector<256x128xf32> to vector<256x128xbf16>
    %c0_29 = arith.constant 0 : index
    %c0_30 = arith.constant 0 : index
    %58 = vector.load %arg4[%c0_29, %c0_30] : memref<256x128xbf16, #tpu.memory_space<vmem>>, vector<256x128xbf16>
    tpu.vector_store %arg4[%c0_29, %c0_30], %57 {strides = array<i32>} : memref<256x128xbf16, #tpu.memory_space<vmem>>, vector<256x128xbf16>,
    %59 = vector.shape_cast %56 : vector<256x128xf32> to vector<32x8x128xf32>
    %cst_31 = arith.constant dense<0.000000e+00> : vector<8x128xf32>
    %60 = vector.multi_reduction <add>, %59, %cst_31 [0] : vector<32x8x128xf32> to vector<8x128xf32>
    %c0_32 = arith.constant 0 : index
    %c0_33 = arith.constant 0 : index
    %61 = vector.load %arg5[%c0_32, %c0_33] : memref<8x128xf32, #tpu.memory_space<vmem>>, vector<8x128xf32>
    tpu.vector_store %arg5[%c0_32, %c0_33], %60 {strides = array<i32>} : memref<8x128xf32, #tpu.memory_space<vmem>>, vector<8x128xf32>,
    %62 = arith.mulf %56, %56 : vector<256x128xf32>
    %63 = vector.shape_cast %62 : vector<256x128xf32> to vector<32x8x128xf32>
    %cst_34 = arith.constant dense<0.000000e+00> : vector<8x128xf32>
    %64 = vector.multi_reduction <add>, %63, %cst_34 [0] : vector<32x8x128xf32> to vector<8x128xf32>
    %c0_35 = arith.constant 0 : index
    %c0_36 = arith.constant 0 : index
    %65 = vector.load %arg6[%c0_35, %c0_36] : memref<8x128xf32, #tpu.memory_space<vmem>>, vector<8x128xf32>
    tpu.vector_store %arg6[%c0_35, %c0_36], %64 {strides = array<i32>} : memref<8x128xf32, #tpu.memory_space<vmem>>, vector<8x128xf32>,
    return
  }
  func.func @transform_0(%arg0: i32, %arg1: i32) -> (i32, i32, i32, i32) {
    %c0_i32 = arith.constant 0 : i32
    %c0_i32_0 = arith.constant 0 : i32
    %c0_i32_1 = arith.constant 0 : i32
    %c0_i32_2 = arith.constant 0 : i32
    return %arg0, %c0_i32, %c0_i32_0, %c0_i32_1 : i32, i32, i32, i32
  }
  func.func @transform_1(%arg0: i32, %arg1: i32) -> (i32, i32, i32) {
    %c0_i32 = arith.constant 0 : i32
    %c0_i32_0 = arith.constant 0 : i32
    %c0_i32_1 = arith.constant 0 : i32
    %c0_i32_2 = arith.constant 0 : i32
    return %c0_i32, %c0_i32_0, %c0_i32_1 : i32, i32, i32
  }
  func.func @transform_2(%arg0: i32, %arg1: i32) -> (i32, i32) {
    %c4_i32 = arith.constant 4 : i32
    %0 = arith.muli %arg0, %c4_i32 : i32
    %1 = arith.addi %0, %arg1 : i32
    %c0_i32 = arith.constant 0 : i32
    %c0_i32_0 = arith.constant 0 : i32
    return %1, %c0_i32 : i32, i32
  }
  func.func @transform_3(%arg0: i32, %arg1: i32) -> (i32, i32) {
    %c4_i32 = arith.constant 4 : i32
    %0 = arith.muli %arg0, %c4_i32 : i32
    %1 = arith.addi %0, %arg1 : i32
    %c0_i32 = arith.constant 0 : i32
    %c0_i32_0 = arith.constant 0 : i32
    return %1, %c0_i32 : i32, i32
  }
  func.func @transform_4(%arg0: i32, %arg1: i32) -> (i32, i32) {
    %c4_i32 = arith.constant 4 : i32
    %0 = arith.muli %arg0, %c4_i32 : i32
    %1 = arith.addi %0, %arg1 : i32
    %c0_i32 = arith.constant 0 : i32
    %c0_i32_0 = arith.constant 0 : i32
    return %1, %c0_i32 : i32, i32
  }
}

module attributes {stable_mosaic.version = 11 : i64} {
  func.func @_bn_leaky_conv_kernel(%arg0: i32, %arg1: memref<512x128xbf16, #tpu.memory_space<vmem>>, %arg2: memref<1x128xf32, #tpu.memory_space<vmem>>, %arg3: memref<1x128xf32, #tpu.memory_space<vmem>>, %arg4: memref<128x128xbf16, #tpu.memory_space<vmem>>, %arg5: memref<1x128xf32, #tpu.memory_space<vmem>>, %arg6: memref<512x128xf32, #tpu.memory_space<vmem>>) attributes {dimension_semantics = [#tpu.dimension_semantics<parallel>], iteration_bounds = array<i64: 4>, scalar_prefetch = 0 : i64, scratch_operands = 0 : i64, tpu.core_type = #tpu.core_type<tc>, window_params = [{transform_indices = @transform_0, window_bounds = array<i64: 512, 128>}, {pipeline_mode = #tpu.pipeline_mode<synchronous>, transform_indices = @transform_1, window_bounds = array<i64: 1, 128>}, {pipeline_mode = #tpu.pipeline_mode<synchronous>, transform_indices = @transform_2, window_bounds = array<i64: 1, 128>}, {pipeline_mode = #tpu.pipeline_mode<synchronous>, transform_indices = @transform_3, window_bounds = array<i64: 128, 128>}, {pipeline_mode = #tpu.pipeline_mode<synchronous>, transform_indices = @transform_4, window_bounds = array<i64: 1, 128>}, {transform_indices = @transform_5, window_bounds = array<i64: 512, 128>}]} {
    %c0 = arith.constant 0 : index
    %c0_0 = arith.constant 0 : index
    %0 = vector.load %arg1[%c0, %c0_0] : memref<512x128xbf16, #tpu.memory_space<vmem>>, vector<512x128xbf16>
    %1 = arith.extf %0 : vector<512x128xbf16> to vector<512x128xf32>
    %c0_1 = arith.constant 0 : index
    %c0_2 = arith.constant 0 : index
    %2 = vector.load %arg2[%c0_1, %c0_2] : memref<1x128xf32, #tpu.memory_space<vmem>>, vector<1x128xf32>
    %3 = vector.broadcast %2 : vector<1x128xf32> to vector<512x128xf32>
    %4 = arith.mulf %1, %3 : vector<512x128xf32>
    %c0_3 = arith.constant 0 : index
    %c0_4 = arith.constant 0 : index
    %5 = vector.load %arg3[%c0_3, %c0_4] : memref<1x128xf32, #tpu.memory_space<vmem>>, vector<1x128xf32>
    %6 = vector.broadcast %5 : vector<1x128xf32> to vector<512x128xf32>
    %7 = arith.addf %4, %6 : vector<512x128xf32>
    %cst = arith.constant 0.000000e+00 : f32
    %8 = vector.broadcast %cst : f32 to vector<512x128xf32>
    %9 = arith.cmpf oge, %7, %8 : vector<512x128xf32>
    %cst_5 = arith.constant 0.00999999977 : f32
    %10 = vector.broadcast %cst_5 : f32 to vector<512x128xf32>
    %11 = arith.mulf %10, %7 : vector<512x128xf32>
    %12 = arith.select %9, %7, %11 : vector<512x128xi1>, vector<512x128xf32>
    %13 = arith.truncf %12 : vector<512x128xf32> to vector<512x128xbf16>
    %c0_6 = arith.constant 0 : index
    %c0_7 = arith.constant 0 : index
    %14 = vector.load %arg4[%c0_6, %c0_7] : memref<128x128xbf16, #tpu.memory_space<vmem>>, vector<128x128xbf16>
    %cst_8 = arith.constant dense<0.000000e+00> : vector<512x128xf32>
    %15 = tpu.matmul %13, %14, %cst_8 {dimension_numbers = #tpu.dot_dimension_numbers<[1], [0], [0], [1], [0, 0, 1, 1], [], []>} : vector<512x128xbf16>, vector<128x128xbf16>, vector<512x128xf32> -> vector<512x128xf32>
    %c0_9 = arith.constant 0 : index
    %c0_10 = arith.constant 0 : index
    %16 = vector.load %arg5[%c0_9, %c0_10] : memref<1x128xf32, #tpu.memory_space<vmem>>, vector<1x128xf32>
    %17 = vector.broadcast %16 : vector<1x128xf32> to vector<512x128xf32>
    %18 = arith.addf %15, %17 : vector<512x128xf32>
    %c0_11 = arith.constant 0 : index
    %c0_12 = arith.constant 0 : index
    %19 = vector.load %arg6[%c0_11, %c0_12] : memref<512x128xf32, #tpu.memory_space<vmem>>, vector<512x128xf32>
    tpu.vector_store %arg6[%c0_11, %c0_12], %18 {strides = array<i32>} : memref<512x128xf32, #tpu.memory_space<vmem>>, vector<512x128xf32>,
    return
  }
  func.func @transform_0(%arg0: i32) -> (i32, i32) {
    %c0_i32 = arith.constant 0 : i32
    %c0_i32_0 = arith.constant 0 : i32
    return %arg0, %c0_i32 : i32, i32
  }
  func.func @transform_1(%arg0: i32) -> (i32, i32) {
    %c0_i32 = arith.constant 0 : i32
    %c0_i32_0 = arith.constant 0 : i32
    %c0_i32_1 = arith.constant 0 : i32
    return %c0_i32, %c0_i32_0 : i32, i32
  }
  func.func @transform_2(%arg0: i32) -> (i32, i32) {
    %c0_i32 = arith.constant 0 : i32
    %c0_i32_0 = arith.constant 0 : i32
    %c0_i32_1 = arith.constant 0 : i32
    return %c0_i32, %c0_i32_0 : i32, i32
  }
  func.func @transform_3(%arg0: i32) -> (i32, i32) {
    %c0_i32 = arith.constant 0 : i32
    %c0_i32_0 = arith.constant 0 : i32
    %c0_i32_1 = arith.constant 0 : i32
    return %c0_i32, %c0_i32_0 : i32, i32
  }
  func.func @transform_4(%arg0: i32) -> (i32, i32) {
    %c0_i32 = arith.constant 0 : i32
    %c0_i32_0 = arith.constant 0 : i32
    %c0_i32_1 = arith.constant 0 : i32
    return %c0_i32, %c0_i32_0 : i32, i32
  }
  func.func @transform_5(%arg0: i32) -> (i32, i32) {
    %c0_i32 = arith.constant 0 : i32
    %c0_i32_0 = arith.constant 0 : i32
    return %arg0, %c0_i32 : i32, i32
  }
}

</mosaic_0001>

<llo_original>
// kernel: tile.23
$region0: #{tile.23}
  #allocation0 [shape = 's32[1]{0}', space=sflag, size = 0x4, scoped, tag = 'scoped memory for tile.23']
  %s0 = inlined_call_operand.vmem [shape: f32[32], index: 0, kind: input, shape index: {}]
  %s1 = inlined_call_operand.vmem [shape: f32[4,32], index: 1, kind: output, shape index: {}]
  // Predicated region
  $region2: #{tile.23} parent=0 // pred_check
    _
  $region3: #{tile.23} parent=0 // pred_check_branch
    %3 = sbr.rel (0) target = $region5
  $region4: #{tile.23} parent=0 // pred_region
    _
  $region5: #{tile.23} parent=0 // pred_fallthru
    _
  %v4 = vld [vmem:[%s0] ss:$0 sm:$0xff]
  %5 = vst [vmem:[%s1] sm:$0xf] %v4

// kernel: tile.24
$region0: #{tile.24}
  %s0 = inlined_call_operand.vmem [shape: f32[4,32], index: 0, kind: input, shape index: {}]
  %s1 = inlined_call_operand.vmem [shape: f32[1,128], index: 1, kind: output, shape index: {}]
  $region1: #{tile.24} parent=0
    #allocation0 [shape = 'u8[4096]{0}', space=vmem, size = 0x1000, scoped, tag = 'scoped mem for output reshape']
    #allocation1 [shape = 'u8[4096]{0}', space=vmem, size = 0x1000, scoped, tag = 'scoped mem for input reshape']
    %s3 = ssub.s32 16, 1
    %v4 = vld [vmem:[%s0] sm:%s3]
    %5 = vst [vmem:[#allocation1] sm:%s3] %v4
    %v6 = vld [vmem:[#allocation1] sm:$0x1]
    %vm7 = vcmask 261120
    %8 = vst.msk [vmem:[#allocation0] sm:$0x1] %vm7, %v6
    %s9 = scalar_lea.vmem [#allocation1], 3
    %v10 = vld [vmem:[%s9] sm:$0x1]
    %11 = vrot.lane.b32.xlu0 %v10, 96
    %v12 = vpop.permute.xlu0 %11
    %vm13 = vcmask 1048320
    %14 = vst.msk [vmem:[#allocation0] sm:$0x1] %vm13, %v12
    %s15 = scalar_lea.vmem [#allocation1], 2
    %v16 = vld [vmem:[%s15] sm:$0x1]
    %17 = vrot.lane.b32.xlu0 %v16, 64
    %v18 = vpop.permute.xlu0 %17
    %vm19 = vcmask 785920
    %20 = vst.msk [vmem:[#allocation0] sm:$0x1] %vm19, %v18
    %s21 = scalar_lea.vmem [#allocation1], 1
    %v22 = vld [vmem:[%s21] sm:$0x1]
    %23 = vrot.lane.b32.xlu0 %v22, 32
    %v24 = vpop.permute.xlu0 %23
    %vm25 = vcmask 523520
    %26 = vst.msk [vmem:[#allocation0] sm:$0x1] %vm25, %v24
    %s28 = ssub.s32 2, 1
    %v29 = vld [vmem:[#allocation0] sm:%s28]
    %s31 = ssub.s32 2, 1
    %32 = vst [vmem:[%s1] sm:%s31] %v29

// kernel: inpainting_net_forward.5
$region0: #{inpainting_net_forward.5}
  #allocation0 [shape = 'u32[]', space=smem, size = 0x4, offset = 0x4, fixed_abs, tag = 'smem constant byte address 0x4 - core index']
  #allocation1 [shape = 'u32[72,128]{1,0:T(1,128)}', space=vmem, size = 0x9000, scoped, tag = 'internal scratch']
  %s0 = inlined_call_operand.vmem [shape: bf16[512,128], index: 0, kind: input, shape index: {}]
  %s1 = inlined_call_operand.vmem [shape: f32[1,128], index: 1, kind: input, shape index: {}]
  %s2 = inlined_call_operand.vmem [shape: f32[1,128], index: 2, kind: input, shape index: {}]
  %s3 = inlined_call_operand.vmem [shape: bf16[512,128], index: 3, kind: output, shape index: {}]
  %s4 = sld [smem:[#allocation0]]
  $region45: #{inpainting_net_forward.5} parent=0
    _
  %s6 = ssub.s32 1, %s4
  %s7 = scalar_select 0, %s6, %s4
  loop: start=0, step=1, limit=6
  $region2: #{inpainting_net_forward.5} parent=0 // loop_pre_header
    _
  $region3: #{inpainting_net_forward.5} parent=0 // loop_header
    %s9 = sphi 0, %s13
    %p10 = scmp.ge.s32.totalorder %s9, 6
    %s19 = sphi 0, %s21
    %s22 = sphi 0, %s19
    %s23 = sphi 0, %s22
    %s39 = sphi 0, %s23
    %s43 = sphi 0, %s43
    %s45 = sphi 0, %s43
    %s46 = sphi 0, %s45
    %s60 = sphi 0, %s46
    %s64 = sphi 0, %s64
    %s66 = sphi 0, %s64
    %s67 = sphi 0, %s66
    %s81 = sphi 0, %s67
    %s87 = sphi 0, %s89
    %s90 = sphi 0, %s87
    %s91 = sphi 0, %s90
    %s107 = sphi 0, %s91
  $region4: #{inpainting_net_forward.5} parent=0 // loop_header_branch
    %12 = sbr.rel (%p10) target = $region8
  $region5: #{inpainting_net_forward.5} parent=0 // loop_body
    %s14 = ssub.s32 %s9, 1
    %s15 = ssub.s32 %s9, 2
    %s16 = sadd.s32 %s9, 1
    %s17 = ssub.s32 %s9, %s16
    %p18 = scmp.eq.s32.totalorder %s17, 0
    %s20 = sadd.s32 %s19, 1
    %s21 = scalar_select %p18, %s19, %s20
    %p24 = pneg %p18
    %p25 = scmp.eq.s32.totalorder %s9, 3
    %p26 = por %p24, %p25
    %p27 = scmp.ne.s32.totalorder %s19, %s22
    %p28 = scmp.eq.s32.totalorder %s9, 0
    %p29 = por %p27, %p28
    %p30 = scmp.ne.s32.totalorder %s19, %s22
    %p31 = scmp.eq.s32.totalorder %s14, 3
    %p32 = por %p30, %p31
    %p33 = scmp.ne.s32.totalorder %s22, %s23
    %p34 = scmp.eq.s32.totalorder %s14, 0
    %p35 = por %p33, %p34
    %p36 = scmp.ne.s32.totalorder %s22, %s23
    %p37 = scmp.eq.s32.totalorder %s15, 3
    %p38 = por %p36, %p37
    %p40 = scmp.ne.s32.totalorder %s23, %s39
    %p41 = scmp.eq.s32.totalorder %s15, 0
    %p42 = por %p40, %p41
    %s44 = sadd.s32 %s43, 1
    %p47 = scmp.eq.s32.totalorder %s9, 3
    %p48 = scmp.ne.s32.totalorder %s43, %s45
    %p49 = scmp.eq.s32.totalorder %s9, 0
    %p50 = por %p48, %p49
    %p51 = scmp.ne.s32.totalorder %s43, %s45
    %p52 = scmp.eq.s32.totalorder %s14, 3
    %p53 = por %p51, %p52
    %p54 = scmp.ne.s32.totalorder %s45, %s46
    %p55 = scmp.eq.s32.totalorder %s14, 0
    %p56 = por %p54, %p55
    %p57 = scmp.ne.s32.totalorder %s45, %s46
    %p58 = scmp.eq.s32.totalorder %s15, 3
    %p59 = por %p57, %p58
    %p61 = scmp.ne.s32.totalorder %s46, %s60
    %p62 = scmp.eq.s32.totalorder %s15, 0
    %p63 = por %p61, %p62
    %s65 = sadd.s32 %s64, 1
    %p68 = scmp.eq.s32.totalorder %s9, 3
    %p69 = scmp.ne.s32.totalorder %s64, %s66
    %p70 = scmp.eq.s32.totalorder %s9, 0
    %p71 = por %p69, %p70
    %p72 = scmp.ne.s32.totalorder %s64, %s66
    %p73 = scmp.eq.s32.totalorder %s14, 3
    %p74 = por %p72, %p73
    %p75 = scmp.ne.s32.totalorder %s66, %s67
    %p76 = scmp.eq.s32.totalorder %s14, 0
    %p77 = por %p75, %p76
    %p78 = scmp.ne.s32.totalorder %s66, %s67
    %p79 = scmp.eq.s32.totalorder %s15, 3
    %p80 = por %p78, %p79
    %p82 = scmp.ne.s32.totalorder %s67, %s81
    %p83 = scmp.eq.s32.totalorder %s15, 0
    %p84 = por %p82, %p83
    %s85 = ssub.s32 %s9, %s16
    %p86 = scmp.eq.s32.totalorder %s85, 0
    %s88 = sadd.s32 %s87, 1
    %s89 = scalar_select %p86, %s87, %s88
    %p92 = pneg %p86
    %p93 = scmp.eq.s32.totalorder %s9, 3
    %p94 = por %p92, %p93
    %p95 = scmp.ne.s32.totalorder %s87, %s90
    %p96 = scmp.eq.s32.totalorder %s9, 0
    %p97 = por %p95, %p96
    %p98 = scmp.ne.s32.totalorder %s87, %s90
    %p99 = scmp.eq.s32.totalorder %s14, 3
    %p100 = por %p98, %p99
    %p101 = scmp.ne.s32.totalorder %s90, %s91
    %p102 = scmp.eq.s32.totalorder %s14, 0
    %p103 = por %p101, %p102
    %p104 = scmp.ne.s32.totalorder %s90, %s91
    %p105 = scmp.eq.s32.totalorder %s15, 3
    %p106 = por %p104, %p105
    %p108 = scmp.ne.s32.totalorder %s91, %s107
    %p109 = scmp.eq.s32.totalorder %s15, 0
    %p110 = por %p108, %p109
    %p111 = scmp.le.s32.totalorder 1, %s9
    %p112 = scmp.lt.s32.totalorder %s9, 5
    %p113 = pnand %p111, %p112
    %p114 = pneg %p113
    // Predicated region
    $region9: #{inpainting_net_forward.5} parent=5 // pred_check
      _
    $region10: #{inpainting_net_forward.5} parent=5 // pred_check_branch
      %116 = sbr.rel (%p113) target = $region12
    $region11: #{inpainting_net_forward.5} parent=5 // pred_region
      %s117 = ssub.s32 %s9, 1
      // Predicated region
      $region13: #{inpainting_net_forward.5} parent=11 // pred_check
        %p118 = pneg %p56
      $region14: #{inpainting_net_forward.5} parent=11 // pred_check_branch
        %120 = sbr.rel (%p118) target = $region16
      $region15: #{inpainting_net_forward.5} parent=11 // pred_region
        _
      $region16: #{inpainting_net_forward.5} parent=11 // pred_fallthru
        _
      // Predicated region
      $region17: #{inpainting_net_forward.5} parent=11 // pred_check
        %p121 = pneg %p77
      $region18: #{inpainting_net_forward.5} parent=11 // pred_check_branch
        %123 = sbr.rel (%p121) target = $region20
      $region19: #{inpainting_net_forward.5} parent=11 // pred_region
        _
      $region20: #{inpainting_net_forward.5} parent=11 // pred_fallthru
        _
    $region12: #{inpainting_net_forward.5} parent=5 // pred_fallthru
      _
    %p124 = scmp.lt.s32.totalorder %s9, 4
    // Predicated region
    $region21: #{inpainting_net_forward.5} parent=5 // pred_check
      %p125 = pneg %p124
    $region22: #{inpainting_net_forward.5} parent=5 // pred_check_branch
      %127 = sbr.rel (%p125) target = $region24
    $region23: #{inpainting_net_forward.5} parent=5 // pred_region
      // Predicated region
      $region25: #{inpainting_net_forward.5} parent=23 // pred_check
        %p128 = pneg %p29
      $region26: #{inpainting_net_forward.5} parent=23 // pred_check_branch
        %130 = sbr.rel (%p128) target = $region28
      $region27: #{inpainting_net_forward.5} parent=23 // pred_region
        %s131 = smul.u32 16, %s9
        %p132 = scmp.lt.s32.totalorder %s131, 63
        %s133 = scalar_select %p132, %s131, 63
        %s134 = smul.addr %s133, 4
        %s135 = scalar_lea.vmem %s0, %s134
        %s136 = smul.u32 16, %s9
      $region28: #{inpainting_net_forward.5} parent=23 // pred_fallthru
        _
    $region24: #{inpainting_net_forward.5} parent=5 // pred_fallthru
      _
    %p137 = scmp.le.s32.totalorder 1, %s9
    %p138 = scmp.lt.s32.totalorder %s9, 5
    %p139 = pnand %p137, %p138
    %p140 = pneg %p139
    // Predicated region
    $region29: #{inpainting_net_forward.5} parent=5 // pred_check
      _
    $region30: #{inpainting_net_forward.5} parent=5 // pred_check_branch
      %142 = sbr.rel (%p139) target = $region32
    $region31: #{inpainting_net_forward.5} parent=5 // pred_region
      %s143 = ssub.s32 %s9, 1
      %s144 = smul.u32 16, %s14
      %p145 = scmp.lt.s32.totalorder %s144, 63
      %s146 = scalar_select %p145, %s144, 63
      %s147 = smul.addr %s146, 4
      %s148 = scalar_lea.vmem %s0, %s147
      %p149 = pneg %p35
      %p150 = pneg %p32
      %p151 = pneg %p56
      %p152 = pneg %p53
      %p153 = pneg %p77
      %p154 = pneg %p74
      %p155 = pneg %p103
      %p156 = pneg %p100
      %s157 = smul.u32 16, %s14
      %p158 = scmp.lt.s32.totalorder %s157, 63
      %s159 = scalar_select %p158, %s157, 63
      %s160 = smul.addr %s159, 4
      %s161 = scalar_lea.vmem %s3, %s160
      %s162 = smul.u32 16, %s14
      %p163 = scmp.lt.s32.totalorder %s162, 63
      %s164 = scalar_select %p163, %s162, 63
      %s165 = smul.addr %s164, 4
      %s166 = scalar_lea.vmem %s0, %s165
      %s167 = smul.u32 16, %s14
      %s168 = smul.u32 16, %s14
      %p169 = scmp.lt.s32.totalorder %s168, 63
      %s170 = scalar_select %p169, %s168, 63
      %s171 = smul.addr %s170, 4
      %s172 = scalar_lea.vmem %s3, %s171
      %s173 = smul.u32 16, %s14
      %v174 = vld [vmem:[%s166] sm:$0xf]
      %v175 = vld [vmem:[%s166 + $0x4] sm:$0xf]
      %v176 = vld [vmem:[%s166 + $0x8] sm:$0xf]
      %v177 = vld [vmem:[%s166 + $0xc] sm:$0xf]
      %v178 = vld [vmem:[%s166 + $0x10] sm:$0xf]
      %v179 = vld [vmem:[%s166 + $0x14] sm:$0xf]
      %v180 = vld [vmem:[%s166 + $0x18] sm:$0xf]
      %v181 = vld [vmem:[%s166 + $0x1c] sm:$0xf]
      %v182 = vld [vmem:[%s166 + $0x20] sm:$0xf]
      %v183 = vld [vmem:[%s166 + $0x24] sm:$0xf]
      %v184 = vld [vmem:[%s166 + $0x28] sm:$0xf]
      %v185 = vld [vmem:[%s166 + $0x2c] sm:$0xf]
      %v186 = vld [vmem:[%s166 + $0x30] sm:$0xf]
      %v187 = vld [vmem:[%s166 + $0x34] sm:$0xf]
      %v188 = vld [vmem:[%s166 + $0x38] sm:$0xf]
      %v189 = vld [vmem:[%s166 + $0x3c] sm:$0xf]
      %v190 = vunpack.c.l.bf16 %v174
      %v191 = vunpack.c.l.bf16 %v175
      %v192 = vunpack.c.l.bf16 %v176
      %v193 = vunpack.c.l.bf16 %v177
      %v194 = vunpack.c.l.bf16 %v178
      %v195 = vunpack.c.l.bf16 %v179
      %v196 = vunpack.c.l.bf16 %v180
      %v197 = vunpack.c.l.bf16 %v181
      %v198 = vunpack.c.l.bf16 %v182
      %v199 = vunpack.c.l.bf16 %v183
      %v200 = vunpack.c.l.bf16 %v184
      %v201 = vunpack.c.l.bf16 %v185
      %v202 = vunpack.c.l.bf16 %v186
      %v203 = vunpack.c.l.bf16 %v187
      %v204 = vunpack.c.l.bf16 %v188
      %v205 = vunpack.c.l.bf16 %v189
      %v206 = vld [vmem:[%s1] sm:$0x1]
      %v208 = vperm.slane %v206, 0
      %v210 = vmul.f32 %v190, %v208
      %v211 = vmul.f32 %v191, %v208
      %v212 = vmul.f32 %v192, %v208
      %v213 = vmul.f32 %v193, %v208
      %v214 = vmul.f32 %v194, %v208
      %v215 = vmul.f32 %v195, %v208
      %v216 = vmul.f32 %v196, %v208
      %v217 = vmul.f32 %v197, %v208
      %v218 = vmul.f32 %v198, %v208
      %v219 = vmul.f32 %v199, %v208
      %v220 = vmul.f32 %v200, %v208
      %v221 = vmul.f32 %v201, %v208
      %v222 = vmul.f32 %v202, %v208
      %v223 = vmul.f32 %v203, %v208
      %v224 = vmul.f32 %v204, %v208
      %v225 = vmul.f32 %v205, %v208
      %v226 = vld [vmem:[%s2] sm:$0x1]
      %v228 = vperm.slane %v226, 0
      %v230 = vadd.f32 %v210, %v228
      %v231 = vadd.f32 %v211, %v228
      %v232 = vadd.f32 %v212, %v228
      %v233 = vadd.f32 %v213, %v228
      %v234 = vadd.f32 %v214, %v228
      %v235 = vadd.f32 %v215, %v228
      %v236 = vadd.f32 %v216, %v228
      %v237 = vadd.f32 %v217, %v228
      %v238 = vadd.f32 %v218, %v228
      %v239 = vadd.f32 %v219, %v228
      %v240 = vadd.f32 %v220, %v228
      %v241 = vadd.f32 %v221, %v228
      %v242 = vadd.f32 %v222, %v228
      %v243 = vadd.f32 %v223, %v228
      %v244 = vadd.f32 %v224, %v228
      %v245 = vadd.f32 %v225, %v228
      %vm246 = vcmp.ge.f32.partialorder %v230, 0.0
      %vm247 = vcmp.ge.f32.partialorder %v231, 0.0
      %vm248 = vcmp.ge.f32.partialorder %v232, 0.0
      %vm249 = vcmp.ge.f32.partialorder %v233, 0.0
      %vm250 = vcmp.ge.f32.partialorder %v234, 0.0
      %vm251 = vcmp.ge.f32.partialorder %v235, 0.0
      %vm252 = vcmp.ge.f32.partialorder %v236, 0.0
      %vm253 = vcmp.ge.f32.partialorder %v237, 0.0
      %vm254 = vcmp.ge.f32.partialorder %v238, 0.0
      %vm255 = vcmp.ge.f32.partialorder %v239, 0.0
      %vm256 = vcmp.ge.f32.partialorder %v240, 0.0
      %vm257 = vcmp.ge.f32.partialorder %v241, 0.0
      %vm258 = vcmp.ge.f32.partialorder %v242, 0.0
      %vm259 = vcmp.ge.f32.partialorder %v243, 0.0
      %vm260 = vcmp.ge.f32.partialorder %v244, 0.0
      %vm261 = vcmp.ge.f32.partialorder %v245, 0.0
      %v262 = vmul.f32 %v230, 0.01
      %v263 = vmul.f32 %v231, 0.01
      %v264 = vmul.f32 %v232, 0.01
      %v265 = vmul.f32 %v233, 0.01
      %v266 = vmul.f32 %v234, 0.01
      %v267 = vmul.f32 %v235, 0.01
      %v268 = vmul.f32 %v236, 0.01
      %v269 = vmul.f32 %v237, 0.01
      %v270 = vmul.f32 %v238, 0.01
      %v271 = vmul.f32 %v239, 0.01
      %v272 = vmul.f32 %v240, 0.01
      %v273 = vmul.f32 %v241, 0.01
      %v274 = vmul.f32 %v242, 0.01
      %v275 = vmul.f32 %v243, 0.01
      %v276 = vmul.f32 %v244, 0.01
      %v277 = vmul.f32 %v245, 0.01
      %v278 = vsel %vm246, %v230, %v262
      %v279 = vsel %vm247, %v231, %v263
      %v280 = vsel %vm248, %v232, %v264
      %v281 = vsel %vm249, %v233, %v265
      %v282 = vsel %vm250, %v234, %v266
      %v283 = vsel %vm251, %v235, %v267
      %v284 = vsel %vm252, %v236, %v268
      %v285 = vsel %vm253, %v237, %v269
      %v286 = vsel %vm254, %v238, %v270
      %v287 = vsel %vm255, %v239, %v271
      %v288 = vsel %vm256, %v240, %v272
      %v289 = vsel %vm257, %v241, %v273
      %v290 = vsel %vm258, %v242, %v274
      %v291 = vsel %vm259, %v243, %v275
      %v292 = vsel %vm260, %v244, %v276
      %v293 = vsel %vm261, %v245, %v277
      %v294 = vpack.c.bf16 %v278, %v278
      %v295 = vpack.c.bf16 %v279, %v279
      %v296 = vpack.c.bf16 %v280, %v280
      %v297 = vpack.c.bf16 %v281, %v281
      %v298 = vpack.c.bf16 %v282, %v282
      %v299 = vpack.c.bf16 %v283, %v283
      %v300 = vpack.c.bf16 %v284, %v284
      %v301 = vpack.c.bf16 %v285, %v285
      %v302 = vpack.c.bf16 %v286, %v286
      %v303 = vpack.c.bf16 %v287, %v287
      %v304 = vpack.c.bf16 %v288, %v288
      %v305 = vpack.c.bf16 %v289, %v289
      %v306 = vpack.c.bf16 %v290, %v290
      %v307 = vpack.c.bf16 %v291, %v291
      %v308 = vpack.c.bf16 %v292, %v292
      %v309 = vpack.c.bf16 %v293, %v293
      %310 = vst [vmem:[%s172] sm:$0xf] %v294
      %311 = vst [vmem:[%s172 + $0x4] sm:$0xf] %v295
      %312 = vst [vmem:[%s172 + $0x8] sm:$0xf] %v296
      %313 = vst [vmem:[%s172 + $0xc] sm:$0xf] %v297
      %314 = vst [vmem:[%s172 + $0x10] sm:$0xf] %v298
      %315 = vst [vmem:[%s172 + $0x14] sm:$0xf] %v299
      %316 = vst [vmem:[%s172 + $0x18] sm:$0xf] %v300
      %317 = vst [vmem:[%s172 + $0x1c] sm:$0xf] %v301
      %318 = vst [vmem:[%s172 + $0x20] sm:$0xf] %v302
      %319 = vst [vmem:[%s172 + $0x24] sm:$0xf] %v303
      %320 = vst [vmem:[%s172 + $0x28] sm:$0xf] %v304
      %321 = vst [vmem:[%s172 + $0x2c] sm:$0xf] %v305
      %322 = vst [vmem:[%s172 + $0x30] sm:$0xf] %v306
      %323 = vst [vmem:[%s172 + $0x34] sm:$0xf] %v307
      %324 = vst [vmem:[%s172 + $0x38] sm:$0xf] %v308
      %325 = vst [vmem:[%s172 + $0x3c] sm:$0xf] %v309
      %s326 = smul.u32 16, %s14
      %p327 = scmp.lt.s32.totalorder %s326, 63
      %s328 = scalar_select %p327, %s326, 63
      %s329 = smul.addr %s328, 4
      %s330 = scalar_lea.vmem %s3, %s329
      // Predicated region
      $region33: #{inpainting_net_forward.5} parent=31 // pred_check
        %p331 = pneg %p100
      $region34: #{inpainting_net_forward.5} parent=31 // pred_check_branch
        %333 = sbr.rel (%p331) target = $region36
      $region35: #{inpainting_net_forward.5} parent=31 // pred_region
        %s334 = smul.u32 16, %s14
      $region36: #{inpainting_net_forward.5} parent=31 // pred_fallthru
        _
    $region32: #{inpainting_net_forward.5} parent=5 // pred_fallthru
      _
    %p335 = scmp.le.s32.totalorder 2, %s9
    // Predicated region
    $region37: #{inpainting_net_forward.5} parent=5 // pred_check
      %p336 = pneg %p335
    $region38: #{inpainting_net_forward.5} parent=5 // pred_check_branch
      %338 = sbr.rel (%p336) target = $region40
    $region39: #{inpainting_net_forward.5} parent=5 // pred_region
      %s339 = ssub.s32 %s9, 2
      // Predicated region
      $region41: #{inpainting_net_forward.5} parent=39 // pred_check
        %p340 = pneg %p106
      $region42: #{inpainting_net_forward.5} parent=39 // pred_check_branch
        %342 = sbr.rel (%p340) target = $region44
      $region43: #{inpainting_net_forward.5} parent=39 // pred_region
        %s343 = smul.u32 16, %s15
        %p344 = scmp.lt.s32.totalorder %s343, 63
        %s345 = scalar_select %p344, %s343, 63
        %s346 = smul.addr %s345, 4
        %s347 = scalar_lea.vmem %s3, %s346
      $region44: #{inpainting_net_forward.5} parent=39 // pred_fallthru
        _
    $region40: #{inpainting_net_forward.5} parent=5 // pred_fallthru
      _
  $region6: #{inpainting_net_forward.5} parent=0 // loop_footer
    %s13 = sadd.s32 1, %s9
  $region7: #{inpainting_net_forward.5} parent=0 // loop_footer_branch
    %8 = sbr.rel target = $region3
  $region8: #{inpainting_net_forward.5} parent=0 // loop_exit
    _

// kernel: inpainting_net_forward.4
$region0: #{inpainting_net_forward.4}
  #allocation0 [shape = 'u32[]', space=smem, size = 0x4, offset = 0x4, fixed_abs, tag = 'smem constant byte address 0x4 - core index']
  #allocation1 [shape = 'u32[72,128]{1,0:T(1,128)}', space=vmem, size = 0x9000, scoped, tag = 'internal scratch']
  %s0 = inlined_call_operand.vmem [shape: bf16[2,18,18,4], index: 0, kind: input, shape index: {}]
  %s1 = inlined_call_operand.vmem [shape: bf16[9,4,128], index: 1, kind: input, shape index: {}]
  %s2 = inlined_call_operand.vmem [shape: bf16[512,128], index: 2, kind: output, shape index: {0}]
  %s3 = inlined_call_operand.vmem [shape: f32[32,128], index: 3, kind: output, shape index: {1}]
  %s4 = inlined_call_operand.vmem [shape: f32[32,128], index: 4, kind: output, shape index: {2}]
  %5 = xla_tuple %s2, %s3, %s4
  %s6 = sld [smem:[#allocation0]]
  $region57: #{inpainting_net_forward.4} parent=0
    _
  %s8 = ssub.s32 1, %s6
  %s9 = scalar_select 0, %s8, %s6
  loop: start=0, step=1, limit=6
  $region2: #{inpainting_net_forward.4} parent=0 // loop_pre_header
    _
  $region3: #{inpainting_net_forward.4} parent=0 // loop_header
    %s11 = sphi 0, %s15
    %p12 = scmp.ge.s32.totalorder %s11, 6
    %s18 = sphi 0, %s30
    %s19 = sphi 0, %s26
    %s20 = sphi 0, %s18
    %s21 = sphi 0, %s19
    %s22 = sphi 0, %s20
    %s23 = sphi 0, %s21
    %s33 = sphi 0, %s35
    %s36 = sphi 0, %s33
    %s37 = sphi 0, %s36
    %s53 = sphi 0, %s37
    %s57 = sphi 0, %s57
    %s59 = sphi 0, %s57
    %s60 = sphi 0, %s59
    %s74 = sphi 0, %s60
    %s84 = sphi 0, %s86
    %s87 = sphi 0, %s84
    %s88 = sphi 0, %s87
    %s104 = sphi 0, %s88
    %s114 = sphi 0, %s116
    %s117 = sphi 0, %s114
    %s118 = sphi 0, %s117
    %s134 = sphi 0, %s118
    %s144 = sphi 0, %s146
    %s147 = sphi 0, %s144
    %s148 = sphi 0, %s147
    %s164 = sphi 0, %s148
  $region4: #{inpainting_net_forward.4} parent=0 // loop_header_branch
    %14 = sbr.rel (%p12) target = $region8
  $region5: #{inpainting_net_forward.4} parent=0 // loop_body
    %s16 = ssub.s32 %s11, 1
    %s17 = ssub.s32 %s11, 2
    %s24 = sadd.s32 1, %s19
    %p25 = scmp.ge.s32.totalorder %s24, 2
    %s26 = scalar_select %p25, 0, %s24
    %s27 = sadd.s32 1, %s18
    %s28 = scalar_select %p25, %s27, %s18
    %p29 = scmp.ge.s32.totalorder %s28, 2
    %s30 = scalar_select %p29, 0, %s28
    %s31 = ssub.s32 %s18, %s30
    %p32 = scmp.eq.s32.totalorder %s31, 0
    %s34 = sadd.s32 %s33, 1
    %s35 = scalar_select %p32, %s33, %s34
    %p38 = pneg %p32
    %p39 = scmp.eq.s32.totalorder %s11, 3
    %p40 = por %p38, %p39
    %p41 = scmp.ne.s32.totalorder %s33, %s36
    %p42 = scmp.eq.s32.totalorder %s11, 0
    %p43 = por %p41, %p42
    %p44 = scmp.ne.s32.totalorder %s33, %s36
    %p45 = scmp.eq.s32.totalorder %s16, 3
    %p46 = por %p44, %p45
    %p47 = scmp.ne.s32.totalorder %s36, %s37
    %p48 = scmp.eq.s32.totalorder %s16, 0
    %p49 = por %p47, %p48
    %p50 = scmp.ne.s32.totalorder %s36, %s37
    %p51 = scmp.eq.s32.totalorder %s17, 3
    %p52 = por %p50, %p51
    %p54 = scmp.ne.s32.totalorder %s37, %s53
    %p55 = scmp.eq.s32.totalorder %s17, 0
    %p56 = por %p54, %p55
    %s58 = sadd.s32 %s57, 1
    %p61 = scmp.eq.s32.totalorder %s11, 3
    %p62 = scmp.ne.s32.totalorder %s57, %s59
    %p63 = scmp.eq.s32.totalorder %s11, 0
    %p64 = por %p62, %p63
    %p65 = scmp.ne.s32.totalorder %s57, %s59
    %p66 = scmp.eq.s32.totalorder %s16, 3
    %p67 = por %p65, %p66
    %p68 = scmp.ne.s32.totalorder %s59, %s60
    %p69 = scmp.eq.s32.totalorder %s16, 0
    %p70 = por %p68, %p69
    %p71 = scmp.ne.s32.totalorder %s59, %s60
    %p72 = scmp.eq.s32.totalorder %s17, 3
    %p73 = por %p71, %p72
    %p75 = scmp.ne.s32.totalorder %s60, %s74
    %p76 = scmp.eq.s32.totalorder %s17, 0
    %p77 = por %p75, %p76
    %s78 = smul.u32 %s18, 2
    %s79 = sadd.s32 %s78, %s19
    %s80 = smul.u32 %s30, 2
    %s81 = sadd.s32 %s80, %s26
    %s82 = ssub.s32 %s79, %s81
    %p83 = scmp.eq.s32.totalorder %s82, 0
    %s85 = sadd.s32 %s84, 1
    %s86 = scalar_select %p83, %s84, %s85
    %p89 = pneg %p83
    %p90 = scmp.eq.s32.totalorder %s11, 3
    %p91 = por %p89, %p90
    %p92 = scmp.ne.s32.totalorder %s84, %s87
    %p93 = scmp.eq.s32.totalorder %s11, 0
    %p94 = por %p92, %p93
    %p95 = scmp.ne.s32.totalorder %s84, %s87
    %p96 = scmp.eq.s32.totalorder %s16, 3
    %p97 = por %p95, %p96
    %p98 = scmp.ne.s32.totalorder %s87, %s88
    %p99 = scmp.eq.s32.totalorder %s16, 0
    %p100 = por %p98, %p99
    %p101 = scmp.ne.s32.totalorder %s87, %s88
    %p102 = scmp.eq.s32.totalorder %s17, 3
    %p103 = por %p101, %p102
    %p105 = scmp.ne.s32.totalorder %s88, %s104
    %p106 = scmp.eq.s32.totalorder %s17, 0
    %p107 = por %p105, %p106
    %s108 = smul.u32 %s18, 2
    %s109 = sadd.s32 %s108, %s19
    %s110 = smul.u32 %s30, 2
    %s111 = sadd.s32 %s110, %s26
    %s112 = ssub.s32 %s109, %s111
    %p113 = scmp.eq.s32.totalorder %s112, 0
    %s115 = sadd.s32 %s114, 1
    %s116 = scalar_select %p113, %s114, %s115
    %p119 = pneg %p113
    %p120 = scmp.eq.s32.totalorder %s11, 3
    %p121 = por %p119, %p120
    %p122 = scmp.ne.s32.totalorder %s114, %s117
    %p123 = scmp.eq.s32.totalorder %s11, 0
    %p124 = por %p122, %p123
    %p125 = scmp.ne.s32.totalorder %s114, %s117
    %p126 = scmp.eq.s32.totalorder %s16, 3
    %p127 = por %p125, %p126
    %p128 = scmp.ne.s32.totalorder %s117, %s118
    %p129 = scmp.eq.s32.totalorder %s16, 0
    %p130 = por %p128, %p129
    %p131 = scmp.ne.s32.totalorder %s117, %s118
    %p132 = scmp.eq.s32.totalorder %s17, 3
    %p133 = por %p131, %p132
    %p135 = scmp.ne.s32.totalorder %s118, %s134
    %p136 = scmp.eq.s32.totalorder %s17, 0
    %p137 = por %p135, %p136
    %s138 = smul.u32 %s18, 2
    %s139 = sadd.s32 %s138, %s19
    %s140 = smul.u32 %s30, 2
    %s141 = sadd.s32 %s140, %s26
    %s142 = ssub.s32 %s139, %s141
    %p143 = scmp.eq.s32.totalorder %s142, 0
    %s145 = sadd.s32 %s144, 1
    %s146 = scalar_select %p143, %s144, %s145
    %p149 = pneg %p143
    %p150 = scmp.eq.s32.totalorder %s11, 3
    %p151 = por %p149, %p150
    %p152 = scmp.ne.s32.totalorder %s144, %s147
    %p153 = scmp.eq.s32.totalorder %s11, 0
    %p154 = por %p152, %p153
    %p155 = scmp.ne.s32.totalorder %s144, %s147
    %p156 = scmp.eq.s32.totalorder %s16, 3
    %p157 = por %p155, %p156
    %p158 = scmp.ne.s32.totalorder %s147, %s148
    %p159 = scmp.eq.s32.totalorder %s16, 0
    %p160 = por %p158, %p159
    %p161 = scmp.ne.s32.totalorder %s147, %s148
    %p162 = scmp.eq.s32.totalorder %s17, 3
    %p163 = por %p161, %p162
    %p165 = scmp.ne.s32.totalorder %s148, %s164
    %p166 = scmp.eq.s32.totalorder %s17, 0
    %p167 = por %p165, %p166
    %p168 = scmp.le.s32.totalorder 1, %s11
    %p169 = scmp.lt.s32.totalorder %s11, 5
    %p170 = pnand %p168, %p169
    %p171 = pneg %p170
    // Predicated region
    $region9: #{inpainting_net_forward.4} parent=5 // pred_check
      _
    $region10: #{inpainting_net_forward.4} parent=5 // pred_check_branch
      %173 = sbr.rel (%p170) target = $region12
    $region11: #{inpainting_net_forward.4} parent=5 // pred_region
      %s174 = ssub.s32 %s11, 1
      // Predicated region
      $region13: #{inpainting_net_forward.4} parent=11 // pred_check
        %p175 = pneg %p70
      $region14: #{inpainting_net_forward.4} parent=11 // pred_check_branch
        %177 = sbr.rel (%p175) target = $region16
      $region15: #{inpainting_net_forward.4} parent=11 // pred_region
        _
      $region16: #{inpainting_net_forward.4} parent=11 // pred_fallthru
        _
    $region12: #{inpainting_net_forward.4} parent=5 // pred_fallthru
      _
    %p178 = scmp.lt.s32.totalorder %s11, 4
    // Predicated region
    $region17: #{inpainting_net_forward.4} parent=5 // pred_check
      %p179 = pneg %p178
    $region18: #{inpainting_net_forward.4} parent=5 // pred_check_branch
      %181 = sbr.rel (%p179) target = $region20
    $region19: #{inpainting_net_forward.4} parent=5 // pred_region
      // Predicated region
      $region21: #{inpainting_net_forward.4} parent=19 // pred_check
        %p182 = pneg %p43
      $region22: #{inpainting_net_forward.4} parent=19 // pred_check_branch
        %184 = sbr.rel (%p182) target = $region24
      $region23: #{inpainting_net_forward.4} parent=19 // pred_region
        %p185 = scmp.lt.s32.totalorder %s18, 1
        %s186 = scalar_select %p185, %s18, 1
        %s187 = smul.addr %s186, 54
        %s188 = smul.addr %s187, 4
        %s189 = scalar_lea.vmem %s0, %s188
      $region24: #{inpainting_net_forward.4} parent=19 // pred_fallthru
        _
    $region20: #{inpainting_net_forward.4} parent=5 // pred_fallthru
      _
    %p190 = scmp.le.s32.totalorder 1, %s11
    %p191 = scmp.lt.s32.totalorder %s11, 5
    %p192 = pnand %p190, %p191
    %p193 = pneg %p192
    // Predicated region
    $region25: #{inpainting_net_forward.4} parent=5 // pred_check
      _
    $region26: #{inpainting_net_forward.4} parent=5 // pred_check_branch
      %195 = sbr.rel (%p192) target = $region28
    $region27: #{inpainting_net_forward.4} parent=5 // pred_region
      %s196 = ssub.s32 %s11, 1
      %p197 = scmp.lt.s32.totalorder %s20, 1
      %s198 = scalar_select %p197, %s20, 1
      %s199 = smul.addr %s198, 54
      %s200 = smul.addr %s199, 4
      %s201 = scalar_lea.vmem %s0, %s200
      %p202 = pneg %p49
      %p203 = pneg %p46
      %p204 = pneg %p70
      %p205 = pneg %p67
      %p206 = pneg %p100
      %p207 = pneg %p97
      %s208 = smul.u32 %s20, 2
      %s209 = sadd.s32 %s208, %s21
      %s210 = smul.u32 16, %s209
      %p211 = scmp.lt.s32.totalorder %s210, 63
      %s212 = scalar_select %p211, %s210, 63
      %s213 = smul.addr %s212, 4
      %s214 = scalar_lea.vmem %s2, %s213
      %p215 = pneg %p130
      %p216 = pneg %p127
      %s217 = smul.u32 %s20, 2
      %s218 = sadd.s32 %s217, %s21
      %p219 = scmp.lt.s32.totalorder %s218, 3
      %s220 = scalar_select %p219, %s218, 3
      %s221 = smul.addr %s220, 8
      %s222 = scalar_lea.vmem %s3, %s221
      %p223 = pneg %p160
      %p224 = pneg %p157
      %s225 = smul.u32 %s20, 2
      %s226 = sadd.s32 %s225, %s21
      %p227 = scmp.lt.s32.totalorder %s226, 3
      %s228 = scalar_select %p227, %s226, 3
      %s229 = smul.addr %s228, 8
      %s230 = scalar_lea.vmem %s4, %s229
      %p231 = scmp.lt.s32.totalorder %s20, 1
      %s232 = scalar_select %p231, %s20, 1
      %s233 = smul.addr %s232, 54
      %s234 = smul.addr %s233, 4
      %s235 = scalar_lea.vmem %s0, %s234
      %s236 = smul.u32 %s20, 2
      %s237 = sadd.s32 %s236, %s21
      %s238 = smul.u32 16, %s237
      %p239 = scmp.lt.s32.totalorder %s238, 63
      %s240 = scalar_select %p239, %s238, 63
      %s241 = smul.addr %s240, 4
      %s242 = scalar_lea.vmem %s2, %s241
      %s243 = smul.u32 %s20, 2
      %s244 = sadd.s32 %s243, %s21
      %s245 = smul.u32 16, %s244
      %s246 = smul.u32 %s20, 2
      %s247 = sadd.s32 %s246, %s21
      %p248 = scmp.lt.s32.totalorder %s247, 3
      %s249 = scalar_select %p248, %s247, 3
      %s250 = smul.addr %s249, 8
      %s251 = scalar_lea.vmem %s3, %s250
      %s252 = smul.u32 %s20, 2
      %s253 = sadd.s32 %s252, %s21
      %s254 = smul.u32 %s20, 2
      %s255 = sadd.s32 %s254, %s21
      %p256 = scmp.lt.s32.totalorder %s255, 3
      %s257 = scalar_select %p256, %s255, 3
      %s258 = smul.addr %s257, 8
      %s259 = scalar_lea.vmem %s4, %s258
      %s260 = smul.u32 %s20, 2
      %s261 = sadd.s32 %s260, %s21
      %s263 = smul.u32 %s21, 8
      %s264 = smul.u32 %s263, 3
      %s265 = smul.addr %s264, 4
      %s266 = scalar_lea.vmem %s235, %s265
      %v267 = vld [vmem:[%s266] sm:$0xf]
      %v268 = vld [vmem:[%s266 + $0x4] sm:$0xf]
      %v269 = vld [vmem:[%s266 + $0x8] sm:$0x1]
      %v270 = vld [vmem:[%s266 + $0xc] sm:$0xf]
      %v271 = vld [vmem:[%s266 + $0x10] sm:$0xf]
      %v272 = vld [vmem:[%s266 + $0x14] sm:$0x1]
      %v273 = vld [vmem:[%s266 + $0x18] sm:$0xf]
      %v274 = vld [vmem:[%s266 + $0x1c] sm:$0xf]
      %v275 = vld [vmem:[%s266 + $0x20] sm:$0x1]
      %v276 = vld [vmem:[%s266 + $0x24] sm:$0xf]
      %v277 = vld [vmem:[%s266 + $0x28] sm:$0xf]
      %v278 = vld [vmem:[%s266 + $0x2c] sm:$0x1]
      %v279 = vld [vmem:[%s266 + $0x30] sm:$0xf]
      %v280 = vld [vmem:[%s266 + $0x34] sm:$0xf]
      %v281 = vld [vmem:[%s266 + $0x38] sm:$0x1]
      %v282 = vld [vmem:[%s266 + $0x3c] sm:$0xf]
      %v283 = vld [vmem:[%s266 + $0x40] sm:$0xf]
      %v284 = vld [vmem:[%s266 + $0x44] sm:$0x1]
      %v285 = vld [vmem:[%s266 + $0x48] sm:$0xf]
      %v286 = vld [vmem:[%s266 + $0x4c] sm:$0xf]
      %v287 = vld [vmem:[%s266 + $0x50] sm:$0x1]
      %v288 = vld [vmem:[%s266 + $0x54] sm:$0xf]
      %v289 = vld [vmem:[%s266 + $0x58] sm:$0xf]
      %v290 = vld [vmem:[%s266 + $0x5c] sm:$0x1]
      %v291 = vld [vmem:[%s266 + $0x60] sm:$0xf]
      %v292 = vld [vmem:[%s266 + $0x64] sm:$0xf]
      %v293 = vld [vmem:[%s266 + $0x68] sm:$0x1]
      %v294 = vld [vmem:[%s266 + $0x6c] sm:$0xf]
      %v295 = vld [vmem:[%s266 + $0x70] sm:$0xf]
      %v296 = vld [vmem:[%s266 + $0x74] sm:$0x1]
      %v297 = vld [vmem:[%s1] sm:$0x3]
      %vm298 = vsmask.f32 3328
      %vm299 = vsmask.f32 7440
      %vm300 = vmor %vm298, %vm299
      %v302 = vshrl.u32 %v267, 16
      %v304 = vrot.slane %v302, 4
      %v305 = vshll.u32 %v267, 16
      %v307 = vrot.slane %v305, 5
      %v308 = vor.u32 %v304, %v307
      %v309 = vrot.slane %v308, 4
      %v311 = vshll.u32 %v268, 16
      %v313 = vrot.slane %v311, 5
      %v314 = vsel %vm300, %v309, %v313
      %v315 = vshrl.u32 %v268, 16
      %v317 = vrot.slane %v315, 4
      %v318 = vor.u32 %v317, %v313
      %v319 = vrot.slane %v318, 4
      %v321 = vshll.u32 %v269, 16
      %v323 = vrot.slane %v321, 5
      %v324 = vsel %vm300, %v319, %v323
      %v326 = vshrl.u32 %v270, 16
      %v328 = vrot.slane %v326, 4
      %v329 = vshll.u32 %v270, 16
      %v331 = vrot.slane %v329, 5
      %v332 = vor.u32 %v328, %v331
      %v333 = vrot.slane %v332, 4
      %v335 = vshll.u32 %v271, 16
      %v337 = vrot.slane %v335, 5
      %v338 = vsel %vm300, %v333, %v337
      %v339 = vshrl.u32 %v271, 16
      %v341 = vrot.slane %v339, 4
      %v342 = vor.u32 %v341, %v337
      %v343 = vrot.slane %v342, 4
      %v345 = vshll.u32 %v272, 16
      %v347 = vrot.slane %v345, 5
      %v348 = vsel %vm300, %v343, %v347
      %v350 = vshrl.u32 %v273, 16
      %v352 = vrot.slane %v350, 4
      %v353 = vshll.u32 %v273, 16
      %v355 = vrot.slane %v353, 5
      %v356 = vor.u32 %v352, %v355
      %v357 = vrot.slane %v356, 4
      %v359 = vshll.u32 %v274, 16
      %v361 = vrot.slane %v359, 5
      %v362 = vsel %vm300, %v357, %v361
      %v363 = vshrl.u32 %v274, 16
      %v365 = vrot.slane %v363, 4
      %v366 = vor.u32 %v365, %v361
      %v367 = vrot.slane %v366, 4
      %v369 = vshll.u32 %v275, 16
      %v371 = vrot.slane %v369, 5
      %v372 = vsel %vm300, %v367, %v371
      %v374 = vshrl.u32 %v276, 16
      %v376 = vrot.slane %v374, 4
      %v377 = vshll.u32 %v276, 16
      %v379 = vrot.slane %v377, 5
      %v380 = vor.u32 %v376, %v379
      %v381 = vrot.slane %v380, 4
      %v383 = vshll.u32 %v277, 16
      %v385 = vrot.slane %v383, 5
      %v386 = vsel %vm300, %v381, %v385
      %v387 = vshrl.u32 %v277, 16
      %v389 = vrot.slane %v387, 4
      %v390 = vor.u32 %v389, %v385
      %v391 = vrot.slane %v390, 4
      %v393 = vshll.u32 %v278, 16
      %v395 = vrot.slane %v393, 5
      %v396 = vsel %vm300, %v391, %v395
      %v398 = vshrl.u32 %v279, 16
      %v400 = vrot.slane %v398, 4
      %v401 = vshll.u32 %v279, 16
      %v403 = vrot.slane %v401, 5
      %v404 = vor.u32 %v400, %v403
      %v405 = vrot.slane %v404, 4
      %v407 = vshll.u32 %v280, 16
      %v409 = vrot.slane %v407, 5
      %v410 = vsel %vm300, %v405, %v409
      %v411 = vshrl.u32 %v280, 16
      %v413 = vrot.slane %v411, 4
      %v414 = vor.u32 %v413, %v409
      %v415 = vrot.slane %v414, 4
      %v417 = vshll.u32 %v281, 16
      %v419 = vrot.slane %v417, 5
      %v420 = vsel %vm300, %v415, %v419
      %v422 = vshrl.u32 %v282, 16
      %v424 = vrot.slane %v422, 4
      %v425 = vshll.u32 %v282, 16
      %v427 = vrot.slane %v425, 5
      %v428 = vor.u32 %v424, %v427
      %v429 = vrot.slane %v428, 4
      %v431 = vshll.u32 %v283, 16
      %v433 = vrot.slane %v431, 5
      %v434 = vsel %vm300, %v429, %v433
      %v435 = vshrl.u32 %v283, 16
      %v437 = vrot.slane %v435, 4
      %v438 = vor.u32 %v437, %v433
      %v439 = vrot.slane %v438, 4
      %v441 = vshll.u32 %v284, 16
      %v443 = vrot.slane %v441, 5
      %v444 = vsel %vm300, %v439, %v443
      %v446 = vshrl.u32 %v285, 16
      %v448 = vrot.slane %v446, 4
      %v449 = vshll.u32 %v285, 16
      %v451 = vrot.slane %v449, 5
      %v452 = vor.u32 %v448, %v451
      %v453 = vrot.slane %v452, 4
      %v455 = vshll.u32 %v286, 16
      %v457 = vrot.slane %v455, 5
      %v458 = vsel %vm300, %v453, %v457
      %v459 = vshrl.u32 %v286, 16
      %v461 = vrot.slane %v459, 4
      %v462 = vor.u32 %v461, %v457
      %v463 = vrot.slane %v462, 4
      %v465 = vshll.u32 %v287, 16
      %v467 = vrot.slane %v465, 5
      %v468 = vsel %vm300, %v463, %v467
      %v470 = vshrl.u32 %v288, 16
      %v472 = vrot.slane %v470, 4
      %v473 = vshll.u32 %v288, 16
      %v475 = vrot.slane %v473, 5
      %v476 = vor.u32 %v472, %v475
      %v477 = vrot.slane %v476, 4
      %v479 = vshll.u32 %v289, 16
      %v481 = vrot.slane %v479, 5
      %v482 = vsel %vm300, %v477, %v481
      %v483 = vshrl.u32 %v289, 16
      %v485 = vrot.slane %v483, 4
      %v486 = vor.u32 %v485, %v481
      %v487 = vrot.slane %v486, 4
      %v489 = vshll.u32 %v290, 16
      %v491 = vrot.slane %v489, 5
      %v492 = vsel %vm300, %v487, %v491
      %s493 = scalar_lea.vmem %s1, 2
      %v494 = vld [vmem:[%s493] sm:$0x3]
      %v495 = vunpack.c.l.b16 %v314
      %v496 = vunpack.c.l.b16 %v324
      %v497 = vunpack.c.l.b16 %v338
      %v498 = vunpack.c.l.b16 %v348
      %v499 = vunpack.c.l.b16 %v362
      %v500 = vunpack.c.l.b16 %v372
      %v501 = vunpack.c.l.b16 %v386
      %v502 = vunpack.c.l.b16 %v396
      %v503 = vunpack.c.l.b16 %v410
      %v504 = vunpack.c.l.b16 %v420
      %v505 = vunpack.c.l.b16 %v434
      %v506 = vunpack.c.l.b16 %v444
      %v507 = vunpack.c.l.b16 %v458
      %v508 = vunpack.c.l.b16 %v468
      %v509 = vunpack.c.l.b16 %v482
      %v510 = vunpack.c.l.b16 %v492
      %v511 = vpack.c.b16 %v496, %v495
      %v512 = vpack.c.b16 %v498, %v497
      %v513 = vpack.c.b16 %v500, %v499
      %v514 = vpack.c.b16 %v502, %v501
      %v515 = vpack.c.b16 %v504, %v503
      %v516 = vpack.c.b16 %v506, %v505
      %v517 = vpack.c.b16 %v508, %v507
      %v518 = vpack.c.b16 %v510, %v509
      %vm519 = vcmask 31744
      %v521 = vsel %vm519, %v511, 0
      %v524 = vsel %vm519, %v512, 0
      %v527 = vsel %vm519, %v513, 0
      %v530 = vsel %vm519, %v514, 0
      %v533 = vsel %vm519, %v515, 0
      %v536 = vsel %vm519, %v516, 0
      %v539 = vsel %vm519, %v517, 0
      %v542 = vsel %vm519, %v518, 0
      %vm544 = vcmask 1041408
      %v546 = vsel %vm544, %v494, 0
      %548 = vmatpush.bf16.msra.mxu0 0
      %549 = vmatpush.bf16.msra.mxu0 0
      %550 = vmatpush.bf16.msra.mxu0 0
      %551 = vmatpush.bf16.msra.mxu0 0
      %552 = vmatpush.bf16.msra.mxu0 0
      %553 = vmatpush.bf16.msra.mxu0 0
      %554 = vmatpush.bf16.msra.mxu0 0
      %555 = vmatpush.bf16.msra.mxu0 %v546
      %556 = vmatmul.bf16.gmra.mxu0 %v521
      %v557 = vpop.f32.mrf.mxu0
      %v558 = vadd.f32 0.0, %v557
      %v559 = vpop.f32.mrf.mxu0
      %v560 = vadd.f32 0.0, %v559
      %561 = vmatmul.bf16.gmra.mxu0 %v524
      %v562 = vpop.f32.mrf.mxu0
      %v563 = vadd.f32 0.0, %v562
      %v564 = vpop.f32.mrf.mxu0
      %v565 = vadd.f32 0.0, %v564
      %566 = vmatmul.bf16.gmra.mxu0 %v527
      %v567 = vpop.f32.mrf.mxu0
      %v568 = vadd.f32 0.0, %v567
      %v569 = vpop.f32.mrf.mxu0
      %v570 = vadd.f32 0.0, %v569
      %571 = vmatmul.bf16.gmra.mxu0 %v530
      %v572 = vpop.f32.mrf.mxu0
      %v573 = vadd.f32 0.0, %v572
      %v574 = vpop.f32.mrf.mxu0
      %v575 = vadd.f32 0.0, %v574
      %576 = vmatmul.bf16.gmra.mxu0 %v533
      %v577 = vpop.f32.mrf.mxu0
      %v578 = vadd.f32 0.0, %v577
      %v579 = vpop.f32.mrf.mxu0
      %v580 = vadd.f32 0.0, %v579
      %581 = vmatmul.bf16.gmra.mxu0 %v536
      %v582 = vpop.f32.mrf.mxu0
      %v583 = vadd.f32 0.0, %v582
      %v584 = vpop.f32.mrf.mxu0
      %v585 = vadd.f32 0.0, %v584
      %586 = vmatmul.bf16.gmra.mxu0 %v539
      %v587 = vpop.f32.mrf.mxu0
      %v588 = vadd.f32 0.0, %v587
      %v589 = vpop.f32.mrf.mxu0
      %v590 = vadd.f32 0.0, %v589
      %591 = vmatmul.bf16.gmra.mxu0 %v542
      %v592 = vpop.f32.mrf.mxu0
      %v593 = vadd.f32 0.0, %v592
      %v594 = vpop.f32.mrf.mxu0
      %v595 = vadd.f32 0.0, %v594
      %596 = vdwg.mxu0
      %v613 = vunpack.c.l.b16 %v267
      %v614 = vunpack.c.l.b16 %v268
      %v615 = vunpack.c.l.b16 %v270
      %v616 = vunpack.c.l.b16 %v271
      %v617 = vunpack.c.l.b16 %v273
      %v618 = vunpack.c.l.b16 %v274
      %v619 = vunpack.c.l.b16 %v276
      %v620 = vunpack.c.l.b16 %v277
      %v621 = vunpack.c.l.b16 %v279
      %v622 = vunpack.c.l.b16 %v280
      %v623 = vunpack.c.l.b16 %v282
      %v624 = vunpack.c.l.b16 %v283
      %v625 = vunpack.c.l.b16 %v285
      %v626 = vunpack.c.l.b16 %v286
      %v627 = vunpack.c.l.b16 %v288
      %v628 = vunpack.c.l.b16 %v289
      %v629 = vpack.c.b16 %v614, %v613
      %v630 = vpack.c.b16 %v616, %v615
      %v631 = vpack.c.b16 %v618, %v617
      %v632 = vpack.c.b16 %v620, %v619
      %v633 = vpack.c.b16 %v622, %v621
      %v634 = vpack.c.b16 %v624, %v623
      %v635 = vpack.c.b16 %v626, %v625
      %v636 = vpack.c.b16 %v628, %v627
      %v638 = vsel %vm519, %v629, 0
      %v641 = vsel %vm519, %v630, 0
      %v644 = vsel %vm519, %v631, 0
      %v647 = vsel %vm519, %v632, 0
      %v650 = vsel %vm519, %v633, 0
      %v653 = vsel %vm519, %v634, 0
      %v656 = vsel %vm519, %v635, 0
      %v659 = vsel %vm519, %v636, 0
      %v662 = vsel %vm544, %v297, 0
      %664 = vmatpush.bf16.msra.mxu0 0
      %665 = vmatpush.bf16.msra.mxu0 0
      %666 = vmatpush.bf16.msra.mxu0 0
      %667 = vmatpush.bf16.msra.mxu0 0
      %668 = vmatpush.bf16.msra.mxu0 0
      %669 = vmatpush.bf16.msra.mxu0 0
      %670 = vmatpush.bf16.msra.mxu0 0
      %671 = vmatpush.bf16.msra.mxu0 %v662
      %672 = vmatmul.bf16.gmra.mxu0 %v638
      %v673 = vpop.f32.mrf.mxu0
      %v674 = vadd.f32 %v558, %v673
      %v675 = vpop.f32.mrf.mxu0
      %v676 = vadd.f32 %v560, %v675
      %677 = vmatmul.bf16.gmra.mxu0 %v641
      %v678 = vpop.f32.mrf.mxu0
      %v679 = vadd.f32 %v563, %v678
      %v680 = vpop.f32.mrf.mxu0
      %v681 = vadd.f32 %v565, %v680
      %682 = vmatmul.bf16.gmra.mxu0 %v644
      %v683 = vpop.f32.mrf.mxu0
      %v684 = vadd.f32 %v568, %v683
      %v685 = vpop.f32.mrf.mxu0
      %v686 = vadd.f32 %v570, %v685
      %687 = vmatmul.bf16.gmra.mxu0 %v647
      %v688 = vpop.f32.mrf.mxu0
      %v689 = vadd.f32 %v573, %v688
      %v690 = vpop.f32.mrf.mxu0
      %v691 = vadd.f32 %v575, %v690
      %692 = vmatmul.bf16.gmra.mxu0 %v650
      %v693 = vpop.f32.mrf.mxu0
      %v694 = vadd.f32 %v578, %v693
      %v695 = vpop.f32.mrf.mxu0
      %v696 = vadd.f32 %v580, %v695
      %697 = vmatmul.bf16.gmra.mxu0 %v653
      %v698 = vpop.f32.mrf.mxu0
      %v699 = vadd.f32 %v583, %v698
      %v700 = vpop.f32.mrf.mxu0
      %v701 = vadd.f32 %v585, %v700
      %702 = vmatmul.bf16.gmra.mxu0 %v656
      %v703 = vpop.f32.mrf.mxu0
      %v704 = vadd.f32 %v588, %v703
      %v705 = vpop.f32.mrf.mxu0
      %v706 = vadd.f32 %v590, %v705
      %707 = vmatmul.bf16.gmra.mxu0 %v659
      %v708 = vpop.f32.mrf.mxu0
      %v709 = vadd.f32 %v593, %v708
      %v710 = vpop.f32.mrf.mxu0
      %v711 = vadd.f32 %v595, %v710
      %712 = vdwg.mxu0
      %vm721 = vcmask 1042432
      %vm722 = vcmask 1046532
      %vm723 = vmor %vm721, %vm722
      %v724 = vrot.slane %v267, 5
      %v725 = vrot.slane %v724, 4
      %v726 = vrot.slane %v268, 5
      %v727 = vsel %vm723, %v725, %v726
      %v728 = vrot.slane %v726, 4
      %v729 = vrot.slane %v269, 5
      %v730 = vsel %vm723, %v728, %v729
      %v731 = vrot.slane %v270, 5
      %v732 = vrot.slane %v731, 4
      %v733 = vrot.slane %v271, 5
      %v734 = vsel %vm723, %v732, %v733
      %v735 = vrot.slane %v733, 4
      %v736 = vrot.slane %v272, 5
      %v737 = vsel %vm723, %v735, %v736
      %v738 = vrot.slane %v273, 5
      %v739 = vrot.slane %v738, 4
      %v740 = vrot.slane %v274, 5
      %v741 = vsel %vm723, %v739, %v740
      %v742 = vrot.slane %v740, 4
      %v743 = vrot.slane %v275, 5
      %v744 = vsel %vm723, %v742, %v743
      %v745 = vrot.slane %v276, 5
      %v746 = vrot.slane %v745, 4
      %v747 = vrot.slane %v277, 5
      %v748 = vsel %vm723, %v746, %v747
      %v749 = vrot.slane %v747, 4
      %v750 = vrot.slane %v278, 5
      %v751 = vsel %vm723, %v749, %v750
      %v752 = vrot.slane %v279, 5
      %v753 = vrot.slane %v752, 4
      %v754 = vrot.slane %v280, 5
      %v755 = vsel %vm723, %v753, %v754
      %v756 = vrot.slane %v754, 4
      %v757 = vrot.slane %v281, 5
      %v758 = vsel %vm723, %v756, %v757
      %v759 = vrot.slane %v282, 5
      %v760 = vrot.slane %v759, 4
      %v761 = vrot.slane %v283, 5
      %v762 = vsel %vm723, %v760, %v761
      %v763 = vrot.slane %v761, 4
      %v764 = vrot.slane %v284, 5
      %v765 = vsel %vm723, %v763, %v764
      %v766 = vrot.slane %v285, 5
      %v767 = vrot.slane %v766, 4
      %v768 = vrot.slane %v286, 5
      %v769 = vsel %vm723, %v767, %v768
      %v770 = vrot.slane %v768, 4
      %v771 = vrot.slane %v287, 5
      %v772 = vsel %vm723, %v770, %v771
      %v773 = vrot.slane %v288, 5
      %v774 = vrot.slane %v773, 4
      %v775 = vrot.slane %v289, 5
      %v776 = vsel %vm723, %v774, %v775
      %v777 = vrot.slane %v775, 4
      %v778 = vrot.slane %v290, 5
      %v779 = vsel %vm723, %v777, %v778
      %s780 = scalar_lea.vmem %s1, 4
      %v781 = vld [vmem:[%s780] sm:$0x3]
      %v782 = vunpack.c.l.b16 %v727
      %v783 = vunpack.c.l.b16 %v730
      %v784 = vunpack.c.l.b16 %v734
      %v785 = vunpack.c.l.b16 %v737
      %v786 = vunpack.c.l.b16 %v741
      %v787 = vunpack.c.l.b16 %v744
      %v788 = vunpack.c.l.b16 %v748
      %v789 = vunpack.c.l.b16 %v751
      %v790 = vunpack.c.l.b16 %v755
      %v791 = vunpack.c.l.b16 %v758
      %v792 = vunpack.c.l.b16 %v762
      %v793 = vunpack.c.l.b16 %v765
      %v794 = vunpack.c.l.b16 %v769
      %v795 = vunpack.c.l.b16 %v772
      %v796 = vunpack.c.l.b16 %v776
      %v797 = vunpack.c.l.b16 %v779
      %v798 = vpack.c.b16 %v783, %v782
      %v799 = vpack.c.b16 %v785, %v784
      %v800 = vpack.c.b16 %v787, %v786
      %v801 = vpack.c.b16 %v789, %v788
      %v802 = vpack.c.b16 %v791, %v790
      %v803 = vpack.c.b16 %v793, %v792
      %v804 = vpack.c.b16 %v795, %v794
      %v805 = vpack.c.b16 %v797, %v796
      %v807 = vsel %vm519, %v798, 0
      %v810 = vsel %vm519, %v799, 0
      %v813 = vsel %vm519, %v800, 0
      %v816 = vsel %vm519, %v801, 0
      %v819 = vsel %vm519, %v802, 0
      %v822 = vsel %vm519, %v803, 0
      %v825 = vsel %vm519, %v804, 0
      %v828 = vsel %vm519, %v805, 0
      %v831 = vsel %vm544, %v781, 0
      %833 = vmatpush.bf16.msra.mxu0 0
      %834 = vmatpush.bf16.msra.mxu0 0
      %835 = vmatpush.bf16.msra.mxu0 0
      %836 = vmatpush.bf16.msra.mxu0 0
      %837 = vmatpush.bf16.msra.mxu0 0
      %838 = vmatpush.bf16.msra.mxu0 0
      %839 = vmatpush.bf16.msra.mxu0 0
      %840 = vmatpush.bf16.msra.mxu0 %v831
      %841 = vmatmul.bf16.gmra.mxu0 %v807
      %v842 = vpop.f32.mrf.mxu0
      %v843 = vadd.f32 0.0, %v842
      %v844 = vpop.f32.mrf.mxu0
      %v845 = vadd.f32 0.0, %v844
      %846 = vmatmul.bf16.gmra.mxu0 %v810
      %v847 = vpop.f32.mrf.mxu0
      %v848 = vadd.f32 0.0, %v847
      %v849 = vpop.f32.mrf.mxu0
      %v850 = vadd.f32 0.0, %v849
      %851 = vmatmul.bf16.gmra.mxu0 %v813
      %v852 = vpop.f32.mrf.mxu0
      %v853 = vadd.f32 0.0, %v852
      %v854 = vpop.f32.mrf.mxu0
      %v855 = vadd.f32 0.0, %v854
      %856 = vmatmul.bf16.gmra.mxu0 %v816
      %v857 = vpop.f32.mrf.mxu0
      %v858 = vadd.f32 0.0, %v857
      %v859 = vpop.f32.mrf.mxu0
      %v860 = vadd.f32 0.0, %v859
      %861 = vmatmul.bf16.gmra.mxu0 %v819
      %v862 = vpop.f32.mrf.mxu0
      %v863 = vadd.f32 0.0, %v862
      %v864 = vpop.f32.mrf.mxu0
      %v865 = vadd.f32 0.0, %v864
      %866 = vmatmul.bf16.gmra.mxu0 %v822
      %v867 = vpop.f32.mrf.mxu0
      %v868 = vadd.f32 0.0, %v867
      %v869 = vpop.f32.mrf.mxu0
      %v870 = vadd.f32 0.0, %v869
      %871 = vmatmul.bf16.gmra.mxu0 %v825
      %v872 = vpop.f32.mrf.mxu0
      %v873 = vadd.f32 0.0, %v872
      %v874 = vpop.f32.mrf.mxu0
      %v875 = vadd.f32 0.0, %v874
      %876 = vmatmul.bf16.gmra.mxu0 %v828
      %v877 = vpop.f32.mrf.mxu0
      %v878 = vadd.f32 0.0, %v877
      %v879 = vpop.f32.mrf.mxu0
      %v880 = vadd.f32 0.0, %v879
      %881 = vdwg.mxu0
      %v882 = vadd.f32 %v674, %v843
      %v883 = vadd.f32 %v676, %v845
      %v884 = vadd.f32 %v679, %v848
      %v885 = vadd.f32 %v681, %v850
      %v886 = vadd.f32 %v684, %v853
      %v887 = vadd.f32 %v686, %v855
      %v888 = vadd.f32 %v689, %v858
      %v889 = vadd.f32 %v691, %v860
      %v890 = vadd.f32 %v694, %v863
      %v891 = vadd.f32 %v696, %v865
      %v892 = vadd.f32 %v699, %v868
      %v893 = vadd.f32 %v701, %v870
      %v894 = vadd.f32 %v704, %v873
      %v895 = vadd.f32 %v706, %v875
      %v896 = vadd.f32 %v709, %v878
      %v897 = vadd.f32 %v711, %v880
      %s898 = scalar_lea.vmem %s1, 6
      %v899 = vld [vmem:[%s898] sm:$0x3]
      %v902 = vunpack.c.l.b16 %v291
      %v903 = vunpack.c.l.b16 %v292
      %v904 = vpack.c.b16 %v903, %v902
      %v906 = vsel %vm519, %v904, 0
      %v909 = vsel %vm544, %v899, 0
      %911 = vmatpush.bf16.msra.mxu0 0
      %912 = vmatpush.bf16.msra.mxu0 0
      %913 = vmatpush.bf16.msra.mxu0 0
      %914 = vmatpush.bf16.msra.mxu0 0
      %915 = vmatpush.bf16.msra.mxu0 0
      %916 = vmatpush.bf16.msra.mxu0 0
      %917 = vmatpush.bf16.msra.mxu0 0
      %918 = vmatpush.bf16.msra.mxu0 %v909
      %919 = vmatmul.bf16.gmra.mxu0 %v641
      %v920 = vpop.f32.mrf.mxu0
      %v921 = vadd.f32 0.0, %v920
      %v922 = vpop.f32.mrf.mxu0
      %v923 = vadd.f32 0.0, %v922
      %924 = vmatmul.bf16.gmra.mxu0 %v644
      %v925 = vpop.f32.mrf.mxu0
      %v926 = vadd.f32 0.0, %v925
      %v927 = vpop.f32.mrf.mxu0
      %v928 = vadd.f32 0.0, %v927
      %929 = vmatmul.bf16.gmra.mxu0 %v647
      %v930 = vpop.f32.mrf.mxu0
      %v931 = vadd.f32 0.0, %v930
      %v932 = vpop.f32.mrf.mxu0
      %v933 = vadd.f32 0.0, %v932
      %934 = vmatmul.bf16.gmra.mxu0 %v650
      %v935 = vpop.f32.mrf.mxu0
      %v936 = vadd.f32 0.0, %v935
      %v937 = vpop.f32.mrf.mxu0
      %v938 = vadd.f32 0.0, %v937
      %939 = vmatmul.bf16.gmra.mxu0 %v653
      %v940 = vpop.f32.mrf.mxu0
      %v941 = vadd.f32 0.0, %v940
      %v942 = vpop.f32.mrf.mxu0
      %v943 = vadd.f32 0.0, %v942
      %944 = vmatmul.bf16.gmra.mxu0 %v656
      %v945 = vpop.f32.mrf.mxu0
      %v946 = vadd.f32 0.0, %v945
      %v947 = vpop.f32.mrf.mxu0
      %v948 = vadd.f32 0.0, %v947
      %949 = vmatmul.bf16.gmra.mxu0 %v659
      %v950 = vpop.f32.mrf.mxu0
      %v951 = vadd.f32 0.0, %v950
      %v952 = vpop.f32.mrf.mxu0
      %v953 = vadd.f32 0.0, %v952
      %954 = vmatmul.bf16.gmra.mxu0 %v906
      %v955 = vpop.f32.mrf.mxu0
      %v956 = vadd.f32 0.0, %v955
      %v957 = vpop.f32.mrf.mxu0
      %v958 = vadd.f32 0.0, %v957
      %959 = vdwg.mxu0
      %v960 = vadd.f32 %v882, %v921
      %v961 = vadd.f32 %v883, %v923
      %v962 = vadd.f32 %v884, %v926
      %v963 = vadd.f32 %v885, %v928
      %v964 = vadd.f32 %v886, %v931
      %v965 = vadd.f32 %v887, %v933
      %v966 = vadd.f32 %v888, %v936
      %v967 = vadd.f32 %v889, %v938
      %v968 = vadd.f32 %v890, %v941
      %v969 = vadd.f32 %v891, %v943
      %v970 = vadd.f32 %v892, %v946
      %v971 = vadd.f32 %v893, %v948
      %v972 = vadd.f32 %v894, %v951
      %v973 = vadd.f32 %v895, %v953
      %v974 = vadd.f32 %v896, %v956
      %v975 = vadd.f32 %v897, %v958
      %v977 = vshrl.u32 %v291, 16
      %v979 = vrot.slane %v977, 4
      %v980 = vshll.u32 %v291, 16
      %v982 = vrot.slane %v980, 5
      %v983 = vor.u32 %v979, %v982
      %v984 = vrot.slane %v983, 4
      %v986 = vshll.u32 %v292, 16
      %v988 = vrot.slane %v986, 5
      %v989 = vsel %vm300, %v984, %v988
      %v990 = vshrl.u32 %v292, 16
      %v992 = vrot.slane %v990, 4
      %v993 = vor.u32 %v992, %v988
      %v994 = vrot.slane %v993, 4
      %v996 = vshll.u32 %v293, 16
      %v998 = vrot.slane %v996, 5
      %v999 = vsel %vm300, %v994, %v998
      %s1000 = scalar_lea.vmem %s1, 8
      %v1001 = vld [vmem:[%s1000] sm:$0x3]
      %v1002 = vunpack.c.l.b16 %v989
      %v1003 = vunpack.c.l.b16 %v999
      %v1004 = vpack.c.b16 %v1003, %v1002
      %v1006 = vsel %vm519, %v1004, 0
      %v1009 = vsel %vm544, %v1001, 0
      %1011 = vmatpush.bf16.msra.mxu0 0
      %1012 = vmatpush.bf16.msra.mxu0 0
      %1013 = vmatpush.bf16.msra.mxu0 0
      %1014 = vmatpush.bf16.msra.mxu0 0
      %1015 = vmatpush.bf16.msra.mxu0 0
      %1016 = vmatpush.bf16.msra.mxu0 0
      %1017 = vmatpush.bf16.msra.mxu0 0
      %1018 = vmatpush.bf16.msra.mxu0 %v1009
      %1019 = vmatmul.bf16.gmra.mxu0 %v524
      %v1020 = vpop.f32.mrf.mxu0
      %v1021 = vadd.f32 0.0, %v1020
      %v1022 = vpop.f32.mrf.mxu0
      %v1023 = vadd.f32 0.0, %v1022
      %1024 = vmatmul.bf16.gmra.mxu0 %v527
      %v1025 = vpop.f32.mrf.mxu0
      %v1026 = vadd.f32 0.0, %v1025
      %v1027 = vpop.f32.mrf.mxu0
      %v1028 = vadd.f32 0.0, %v1027
      %1029 = vmatmul.bf16.gmra.mxu0 %v530
      %v1030 = vpop.f32.mrf.mxu0
      %v1031 = vadd.f32 0.0, %v1030
      %v1032 = vpop.f32.mrf.mxu0
      %v1033 = vadd.f32 0.0, %v1032
      %1034 = vmatmul.bf16.gmra.mxu0 %v533
      %v1035 = vpop.f32.mrf.mxu0
      %v1036 = vadd.f32 0.0, %v1035
      %v1037 = vpop.f32.mrf.mxu0
      %v1038 = vadd.f32 0.0, %v1037
      %1039 = vmatmul.bf16.gmra.mxu0 %v536
      %v1040 = vpop.f32.mrf.mxu0
      %v1041 = vadd.f32 0.0, %v1040
      %v1042 = vpop.f32.mrf.mxu0
      %v1043 = vadd.f32 0.0, %v1042
      %1044 = vmatmul.bf16.gmra.mxu0 %v539
      %v1045 = vpop.f32.mrf.mxu0
      %v1046 = vadd.f32 0.0, %v1045
      %v1047 = vpop.f32.mrf.mxu0
      %v1048 = vadd.f32 0.0, %v1047
      %1049 = vmatmul.bf16.gmra.mxu0 %v542
      %v1050 = vpop.f32.mrf.mxu0
      %v1051 = vadd.f32 0.0, %v1050
      %v1052 = vpop.f32.mrf.mxu0
      %v1053 = vadd.f32 0.0, %v1052
      %1054 = vmatmul.bf16.gmra.mxu0 %v1006
      %v1055 = vpop.f32.mrf.mxu0
      %v1056 = vadd.f32 0.0, %v1055
      %v1057 = vpop.f32.mrf.mxu0
      %v1058 = vadd.f32 0.0, %v1057
      %1059 = vdwg.mxu0
      %v1060 = vadd.f32 %v960, %v1021
      %v1061 = vadd.f32 %v961, %v1023
      %v1062 = vadd.f32 %v962, %v1026
      %v1063 = vadd.f32 %v963, %v1028
      %v1064 = vadd.f32 %v964, %v1031
      %v1065 = vadd.f32 %v965, %v1033
      %v1066 = vadd.f32 %v966, %v1036
      %v1067 = vadd.f32 %v967, %v1038
      %v1068 = vadd.f32 %v968, %v1041
      %v1069 = vadd.f32 %v969, %v1043
      %v1070 = vadd.f32 %v970, %v1046
      %v1071 = vadd.f32 %v971, %v1048
      %v1072 = vadd.f32 %v972, %v1051
      %v1073 = vadd.f32 %v973, %v1053
      %v1074 = vadd.f32 %v974, %v1056
      %v1075 = vadd.f32 %v975, %v1058
      %v1077 = vrot.slane %v291, 5
      %v1078 = vrot.slane %v1077, 4
      %v1079 = vrot.slane %v292, 5
      %v1080 = vsel %vm723, %v1078, %v1079
      %v1081 = vrot.slane %v1079, 4
      %v1082 = vrot.slane %v293, 5
      %v1083 = vsel %vm723, %v1081, %v1082
      %s1084 = scalar_lea.vmem %s1, 10
      %v1085 = vld [vmem:[%s1084] sm:$0x3]
      %v1086 = vunpack.c.l.b16 %v1080
      %v1087 = vunpack.c.l.b16 %v1083
      %v1088 = vpack.c.b16 %v1087, %v1086
      %v1090 = vsel %vm519, %v1088, 0
      %v1093 = vsel %vm544, %v1085, 0
      %1095 = vmatpush.bf16.msra.mxu0 0
      %1096 = vmatpush.bf16.msra.mxu0 0
      %1097 = vmatpush.bf16.msra.mxu0 0
      %1098 = vmatpush.bf16.msra.mxu0 0
      %1099 = vmatpush.bf16.msra.mxu0 0
      %1100 = vmatpush.bf16.msra.mxu0 0
      %1101 = vmatpush.bf16.msra.mxu0 0
      %1102 = vmatpush.bf16.msra.mxu0 %v1093
      %1103 = vmatmul.bf16.gmra.mxu0 %v810
      %v1104 = vpop.f32.mrf.mxu0
      %v1105 = vadd.f32 0.0, %v1104
      %v1106 = vpop.f32.mrf.mxu0
      %v1107 = vadd.f32 0.0, %v1106
      %1108 = vmatmul.bf16.gmra.mxu0 %v813
      %v1109 = vpop.f32.mrf.mxu0
      %v1110 = vadd.f32 0.0, %v1109
      %v1111 = vpop.f32.mrf.mxu0
      %v1112 = vadd.f32 0.0, %v1111
      %1113 = vmatmul.bf16.gmra.mxu0 %v816
      %v1114 = vpop.f32.mrf.mxu0
      %v1115 = vadd.f32 0.0, %v1114
      %v1116 = vpop.f32.mrf.mxu0
      %v1117 = vadd.f32 0.0, %v1116
      %1118 = vmatmul.bf16.gmra.mxu0 %v819
      %v1119 = vpop.f32.mrf.mxu0
      %v1120 = vadd.f32 0.0, %v1119
      %v1121 = vpop.f32.mrf.mxu0
      %v1122 = vadd.f32 0.0, %v1121
      %1123 = vmatmul.bf16.gmra.mxu0 %v822
      %v1124 = vpop.f32.mrf.mxu0
      %v1125 = vadd.f32 0.0, %v1124
      %v1126 = vpop.f32.mrf.mxu0
      %v1127 = vadd.f32 0.0, %v1126
      %1128 = vmatmul.bf16.gmra.mxu0 %v825
      %v1129 = vpop.f32.mrf.mxu0
      %v1130 = vadd.f32 0.0, %v1129
      %v1131 = vpop.f32.mrf.mxu0
      %v1132 = vadd.f32 0.0, %v1131
      %1133 = vmatmul.bf16.gmra.mxu0 %v828
      %v1134 = vpop.f32.mrf.mxu0
      %v1135 = vadd.f32 0.0, %v1134
      %v1136 = vpop.f32.mrf.mxu0
      %v1137 = vadd.f32 0.0, %v1136
      %1138 = vmatmul.bf16.gmra.mxu0 %v1090
      %v1139 = vpop.f32.mrf.mxu0
      %v1140 = vadd.f32 0.0, %v1139
      %v1141 = vpop.f32.mrf.mxu0
      %v1142 = vadd.f32 0.0, %v1141
      %1143 = vdwg.mxu0
      %v1144 = vadd.f32 %v1060, %v1105
      %v1145 = vadd.f32 %v1061, %v1107
      %v1146 = vadd.f32 %v1062, %v1110
      %v1147 = vadd.f32 %v1063, %v1112
      %v1148 = vadd.f32 %v1064, %v1115
      %v1149 = vadd.f32 %v1065, %v1117
      %v1150 = vadd.f32 %v1066, %v1120
      %v1151 = vadd.f32 %v1067, %v1122
      %v1152 = vadd.f32 %v1068, %v1125
      %v1153 = vadd.f32 %v1069, %v1127
      %v1154 = vadd.f32 %v1070, %v1130
      %v1155 = vadd.f32 %v1071, %v1132
      %v1156 = vadd.f32 %v1072, %v1135
      %v1157 = vadd.f32 %v1073, %v1137
      %v1158 = vadd.f32 %v1074, %v1140
      %v1159 = vadd.f32 %v1075, %v1142
      %s1160 = scalar_lea.vmem %s1, 12
      %v1161 = vld [vmem:[%s1160] sm:$0x3]
      %v1164 = vunpack.c.l.b16 %v294
      %v1165 = vunpack.c.l.b16 %v295
      %v1166 = vpack.c.b16 %v1165, %v1164
      %v1168 = vsel %vm519, %v1166, 0
      %v1171 = vsel %vm544, %v1161, 0
      %1173 = vmatpush.bf16.msra.mxu0 0
      %1174 = vmatpush.bf16.msra.mxu0 0
      %1175 = vmatpush.bf16.msra.mxu0 0
      %1176 = vmatpush.bf16.msra.mxu0 0
      %1177 = vmatpush.bf16.msra.mxu0 0
      %1178 = vmatpush.bf16.msra.mxu0 0
      %1179 = vmatpush.bf16.msra.mxu0 0
      %1180 = vmatpush.bf16.msra.mxu0 %v1171
      %1181 = vmatmul.bf16.gmra.mxu0 %v644
      %v1182 = vpop.f32.mrf.mxu0
      %v1183 = vadd.f32 0.0, %v1182
      %v1184 = vpop.f32.mrf.mxu0
      %v1185 = vadd.f32 0.0, %v1184
      %1186 = vmatmul.bf16.gmra.mxu0 %v647
      %v1187 = vpop.f32.mrf.mxu0
      %v1188 = vadd.f32 0.0, %v1187
      %v1189 = vpop.f32.mrf.mxu0
      %v1190 = vadd.f32 0.0, %v1189
      %1191 = vmatmul.bf16.gmra.mxu0 %v650
      %v1192 = vpop.f32.mrf.mxu0
      %v1193 = vadd.f32 0.0, %v1192
      %v1194 = vpop.f32.mrf.mxu0
      %v1195 = vadd.f32 0.0, %v1194
      %1196 = vmatmul.bf16.gmra.mxu0 %v653
      %v1197 = vpop.f32.mrf.mxu0
      %v1198 = vadd.f32 0.0, %v1197
      %v1199 = vpop.f32.mrf.mxu0
      %v1200 = vadd.f32 0.0, %v1199
      %1201 = vmatmul.bf16.gmra.mxu0 %v656
      %v1202 = vpop.f32.mrf.mxu0
      %v1203 = vadd.f32 0.0, %v1202
      %v1204 = vpop.f32.mrf.mxu0
      %v1205 = vadd.f32 0.0, %v1204
      %1206 = vmatmul.bf16.gmra.mxu0 %v659
      %v1207 = vpop.f32.mrf.mxu0
      %v1208 = vadd.f32 0.0, %v1207
      %v1209 = vpop.f32.mrf.mxu0
      %v1210 = vadd.f32 0.0, %v1209
      %1211 = vmatmul.bf16.gmra.mxu0 %v906
      %v1212 = vpop.f32.mrf.mxu0
      %v1213 = vadd.f32 0.0, %v1212
      %v1214 = vpop.f32.mrf.mxu0
      %v1215 = vadd.f32 0.0, %v1214
      %1216 = vmatmul.bf16.gmra.mxu0 %v1168
      %v1217 = vpop.f32.mrf.mxu0
      %v1218 = vadd.f32 0.0, %v1217
      %v1219 = vpop.f32.mrf.mxu0
      %v1220 = vadd.f32 0.0, %v1219
      %1221 = vdwg.mxu0
      %v1222 = vadd.f32 %v1144, %v1183
      %v1223 = vadd.f32 %v1145, %v1185
      %v1224 = vadd.f32 %v1146, %v1188
      %v1225 = vadd.f32 %v1147, %v1190
      %v1226 = vadd.f32 %v1148, %v1193
      %v1227 = vadd.f32 %v1149, %v1195
      %v1228 = vadd.f32 %v1150, %v1198
      %v1229 = vadd.f32 %v1151, %v1200
      %v1230 = vadd.f32 %v1152, %v1203
      %v1231 = vadd.f32 %v1153, %v1205
      %v1232 = vadd.f32 %v1154, %v1208
      %v1233 = vadd.f32 %v1155, %v1210
      %v1234 = vadd.f32 %v1156, %v1213
      %v1235 = vadd.f32 %v1157, %v1215
      %v1236 = vadd.f32 %v1158, %v1218
      %v1237 = vadd.f32 %v1159, %v1220
      %v1239 = vshrl.u32 %v294, 16
      %v1241 = vrot.slane %v1239, 4
      %v1242 = vshll.u32 %v294, 16
      %v1244 = vrot.slane %v1242, 5
      %v1245 = vor.u32 %v1241, %v1244
      %v1246 = vrot.slane %v1245, 4
      %v1248 = vshll.u32 %v295, 16
      %v1250 = vrot.slane %v1248, 5
      %v1251 = vsel %vm300, %v1246, %v1250
      %v1252 = vshrl.u32 %v295, 16
      %v1254 = vrot.slane %v1252, 4
      %v1255 = vor.u32 %v1254, %v1250
      %v1256 = vrot.slane %v1255, 4
      %v1258 = vshll.u32 %v296, 16
      %v1260 = vrot.slane %v1258, 5
      %v1261 = vsel %vm300, %v1256, %v1260
      %s1262 = scalar_lea.vmem %s1, 14
      %v1263 = vld [vmem:[%s1262] sm:$0x3]
      %v1264 = vunpack.c.l.b16 %v1251
      %v1265 = vunpack.c.l.b16 %v1261
      %v1266 = vpack.c.b16 %v1265, %v1264
      %v1268 = vsel %vm519, %v1266, 0
      %v1271 = vsel %vm544, %v1263, 0
      %1273 = vmatpush.bf16.msra.mxu0 0
      %1274 = vmatpush.bf16.msra.mxu0 0
      %1275 = vmatpush.bf16.msra.mxu0 0
      %1276 = vmatpush.bf16.msra.mxu0 0
      %1277 = vmatpush.bf16.msra.mxu0 0
      %1278 = vmatpush.bf16.msra.mxu0 0
      %1279 = vmatpush.bf16.msra.mxu0 0
      %1280 = vmatpush.bf16.msra.mxu0 %v1271
      %1281 = vmatmul.bf16.gmra.mxu0 %v527
      %v1282 = vpop.f32.mrf.mxu0
      %v1283 = vadd.f32 0.0, %v1282
      %v1284 = vpop.f32.mrf.mxu0
      %v1285 = vadd.f32 0.0, %v1284
      %1286 = vmatmul.bf16.gmra.mxu0 %v530
      %v1287 = vpop.f32.mrf.mxu0
      %v1288 = vadd.f32 0.0, %v1287
      %v1289 = vpop.f32.mrf.mxu0
      %v1290 = vadd.f32 0.0, %v1289
      %1291 = vmatmul.bf16.gmra.mxu0 %v533
      %v1292 = vpop.f32.mrf.mxu0
      %v1293 = vadd.f32 0.0, %v1292
      %v1294 = vpop.f32.mrf.mxu0
      %v1295 = vadd.f32 0.0, %v1294
      %1296 = vmatmul.bf16.gmra.mxu0 %v536
      %v1297 = vpop.f32.mrf.mxu0
      %v1298 = vadd.f32 0.0, %v1297
      %v1299 = vpop.f32.mrf.mxu0
      %v1300 = vadd.f32 0.0, %v1299
      %1301 = vmatmul.bf16.gmra.mxu0 %v539
      %v1302 = vpop.f32.mrf.mxu0
      %v1303 = vadd.f32 0.0, %v1302
      %v1304 = vpop.f32.mrf.mxu0
      %v1305 = vadd.f32 0.0, %v1304
      %1306 = vmatmul.bf16.gmra.mxu0 %v542
      %v1307 = vpop.f32.mrf.mxu0
      %v1308 = vadd.f32 0.0, %v1307
      %v1309 = vpop.f32.mrf.mxu0
      %v1310 = vadd.f32 0.0, %v1309
      %1311 = vmatmul.bf16.gmra.mxu0 %v1006
      %v1312 = vpop.f32.mrf.mxu0
      %v1313 = vadd.f32 0.0, %v1312
      %v1314 = vpop.f32.mrf.mxu0
      %v1315 = vadd.f32 0.0, %v1314
      %1316 = vmatmul.bf16.gmra.mxu0 %v1268
      %v1317 = vpop.f32.mrf.mxu0
      %v1318 = vadd.f32 0.0, %v1317
      %v1319 = vpop.f32.mrf.mxu0
      %v1320 = vadd.f32 0.0, %v1319
      %1321 = vdwg.mxu0
      %v1322 = vadd.f32 %v1222, %v1283
      %v1323 = vadd.f32 %v1223, %v1285
      %v1324 = vadd.f32 %v1224, %v1288
      %v1325 = vadd.f32 %v1225, %v1290
      %v1326 = vadd.f32 %v1226, %v1293
      %v1327 = vadd.f32 %v1227, %v1295
      %v1328 = vadd.f32 %v1228, %v1298
      %v1329 = vadd.f32 %v1229, %v1300
      %v1330 = vadd.f32 %v1230, %v1303
      %v1331 = vadd.f32 %v1231, %v1305
      %v1332 = vadd.f32 %v1232, %v1308
      %v1333 = vadd.f32 %v1233, %v1310
      %v1334 = vadd.f32 %v1234, %v1313
      %v1335 = vadd.f32 %v1235, %v1315
      %v1336 = vadd.f32 %v1236, %v1318
      %v1337 = vadd.f32 %v1237, %v1320
      %v1339 = vrot.slane %v294, 5
      %v1340 = vrot.slane %v1339, 4
      %v1341 = vrot.slane %v295, 5
      %v1342 = vsel %vm723, %v1340, %v1341
      %v1343 = vrot.slane %v1341, 4
      %v1344 = vrot.slane %v296, 5
      %v1345 = vsel %vm723, %v1343, %v1344
      %s1346 = scalar_lea.vmem %s1, 16
      %v1347 = vld [vmem:[%s1346] sm:$0x3]
      %v1348 = vunpack.c.l.b16 %v1342
      %v1349 = vunpack.c.l.b16 %v1345
      %v1350 = vpack.c.b16 %v1349, %v1348
      %v1352 = vsel %vm519, %v1350, 0
      %v1355 = vsel %vm544, %v1347, 0
      %1357 = vmatpush.bf16.msra.mxu0 0
      %1358 = vmatpush.bf16.msra.mxu0 0
      %1359 = vmatpush.bf16.msra.mxu0 0
      %1360 = vmatpush.bf16.msra.mxu0 0
      %1361 = vmatpush.bf16.msra.mxu0 0
      %1362 = vmatpush.bf16.msra.mxu0 0
      %1363 = vmatpush.bf16.msra.mxu0 0
      %1364 = vmatpush.bf16.msra.mxu0 %v1355
      %1365 = vmatmul.bf16.gmra.mxu0 %v813
      %v1366 = vpop.f32.mrf.mxu0
      %v1367 = vadd.f32 0.0, %v1366
      %v1368 = vpop.f32.mrf.mxu0
      %v1369 = vadd.f32 0.0, %v1368
      %1370 = vmatmul.bf16.gmra.mxu0 %v816
      %v1371 = vpop.f32.mrf.mxu0
      %v1372 = vadd.f32 0.0, %v1371
      %v1373 = vpop.f32.mrf.mxu0
      %v1374 = vadd.f32 0.0, %v1373
      %1375 = vmatmul.bf16.gmra.mxu0 %v819
      %v1376 = vpop.f32.mrf.mxu0
      %v1377 = vadd.f32 0.0, %v1376
      %v1378 = vpop.f32.mrf.mxu0
      %v1379 = vadd.f32 0.0, %v1378
      %1380 = vmatmul.bf16.gmra.mxu0 %v822
      %v1381 = vpop.f32.mrf.mxu0
      %v1382 = vadd.f32 0.0, %v1381
      %v1383 = vpop.f32.mrf.mxu0
      %v1384 = vadd.f32 0.0, %v1383
      %1385 = vmatmul.bf16.gmra.mxu0 %v825
      %v1386 = vpop.f32.mrf.mxu0
      %v1387 = vadd.f32 0.0, %v1386
      %v1388 = vpop.f32.mrf.mxu0
      %v1389 = vadd.f32 0.0, %v1388
      %1390 = vmatmul.bf16.gmra.mxu0 %v828
      %v1391 = vpop.f32.mrf.mxu0
      %v1392 = vadd.f32 0.0, %v1391
      %v1393 = vpop.f32.mrf.mxu0
      %v1394 = vadd.f32 0.0, %v1393
      %1395 = vmatmul.bf16.gmra.mxu0 %v1090
      %v1396 = vpop.f32.mrf.mxu0
      %v1397 = vadd.f32 0.0, %v1396
      %v1398 = vpop.f32.mrf.mxu0
      %v1399 = vadd.f32 0.0, %v1398
      %1400 = vmatmul.bf16.gmra.mxu0 %v1352
      %v1401 = vpop.f32.mrf.mxu0
      %v1402 = vadd.f32 0.0, %v1401
      %v1403 = vpop.f32.mrf.mxu0
      %v1404 = vadd.f32 0.0, %v1403
      %1405 = vdwg.mxu0
      %v1406 = vadd.f32 %v1322, %v1367
      %v1407 = vadd.f32 %v1323, %v1369
      %v1408 = vadd.f32 %v1324, %v1372
      %v1409 = vadd.f32 %v1325, %v1374
      %v1410 = vadd.f32 %v1326, %v1377
      %v1411 = vadd.f32 %v1327, %v1379
      %v1412 = vadd.f32 %v1328, %v1382
      %v1413 = vadd.f32 %v1329, %v1384
      %v1414 = vadd.f32 %v1330, %v1387
      %v1415 = vadd.f32 %v1331, %v1389
      %v1416 = vadd.f32 %v1332, %v1392
      %v1417 = vadd.f32 %v1333, %v1394
      %v1418 = vadd.f32 %v1334, %v1397
      %v1419 = vadd.f32 %v1335, %v1399
      %v1420 = vadd.f32 %v1336, %v1402
      %v1421 = vadd.f32 %v1337, %v1404
      %v1422 = vpack.c.bf16 %v1406, %v1406
      %v1423 = vpack.c.bf16 %v1407, %v1407
      %v1424 = vpack.c.bf16 %v1408, %v1408
      %v1425 = vpack.c.bf16 %v1409, %v1409
      %v1426 = vpack.c.bf16 %v1410, %v1410
      %v1427 = vpack.c.bf16 %v1411, %v1411
      %v1428 = vpack.c.bf16 %v1412, %v1412
      %v1429 = vpack.c.bf16 %v1413, %v1413
      %v1430 = vpack.c.bf16 %v1414, %v1414
      %v1431 = vpack.c.bf16 %v1415, %v1415
      %v1432 = vpack.c.bf16 %v1416, %v1416
      %v1433 = vpack.c.bf16 %v1417, %v1417
      %v1434 = vpack.c.bf16 %v1418, %v1418
      %v1435 = vpack.c.bf16 %v1419, %v1419
      %v1436 = vpack.c.bf16 %v1420, %v1420
      %v1437 = vpack.c.bf16 %v1421, %v1421
      %1438 = vst [vmem:[%s242] sm:$0xf] %v1422
      %1439 = vst [vmem:[%s242 + $0x4] sm:$0xf] %v1423
      %1440 = vst [vmem:[%s242 + $0x8] sm:$0xf] %v1424
      %1441 = vst [vmem:[%s242 + $0xc] sm:$0xf] %v1425
      %1442 = vst [vmem:[%s242 + $0x10] sm:$0xf] %v1426
      %1443 = vst [vmem:[%s242 + $0x14] sm:$0xf] %v1427
      %1444 = vst [vmem:[%s242 + $0x18] sm:$0xf] %v1428
      %1445 = vst [vmem:[%s242 + $0x1c] sm:$0xf] %v1429
      %1446 = vst [vmem:[%s242 + $0x20] sm:$0xf] %v1430
      %1447 = vst [vmem:[%s242 + $0x24] sm:$0xf] %v1431
      %1448 = vst [vmem:[%s242 + $0x28] sm:$0xf] %v1432
      %1449 = vst [vmem:[%s242 + $0x2c] sm:$0xf] %v1433
      %1450 = vst [vmem:[%s242 + $0x30] sm:$0xf] %v1434
      %1451 = vst [vmem:[%s242 + $0x34] sm:$0xf] %v1435
      %1452 = vst [vmem:[%s242 + $0x38] sm:$0xf] %v1436
      %1453 = vst [vmem:[%s242 + $0x3c] sm:$0xf] %v1437
      %v1454 = vadd.f32 %v1406, %v1407
      %v1455 = vadd.f32 %v1454, %v1408
      %v1456 = vadd.f32 %v1455, %v1409
      %v1457 = vadd.f32 %v1456, %v1410
      %v1458 = vadd.f32 %v1457, %v1411
      %v1459 = vadd.f32 %v1458, %v1412
      %v1460 = vadd.f32 %v1459, %v1413
      %v1461 = vadd.f32 %v1460, %v1414
      %v1462 = vadd.f32 %v1461, %v1415
      %v1463 = vadd.f32 %v1462, %v1416
      %v1464 = vadd.f32 %v1463, %v1417
      %v1465 = vadd.f32 %v1464, %v1418
      %v1466 = vadd.f32 %v1465, %v1419
      %v1467 = vadd.f32 %v1466, %v1420
      %v1468 = vadd.f32 %v1467, %v1421
      %1469 = vst [vmem:[%s251] sm:$0xff] %v1468
      %v1470 = vmul.f32 %v1406, %v1406
      %v1471 = vmul.f32 %v1407, %v1407
      %v1472 = vmul.f32 %v1408, %v1408
      %v1473 = vmul.f32 %v1409, %v1409
      %v1474 = vmul.f32 %v1410, %v1410
      %v1475 = vmul.f32 %v1411, %v1411
      %v1476 = vmul.f32 %v1412, %v1412
      %v1477 = vmul.f32 %v1413, %v1413
      %v1478 = vmul.f32 %v1414, %v1414
      %v1479 = vmul.f32 %v1415, %v1415
      %v1480 = vmul.f32 %v1416, %v1416
      %v1481 = vmul.f32 %v1417, %v1417
      %v1482 = vmul.f32 %v1418, %v1418
      %v1483 = vmul.f32 %v1419, %v1419
      %v1484 = vmul.f32 %v1420, %v1420
      %v1485 = vmul.f32 %v1421, %v1421
      %v1486 = vadd.f32 %v1470, %v1471
      %v1487 = vadd.f32 %v1486, %v1472
      %v1488 = vadd.f32 %v1487, %v1473
      %v1489 = vadd.f32 %v1488, %v1474
      %v1490 = vadd.f32 %v1489, %v1475
      %v1491 = vadd.f32 %v1490, %v1476
      %v1492 = vadd.f32 %v1491, %v1477
      %v1493 = vadd.f32 %v1492, %v1478
      %v1494 = vadd.f32 %v1493, %v1479
      %v1495 = vadd.f32 %v1494, %v1480
      %v1496 = vadd.f32 %v1495, %v1481
      %v1497 = vadd.f32 %v1496, %v1482
      %v1498 = vadd.f32 %v1497, %v1483
      %v1499 = vadd.f32 %v1498, %v1484
      %v1500 = vadd.f32 %v1499, %v1485
      %1501 = vst [vmem:[%s259] sm:$0xff] %v1500
      %s1502 = smul.u32 %s20, 2
      %s1503 = sadd.s32 %s1502, %s21
      %s1504 = smul.u32 16, %s1503
      %p1505 = scmp.lt.s32.totalorder %s1504, 63
      %s1506 = scalar_select %p1505, %s1504, 63
      %s1507 = smul.addr %s1506, 4
      %s1508 = scalar_lea.vmem %s2, %s1507
      %s1509 = smul.u32 %s20, 2
      %s1510 = sadd.s32 %s1509, %s21
      %p1511 = scmp.lt.s32.totalorder %s1510, 3
      %s1512 = scalar_select %p1511, %s1510, 3
      %s1513 = smul.addr %s1512, 8
      %s1514 = scalar_lea.vmem %s3, %s1513
      %s1515 = smul.u32 %s20, 2
      %s1516 = sadd.s32 %s1515, %s21
      %p1517 = scmp.lt.s32.totalorder %s1516, 3
      %s1518 = scalar_select %p1517, %s1516, 3
      %s1519 = smul.addr %s1518, 8
      %s1520 = scalar_lea.vmem %s4, %s1519
      // Predicated region
      $region29: #{inpainting_net_forward.4} parent=27 // pred_check
        %p1521 = pneg %p97
      $region30: #{inpainting_net_forward.4} parent=27 // pred_check_branch
        %1523 = sbr.rel (%p1521) target = $region32
      $region31: #{inpainting_net_forward.4} parent=27 // pred_region
        %s1524 = smul.u32 %s20, 2
        %s1525 = sadd.s32 %s1524, %s21
        %s1526 = smul.u32 16, %s1525
      $region32: #{inpainting_net_forward.4} parent=27 // pred_fallthru
        _
      // Predicated region
      $region33: #{inpainting_net_forward.4} parent=27 // pred_check
        %p1527 = pneg %p127
      $region34: #{inpainting_net_forward.4} parent=27 // pred_check_branch
        %1529 = sbr.rel (%p1527) target = $region36
      $region35: #{inpainting_net_forward.4} parent=27 // pred_region
        %s1530 = smul.u32 %s20, 2
        %s1531 = sadd.s32 %s1530, %s21
      $region36: #{inpainting_net_forward.4} parent=27 // pred_fallthru
        _
      // Predicated region
      $region37: #{inpainting_net_forward.4} parent=27 // pred_check
        %p1532 = pneg %p157
      $region38: #{inpainting_net_forward.4} parent=27 // pred_check_branch
        %1534 = sbr.rel (%p1532) target = $region40
      $region39: #{inpainting_net_forward.4} parent=27 // pred_region
        %s1535 = smul.u32 %s20, 2
        %s1536 = sadd.s32 %s1535, %s21
      $region40: #{inpainting_net_forward.4} parent=27 // pred_fallthru
        _
    $region28: #{inpainting_net_forward.4} parent=5 // pred_fallthru
      _
    %p1537 = scmp.le.s32.totalorder 2, %s11
    // Predicated region
    $region41: #{inpainting_net_forward.4} parent=5 // pred_check
      %p1538 = pneg %p1537
    $region42: #{inpainting_net_forward.4} parent=5 // pred_check_branch
      %1540 = sbr.rel (%p1538) target = $region44
    $region43: #{inpainting_net_forward.4} parent=5 // pred_region
      %s1541 = ssub.s32 %s11, 2
      // Predicated region
      $region45: #{inpainting_net_forward.4} parent=43 // pred_check
        %p1542 = pneg %p103
      $region46: #{inpainting_net_forward.4} parent=43 // pred_check_branch
        %1544 = sbr.rel (%p1542) target = $region48
      $region47: #{inpainting_net_forward.4} parent=43 // pred_region
        %s1545 = smul.u32 %s22, 2
        %s1546 = sadd.s32 %s1545, %s23
        %s1547 = smul.u32 16, %s1546
        %p1548 = scmp.lt.s32.totalorder %s1547, 63
        %s1549 = scalar_select %p1548, %s1547, 63
        %s1550 = smul.addr %s1549, 4
        %s1551 = scalar_lea.vmem %s2, %s1550
      $region48: #{inpainting_net_forward.4} parent=43 // pred_fallthru
        _
      // Predicated region
      $region49: #{inpainting_net_forward.4} parent=43 // pred_check
        %p1552 = pneg %p133
      $region50: #{inpainting_net_forward.4} parent=43 // pred_check_branch
        %1554 = sbr.rel (%p1552) target = $region52
      $region51: #{inpainting_net_forward.4} parent=43 // pred_region
        %s1555 = smul.u32 %s22, 2
        %s1556 = sadd.s32 %s1555, %s23
        %p1557 = scmp.lt.s32.totalorder %s1556, 3
        %s1558 = scalar_select %p1557, %s1556, 3
        %s1559 = smul.addr %s1558, 8
        %s1560 = scalar_lea.vmem %s3, %s1559
      $region52: #{inpainting_net_forward.4} parent=43 // pred_fallthru
        _
      // Predicated region
      $region53: #{inpainting_net_forward.4} parent=43 // pred_check
        %p1561 = pneg %p163
      $region54: #{inpainting_net_forward.4} parent=43 // pred_check_branch
        %1563 = sbr.rel (%p1561) target = $region56
      $region55: #{inpainting_net_forward.4} parent=43 // pred_region
        %s1564 = smul.u32 %s22, 2
        %s1565 = sadd.s32 %s1564, %s23
        %p1566 = scmp.lt.s32.totalorder %s1565, 3
        %s1567 = scalar_select %p1566, %s1565, 3
        %s1568 = smul.addr %s1567, 8
        %s1569 = scalar_lea.vmem %s4, %s1568
      $region56: #{inpainting_net_forward.4} parent=43 // pred_fallthru
        _
    $region44: #{inpainting_net_forward.4} parent=5 // pred_fallthru
      _
  $region6: #{inpainting_net_forward.4} parent=0 // loop_footer
    %s15 = sadd.s32 1, %s11
  $region7: #{inpainting_net_forward.4} parent=0 // loop_footer_branch
    %10 = sbr.rel target = $region3
  $region8: #{inpainting_net_forward.4} parent=0 // loop_exit
    _

// kernel: inpainting_net_forward.6
$region0: #{inpainting_net_forward.6}
  #allocation0 [shape = 'u32[]', space=smem, size = 0x4, offset = 0x4, fixed_abs, tag = 'smem constant byte address 0x4 - core index']
  #allocation1 [shape = 'u32[72,128]{1,0:T(1,128)}', space=vmem, size = 0x9000, scoped, tag = 'internal scratch']
  %s0 = inlined_call_operand.vmem [shape: bf16[2,34,34,32], index: 0, kind: input, shape index: {}]
  %s1 = inlined_call_operand.vmem [shape: bf16[9,32,128], index: 1, kind: input, shape index: {}]
  %s2 = inlined_call_operand.vmem [shape: bf16[2048,128], index: 2, kind: output, shape index: {0}]
  %s3 = inlined_call_operand.vmem [shape: f32[64,128], index: 3, kind: output, shape index: {1}]
  %s4 = inlined_call_operand.vmem [shape: f32[64,128], index: 4, kind: output, shape index: {2}]
  %5 = xla_tuple %s2, %s3, %s4
  %s6 = sld [smem:[#allocation0]]
  $region57: #{inpainting_net_forward.6} parent=0
    _
  %s8 = ssub.s32 1, %s6
  %s9 = scalar_select 0, %s8, %s6
  loop: start=0, step=1, limit=10
  $region2: #{inpainting_net_forward.6} parent=0 // loop_pre_header
    _
  $region3: #{inpainting_net_forward.6} parent=0 // loop_header
    %s11 = sphi 0, %s15
    %p12 = scmp.ge.s32.totalorder %s11, 10
    %s18 = sphi 0, %s30
    %s19 = sphi 0, %s26
    %s20 = sphi 0, %s18
    %s21 = sphi 0, %s19
    %s22 = sphi 0, %s20
    %s23 = sphi 0, %s21
    %s33 = sphi 0, %s35
    %s36 = sphi 0, %s33
    %s37 = sphi 0, %s36
    %s53 = sphi 0, %s37
    %s57 = sphi 0, %s57
    %s59 = sphi 0, %s57
    %s60 = sphi 0, %s59
    %s74 = sphi 0, %s60
    %s84 = sphi 0, %s86
    %s87 = sphi 0, %s84
    %s88 = sphi 0, %s87
    %s104 = sphi 0, %s88
    %s114 = sphi 0, %s116
    %s117 = sphi 0, %s114
    %s118 = sphi 0, %s117
    %s134 = sphi 0, %s118
    %s144 = sphi 0, %s146
    %s147 = sphi 0, %s144
    %s148 = sphi 0, %s147
    %s164 = sphi 0, %s148
  $region4: #{inpainting_net_forward.6} parent=0 // loop_header_branch
    %14 = sbr.rel (%p12) target = $region8
  $region5: #{inpainting_net_forward.6} parent=0 // loop_body
    %s16 = ssub.s32 %s11, 1
    %s17 = ssub.s32 %s11, 2
    %s24 = sadd.s32 1, %s19
    %p25 = scmp.ge.s32.totalorder %s24, 4
    %s26 = scalar_select %p25, 0, %s24
    %s27 = sadd.s32 1, %s18
    %s28 = scalar_select %p25, %s27, %s18
    %p29 = scmp.ge.s32.totalorder %s28, 2
    %s30 = scalar_select %p29, 0, %s28
    %s31 = ssub.s32 %s18, %s30
    %p32 = scmp.eq.s32.totalorder %s31, 0
    %s34 = sadd.s32 %s33, 1
    %s35 = scalar_select %p32, %s33, %s34
    %p38 = pneg %p32
    %p39 = scmp.eq.s32.totalorder %s11, 7
    %p40 = por %p38, %p39
    %p41 = scmp.ne.s32.totalorder %s33, %s36
    %p42 = scmp.eq.s32.totalorder %s11, 0
    %p43 = por %p41, %p42
    %p44 = scmp.ne.s32.totalorder %s33, %s36
    %p45 = scmp.eq.s32.totalorder %s16, 7
    %p46 = por %p44, %p45
    %p47 = scmp.ne.s32.totalorder %s36, %s37
    %p48 = scmp.eq.s32.totalorder %s16, 0
    %p49 = por %p47, %p48
    %p50 = scmp.ne.s32.totalorder %s36, %s37
    %p51 = scmp.eq.s32.totalorder %s17, 7
    %p52 = por %p50, %p51
    %p54 = scmp.ne.s32.totalorder %s37, %s53
    %p55 = scmp.eq.s32.totalorder %s17, 0
    %p56 = por %p54, %p55
    %s58 = sadd.s32 %s57, 1
    %p61 = scmp.eq.s32.totalorder %s11, 7
    %p62 = scmp.ne.s32.totalorder %s57, %s59
    %p63 = scmp.eq.s32.totalorder %s11, 0
    %p64 = por %p62, %p63
    %p65 = scmp.ne.s32.totalorder %s57, %s59
    %p66 = scmp.eq.s32.totalorder %s16, 7
    %p67 = por %p65, %p66
    %p68 = scmp.ne.s32.totalorder %s59, %s60
    %p69 = scmp.eq.s32.totalorder %s16, 0
    %p70 = por %p68, %p69
    %p71 = scmp.ne.s32.totalorder %s59, %s60
    %p72 = scmp.eq.s32.totalorder %s17, 7
    %p73 = por %p71, %p72
    %p75 = scmp.ne.s32.totalorder %s60, %s74
    %p76 = scmp.eq.s32.totalorder %s17, 0
    %p77 = por %p75, %p76
    %s78 = smul.u32 %s18, 4
    %s79 = sadd.s32 %s78, %s19
    %s80 = smul.u32 %s30, 4
    %s81 = sadd.s32 %s80, %s26
    %s82 = ssub.s32 %s79, %s81
    %p83 = scmp.eq.s32.totalorder %s82, 0
    %s85 = sadd.s32 %s84, 1
    %s86 = scalar_select %p83, %s84, %s85
    %p89 = pneg %p83
    %p90 = scmp.eq.s32.totalorder %s11, 7
    %p91 = por %p89, %p90
    %p92 = scmp.ne.s32.totalorder %s84, %s87
    %p93 = scmp.eq.s32.totalorder %s11, 0
    %p94 = por %p92, %p93
    %p95 = scmp.ne.s32.totalorder %s84, %s87
    %p96 = scmp.eq.s32.totalorder %s16, 7
    %p97 = por %p95, %p96
    %p98 = scmp.ne.s32.totalorder %s87, %s88
    %p99 = scmp.eq.s32.totalorder %s16, 0
    %p100 = por %p98, %p99
    %p101 = scmp.ne.s32.totalorder %s87, %s88
    %p102 = scmp.eq.s32.totalorder %s17, 7
    %p103 = por %p101, %p102
    %p105 = scmp.ne.s32.totalorder %s88, %s104
    %p106 = scmp.eq.s32.totalorder %s17, 0
    %p107 = por %p105, %p106
    %s108 = smul.u32 %s18, 4
    %s109 = sadd.s32 %s108, %s19
    %s110 = smul.u32 %s30, 4
    %s111 = sadd.s32 %s110, %s26
    %s112 = ssub.s32 %s109, %s111
    %p113 = scmp.eq.s32.totalorder %s112, 0
    %s115 = sadd.s32 %s114, 1
    %s116 = scalar_select %p113, %s114, %s115
    %p119 = pneg %p113
    %p120 = scmp.eq.s32.totalorder %s11, 7
    %p121 = por %p119, %p120
    %p122 = scmp.ne.s32.totalorder %s114, %s117
    %p123 = scmp.eq.s32.totalorder %s11, 0
    %p124 = por %p122, %p123
    %p125 = scmp.ne.s32.totalorder %s114, %s117
    %p126 = scmp.eq.s32.totalorder %s16, 7
    %p127 = por %p125, %p126
    %p128 = scmp.ne.s32.totalorder %s117, %s118
    %p129 = scmp.eq.s32.totalorder %s16, 0
    %p130 = por %p128, %p129
    %p131 = scmp.ne.s32.totalorder %s117, %s118
    %p132 = scmp.eq.s32.totalorder %s17, 7
    %p133 = por %p131, %p132
    %p135 = scmp.ne.s32.totalorder %s118, %s134
    %p136 = scmp.eq.s32.totalorder %s17, 0
    %p137 = por %p135, %p136
    %s138 = smul.u32 %s18, 4
    %s139 = sadd.s32 %s138, %s19
    %s140 = smul.u32 %s30, 4
    %s141 = sadd.s32 %s140, %s26
    %s142 = ssub.s32 %s139, %s141
    %p143 = scmp.eq.s32.totalorder %s142, 0
    %s145 = sadd.s32 %s144, 1
    %s146 = scalar_select %p143, %s144, %s145
    %p149 = pneg %p143
    %p150 = scmp.eq.s32.totalorder %s11, 7
    %p151 = por %p149, %p150
    %p152 = scmp.ne.s32.totalorder %s144, %s147
    %p153 = scmp.eq.s32.totalorder %s11, 0
    %p154 = por %p152, %p153
    %p155 = scmp.ne.s32.totalorder %s144, %s147
    %p156 = scmp.eq.s32.totalorder %s16, 7
    %p157 = por %p155, %p156
    %p158 = scmp.ne.s32.totalorder %s147, %s148
    %p159 = scmp.eq.s32.totalorder %s16, 0
    %p160 = por %p158, %p159
    %p161 = scmp.ne.s32.totalorder %s147, %s148
    %p162 = scmp.eq.s32.totalorder %s17, 7
    %p163 = por %p161, %p162
    %p165 = scmp.ne.s32.totalorder %s148, %s164
    %p166 = scmp.eq.s32.totalorder %s17, 0
    %p167 = por %p165, %p166
    %p168 = scmp.le.s32.totalorder 1, %s11
    %p169 = scmp.lt.s32.totalorder %s11, 9
    %p170 = pnand %p168, %p169
    %p171 = pneg %p170
    // Predicated region
    $region9: #{inpainting_net_forward.6} parent=5 // pred_check
      _
    $region10: #{inpainting_net_forward.6} parent=5 // pred_check_branch
      %173 = sbr.rel (%p170) target = $region12
    $region11: #{inpainting_net_forward.6} parent=5 // pred_region
      %s174 = ssub.s32 %s11, 1
      // Predicated region
      $region13: #{inpainting_net_forward.6} parent=11 // pred_check
        %p175 = pneg %p70
      $region14: #{inpainting_net_forward.6} parent=11 // pred_check_branch
        %177 = sbr.rel (%p175) target = $region16
      $region15: #{inpainting_net_forward.6} parent=11 // pred_region
        _
      $region16: #{inpainting_net_forward.6} parent=11 // pred_fallthru
        _
    $region12: #{inpainting_net_forward.6} parent=5 // pred_fallthru
      _
    %p178 = scmp.lt.s32.totalorder %s11, 8
    // Predicated region
    $region17: #{inpainting_net_forward.6} parent=5 // pred_check
      %p179 = pneg %p178
    $region18: #{inpainting_net_forward.6} parent=5 // pred_check_branch
      %181 = sbr.rel (%p179) target = $region20
    $region19: #{inpainting_net_forward.6} parent=5 // pred_region
      // Predicated region
      $region21: #{inpainting_net_forward.6} parent=19 // pred_check
        %p182 = pneg %p43
      $region22: #{inpainting_net_forward.6} parent=19 // pred_check_branch
        %184 = sbr.rel (%p182) target = $region24
      $region23: #{inpainting_net_forward.6} parent=19 // pred_region
        %p185 = scmp.lt.s32.totalorder %s18, 1
        %s186 = scalar_select %p185, %s18, 1
        %s187 = smul.addr %s186, 170
        %s188 = smul.addr %s187, 4
        %s189 = scalar_lea.vmem %s0, %s188
      $region24: #{inpainting_net_forward.6} parent=19 // pred_fallthru
        _
    $region20: #{inpainting_net_forward.6} parent=5 // pred_fallthru
      _
    %p190 = scmp.le.s32.totalorder 1, %s11
    %p191 = scmp.lt.s32.totalorder %s11, 9
    %p192 = pnand %p190, %p191
    %p193 = pneg %p192
    // Predicated region
    $region25: #{inpainting_net_forward.6} parent=5 // pred_check
      _
    $region26: #{inpainting_net_forward.6} parent=5 // pred_check_branch
      %195 = sbr.rel (%p192) target = $region28
    $region27: #{inpainting_net_forward.6} parent=5 // pred_region
      %s196 = ssub.s32 %s11, 1
      %p197 = scmp.lt.s32.totalorder %s20, 1
      %s198 = scalar_select %p197, %s20, 1
      %s199 = smul.addr %s198, 170
      %s200 = smul.addr %s199, 4
      %s201 = scalar_lea.vmem %s0, %s200
      %p202 = pneg %p49
      %p203 = pneg %p46
      %p204 = pneg %p70
      %p205 = pneg %p67
      %p206 = pneg %p100
      %p207 = pneg %p97
      %s208 = smul.u32 %s20, 4
      %s209 = sadd.s32 %s208, %s21
      %s210 = smul.u32 32, %s209
      %p211 = scmp.lt.s32.totalorder %s210, 255
      %s212 = scalar_select %p211, %s210, 255
      %s213 = smul.addr %s212, 4
      %s214 = scalar_lea.vmem %s2, %s213
      %p215 = pneg %p130
      %p216 = pneg %p127
      %s217 = smul.u32 %s20, 4
      %s218 = sadd.s32 %s217, %s21
      %p219 = scmp.lt.s32.totalorder %s218, 7
      %s220 = scalar_select %p219, %s218, 7
      %s221 = smul.addr %s220, 8
      %s222 = scalar_lea.vmem %s3, %s221
      %p223 = pneg %p160
      %p224 = pneg %p157
      %s225 = smul.u32 %s20, 4
      %s226 = sadd.s32 %s225, %s21
      %p227 = scmp.lt.s32.totalorder %s226, 7
      %s228 = scalar_select %p227, %s226, 7
      %s229 = smul.addr %s228, 8
      %s230 = scalar_lea.vmem %s4, %s229
      %p231 = scmp.lt.s32.totalorder %s20, 1
      %s232 = scalar_select %p231, %s20, 1
      %s233 = smul.addr %s232, 170
      %s234 = smul.addr %s233, 4
      %s235 = scalar_lea.vmem %s0, %s234
      %s236 = smul.u32 %s20, 4
      %s237 = sadd.s32 %s236, %s21
      %s238 = smul.u32 32, %s237
      %p239 = scmp.lt.s32.totalorder %s238, 255
      %s240 = scalar_select %p239, %s238, 255
      %s241 = smul.addr %s240, 4
      %s242 = scalar_lea.vmem %s2, %s241
      %s243 = smul.u32 %s20, 4
      %s244 = sadd.s32 %s243, %s21
      %s245 = smul.u32 32, %s244
      %s246 = smul.u32 %s20, 4
      %s247 = sadd.s32 %s246, %s21
      %p248 = scmp.lt.s32.totalorder %s247, 7
      %s249 = scalar_select %p248, %s247, 7
      %s250 = smul.addr %s249, 8
      %s251 = scalar_lea.vmem %s3, %s250
      %s252 = smul.u32 %s20, 4
      %s253 = sadd.s32 %s252, %s21
      %s254 = smul.u32 %s20, 4
      %s255 = sadd.s32 %s254, %s21
      %p256 = scmp.lt.s32.totalorder %s255, 7
      %s257 = scalar_select %p256, %s255, 7
      %s258 = smul.addr %s257, 8
      %s259 = scalar_lea.vmem %s4, %s258
      %s260 = smul.u32 %s20, 4
      %s261 = sadd.s32 %s260, %s21
      %s263 = smul.u32 %s21, 8
      %s264 = smul.u32 %s263, 5
      %s265 = smul.addr %s264, 4
      %s266 = scalar_lea.vmem %s235, %s265
      %v267 = vld [vmem:[%s266] sm:$0xf]
      %v268 = vld [vmem:[%s266 + $0x4] sm:$0xf]
      %v269 = vld [vmem:[%s266 + $0x8] sm:$0xf]
      %v270 = vld [vmem:[%s266 + $0xc] sm:$0xf]
      %v271 = vld [vmem:[%s266 + $0x10] sm:$0x1]
      %v272 = vld [vmem:[%s266 + $0x14] sm:$0xf]
      %v273 = vld [vmem:[%s266 + $0x18] sm:$0xf]
      %v274 = vld [vmem:[%s266 + $0x1c] sm:$0xf]
      %v275 = vld [vmem:[%s266 + $0x20] sm:$0xf]
      %v276 = vld [vmem:[%s266 + $0x24] sm:$0x1]
      %v277 = vld [vmem:[%s266 + $0x28] sm:$0xf]
      %v278 = vld [vmem:[%s266 + $0x2c] sm:$0xf]
      %v279 = vld [vmem:[%s266 + $0x30] sm:$0xf]
      %v280 = vld [vmem:[%s266 + $0x34] sm:$0xf]
      %v281 = vld [vmem:[%s266 + $0x38] sm:$0x1]
      %v282 = vld [vmem:[%s266 + $0x3c] sm:$0xf]
      %v283 = vld [vmem:[%s266 + $0x40] sm:$0xf]
      %v284 = vld [vmem:[%s266 + $0x44] sm:$0xf]
      %v285 = vld [vmem:[%s266 + $0x48] sm:$0xf]
      %v286 = vld [vmem:[%s266 + $0x4c] sm:$0x1]
      %v287 = vld [vmem:[%s266 + $0x50] sm:$0xf]
      %v288 = vld [vmem:[%s266 + $0x54] sm:$0xf]
      %v289 = vld [vmem:[%s266 + $0x58] sm:$0xf]
      %v290 = vld [vmem:[%s266 + $0x5c] sm:$0xf]
      %v291 = vld [vmem:[%s266 + $0x60] sm:$0x1]
      %v292 = vld [vmem:[%s266 + $0x64] sm:$0xf]
      %v293 = vld [vmem:[%s266 + $0x68] sm:$0xf]
      %v294 = vld [vmem:[%s266 + $0x6c] sm:$0xf]
      %v295 = vld [vmem:[%s266 + $0x70] sm:$0xf]
      %v296 = vld [vmem:[%s266 + $0x74] sm:$0x1]
      %v297 = vld [vmem:[%s266 + $0x78] sm:$0xf]
      %v298 = vld [vmem:[%s266 + $0x7c] sm:$0xf]
      %v299 = vld [vmem:[%s266 + $0x80] sm:$0xf]
      %v300 = vld [vmem:[%s266 + $0x84] sm:$0xf]
      %v301 = vld [vmem:[%s266 + $0x88] sm:$0x1]
      %v302 = vld [vmem:[%s266 + $0x8c] sm:$0xf]
      %v303 = vld [vmem:[%s266 + $0x90] sm:$0xf]
      %v304 = vld [vmem:[%s266 + $0x94] sm:$0xf]
      %v305 = vld [vmem:[%s266 + $0x98] sm:$0xf]
      %v306 = vld [vmem:[%s266 + $0x9c] sm:$0x1]
      %v307 = vld [vmem:[%s266 + $0xa0] sm:$0xf]
      %v308 = vld [vmem:[%s266 + $0xa4] sm:$0xf]
      %v309 = vld [vmem:[%s266 + $0xa8] sm:$0xf]
      %v310 = vld [vmem:[%s266 + $0xac] sm:$0xf]
      %v311 = vld [vmem:[%s266 + $0xb0] sm:$0x1]
      %v312 = vld [vmem:[%s266 + $0xb4] sm:$0xf]
      %v313 = vld [vmem:[%s266 + $0xb8] sm:$0xf]
      %v314 = vld [vmem:[%s266 + $0xbc] sm:$0xf]
      %v315 = vld [vmem:[%s266 + $0xc0] sm:$0xf]
      %v316 = vld [vmem:[%s266 + $0xc4] sm:$0x1]
      %v317 = vld [vmem:[%s1] sm:$0xf]
      %v318 = vld [vmem:[%s1 + $0x4] sm:$0xf]
      %v319 = vld [vmem:[%s1 + $0x8] sm:$0xf]
      %v320 = vld [vmem:[%s1 + $0xc] sm:$0xf]
      %vm321 = vsmask.f32 3328
      %vm322 = vsmask.f32 7440
      %vm323 = vmor %vm321, %vm322
      %v325 = vshrl.u32 %v267, 16
      %v327 = vrot.slane %v325, 4
      %v328 = vshll.u32 %v267, 16
      %v330 = vrot.slane %v328, 5
      %v331 = vor.u32 %v327, %v330
      %v332 = vrot.slane %v331, 4
      %v334 = vshll.u32 %v268, 16
      %v336 = vrot.slane %v334, 5
      %v337 = vsel %vm323, %v332, %v336
      %v338 = vshrl.u32 %v268, 16
      %v340 = vrot.slane %v338, 4
      %v341 = vor.u32 %v340, %v336
      %v342 = vrot.slane %v341, 4
      %v344 = vshll.u32 %v269, 16
      %v346 = vrot.slane %v344, 5
      %v347 = vsel %vm323, %v342, %v346
      %v348 = vshrl.u32 %v269, 16
      %v350 = vrot.slane %v348, 4
      %v351 = vor.u32 %v350, %v346
      %v352 = vrot.slane %v351, 4
      %v354 = vshll.u32 %v270, 16
      %v356 = vrot.slane %v354, 5
      %v357 = vsel %vm323, %v352, %v356
      %v358 = vshrl.u32 %v270, 16
      %v360 = vrot.slane %v358, 4
      %v361 = vor.u32 %v360, %v356
      %v362 = vrot.slane %v361, 4
      %v364 = vshll.u32 %v271, 16
      %v366 = vrot.slane %v364, 5
      %v367 = vsel %vm323, %v362, %v366
      %v369 = vshrl.u32 %v272, 16
      %v371 = vrot.slane %v369, 4
      %v372 = vshll.u32 %v272, 16
      %v374 = vrot.slane %v372, 5
      %v375 = vor.u32 %v371, %v374
      %v376 = vrot.slane %v375, 4
      %v378 = vshll.u32 %v273, 16
      %v380 = vrot.slane %v378, 5
      %v381 = vsel %vm323, %v376, %v380
      %v382 = vshrl.u32 %v273, 16
      %v384 = vrot.slane %v382, 4
      %v385 = vor.u32 %v384, %v380
      %v386 = vrot.slane %v385, 4
      %v388 = vshll.u32 %v274, 16
      %v390 = vrot.slane %v388, 5
      %v391 = vsel %vm323, %v386, %v390
      %v392 = vshrl.u32 %v274, 16
      %v394 = vrot.slane %v392, 4
      %v395 = vor.u32 %v394, %v390
      %v396 = vrot.slane %v395, 4
      %v398 = vshll.u32 %v275, 16
      %v400 = vrot.slane %v398, 5
      %v401 = vsel %vm323, %v396, %v400
      %v402 = vshrl.u32 %v275, 16
      %v404 = vrot.slane %v402, 4
      %v405 = vor.u32 %v404, %v400
      %v406 = vrot.slane %v405, 4
      %v408 = vshll.u32 %v276, 16
      %v410 = vrot.slane %v408, 5
      %v411 = vsel %vm323, %v406, %v410
      %v413 = vshrl.u32 %v277, 16
      %v415 = vrot.slane %v413, 4
      %v416 = vshll.u32 %v277, 16
      %v418 = vrot.slane %v416, 5
      %v419 = vor.u32 %v415, %v418
      %v420 = vrot.slane %v419, 4
      %v422 = vshll.u32 %v278, 16
      %v424 = vrot.slane %v422, 5
      %v425 = vsel %vm323, %v420, %v424
      %v426 = vshrl.u32 %v278, 16
      %v428 = vrot.slane %v426, 4
      %v429 = vor.u32 %v428, %v424
      %v430 = vrot.slane %v429, 4
      %v432 = vshll.u32 %v279, 16
      %v434 = vrot.slane %v432, 5
      %v435 = vsel %vm323, %v430, %v434
      %v436 = vshrl.u32 %v279, 16
      %v438 = vrot.slane %v436, 4
      %v439 = vor.u32 %v438, %v434
      %v440 = vrot.slane %v439, 4
      %v442 = vshll.u32 %v280, 16
      %v444 = vrot.slane %v442, 5
      %v445 = vsel %vm323, %v440, %v444
      %v446 = vshrl.u32 %v280, 16
      %v448 = vrot.slane %v446, 4
      %v449 = vor.u32 %v448, %v444
      %v450 = vrot.slane %v449, 4
      %v452 = vshll.u32 %v281, 16
      %v454 = vrot.slane %v452, 5
      %v455 = vsel %vm323, %v450, %v454
      %v457 = vshrl.u32 %v282, 16
      %v459 = vrot.slane %v457, 4
      %v460 = vshll.u32 %v282, 16
      %v462 = vrot.slane %v460, 5
      %v463 = vor.u32 %v459, %v462
      %v464 = vrot.slane %v463, 4
      %v466 = vshll.u32 %v283, 16
      %v468 = vrot.slane %v466, 5
      %v469 = vsel %vm323, %v464, %v468
      %v470 = vshrl.u32 %v283, 16
      %v472 = vrot.slane %v470, 4
      %v473 = vor.u32 %v472, %v468
      %v474 = vrot.slane %v473, 4
      %v476 = vshll.u32 %v284, 16
      %v478 = vrot.slane %v476, 5
      %v479 = vsel %vm323, %v474, %v478
      %v480 = vshrl.u32 %v284, 16
      %v482 = vrot.slane %v480, 4
      %v483 = vor.u32 %v482, %v478
      %v484 = vrot.slane %v483, 4
      %v486 = vshll.u32 %v285, 16
      %v488 = vrot.slane %v486, 5
      %v489 = vsel %vm323, %v484, %v488
      %v490 = vshrl.u32 %v285, 16
      %v492 = vrot.slane %v490, 4
      %v493 = vor.u32 %v492, %v488
      %v494 = vrot.slane %v493, 4
      %v496 = vshll.u32 %v286, 16
      %v498 = vrot.slane %v496, 5
      %v499 = vsel %vm323, %v494, %v498
      %v501 = vshrl.u32 %v287, 16
      %v503 = vrot.slane %v501, 4
      %v504 = vshll.u32 %v287, 16
      %v506 = vrot.slane %v504, 5
      %v507 = vor.u32 %v503, %v506
      %v508 = vrot.slane %v507, 4
      %v510 = vshll.u32 %v288, 16
      %v512 = vrot.slane %v510, 5
      %v513 = vsel %vm323, %v508, %v512
      %v514 = vshrl.u32 %v288, 16
      %v516 = vrot.slane %v514, 4
      %v517 = vor.u32 %v516, %v512
      %v518 = vrot.slane %v517, 4
      %v520 = vshll.u32 %v289, 16
      %v522 = vrot.slane %v520, 5
      %v523 = vsel %vm323, %v518, %v522
      %v524 = vshrl.u32 %v289, 16
      %v526 = vrot.slane %v524, 4
      %v527 = vor.u32 %v526, %v522
      %v528 = vrot.slane %v527, 4
      %v530 = vshll.u32 %v290, 16
      %v532 = vrot.slane %v530, 5
      %v533 = vsel %vm323, %v528, %v532
      %v534 = vshrl.u32 %v290, 16
      %v536 = vrot.slane %v534, 4
      %v537 = vor.u32 %v536, %v532
      %v538 = vrot.slane %v537, 4
      %v540 = vshll.u32 %v291, 16
      %v542 = vrot.slane %v540, 5
      %v543 = vsel %vm323, %v538, %v542
      %v545 = vshrl.u32 %v292, 16
      %v547 = vrot.slane %v545, 4
      %v548 = vshll.u32 %v292, 16
      %v550 = vrot.slane %v548, 5
      %v551 = vor.u32 %v547, %v550
      %v552 = vrot.slane %v551, 4
      %v554 = vshll.u32 %v293, 16
      %v556 = vrot.slane %v554, 5
      %v557 = vsel %vm323, %v552, %v556
      %v558 = vshrl.u32 %v293, 16
      %v560 = vrot.slane %v558, 4
      %v561 = vor.u32 %v560, %v556
      %v562 = vrot.slane %v561, 4
      %v564 = vshll.u32 %v294, 16
      %v566 = vrot.slane %v564, 5
      %v567 = vsel %vm323, %v562, %v566
      %v568 = vshrl.u32 %v294, 16
      %v570 = vrot.slane %v568, 4
      %v571 = vor.u32 %v570, %v566
      %v572 = vrot.slane %v571, 4
      %v574 = vshll.u32 %v295, 16
      %v576 = vrot.slane %v574, 5
      %v577 = vsel %vm323, %v572, %v576
      %v578 = vshrl.u32 %v295, 16
      %v580 = vrot.slane %v578, 4
      %v581 = vor.u32 %v580, %v576
      %v582 = vrot.slane %v581, 4
      %v584 = vshll.u32 %v296, 16
      %v586 = vrot.slane %v584, 5
      %v587 = vsel %vm323, %v582, %v586
      %v589 = vshrl.u32 %v297, 16
      %v591 = vrot.slane %v589, 4
      %v592 = vshll.u32 %v297, 16
      %v594 = vrot.slane %v592, 5
      %v595 = vor.u32 %v591, %v594
      %v596 = vrot.slane %v595, 4
      %v598 = vshll.u32 %v298, 16
      %v600 = vrot.slane %v598, 5
      %v601 = vsel %vm323, %v596, %v600
      %v602 = vshrl.u32 %v298, 16
      %v604 = vrot.slane %v602, 4
      %v605 = vor.u32 %v604, %v600
      %v606 = vrot.slane %v605, 4
      %v608 = vshll.u32 %v299, 16
      %v610 = vrot.slane %v608, 5
      %v611 = vsel %vm323, %v606, %v610
      %v612 = vshrl.u32 %v299, 16
      %v614 = vrot.slane %v612, 4
      %v615 = vor.u32 %v614, %v610
      %v616 = vrot.slane %v615, 4
      %v618 = vshll.u32 %v300, 16
      %v620 = vrot.slane %v618, 5
      %v621 = vsel %vm323, %v616, %v620
      %v622 = vshrl.u32 %v300, 16
      %v624 = vrot.slane %v622, 4
      %v625 = vor.u32 %v624, %v620
      %v626 = vrot.slane %v625, 4
      %v628 = vshll.u32 %v301, 16
      %v630 = vrot.slane %v628, 5
      %v631 = vsel %vm323, %v626, %v630
      %v633 = vshrl.u32 %v302, 16
      %v635 = vrot.slane %v633, 4
      %v636 = vshll.u32 %v302, 16
      %v638 = vrot.slane %v636, 5
      %v639 = vor.u32 %v635, %v638
      %v640 = vrot.slane %v639, 4
      %v642 = vshll.u32 %v303, 16
      %v644 = vrot.slane %v642, 5
      %v645 = vsel %vm323, %v640, %v644
      %v646 = vshrl.u32 %v303, 16
      %v648 = vrot.slane %v646, 4
      %v649 = vor.u32 %v648, %v644
      %v650 = vrot.slane %v649, 4
      %v652 = vshll.u32 %v304, 16
      %v654 = vrot.slane %v652, 5
      %v655 = vsel %vm323, %v650, %v654
      %v656 = vshrl.u32 %v304, 16
      %v658 = vrot.slane %v656, 4
      %v659 = vor.u32 %v658, %v654
      %v660 = vrot.slane %v659, 4
      %v662 = vshll.u32 %v305, 16
      %v664 = vrot.slane %v662, 5
      %v665 = vsel %vm323, %v660, %v664
      %v666 = vshrl.u32 %v305, 16
      %v668 = vrot.slane %v666, 4
      %v669 = vor.u32 %v668, %v664
      %v670 = vrot.slane %v669, 4
      %v672 = vshll.u32 %v306, 16
      %v674 = vrot.slane %v672, 5
      %v675 = vsel %vm323, %v670, %v674
      %s676 = scalar_lea.vmem %s1, 16
      %v677 = vld [vmem:[%s676] sm:$0xf]
      %v678 = vld [vmem:[%s676 + $0x4] sm:$0xf]
      %v679 = vld [vmem:[%s676 + $0x8] sm:$0xf]
      %v680 = vld [vmem:[%s676 + $0xc] sm:$0xf]
      %v681 = vunpack.c.l.b16 %v337
      %v682 = vunpack.c.l.b16 %v347
      %v683 = vunpack.c.l.b16 %v357
      %v684 = vunpack.c.l.b16 %v367
      %v685 = vunpack.c.l.b16 %v381
      %v686 = vunpack.c.l.b16 %v391
      %v687 = vunpack.c.l.b16 %v401
      %v688 = vunpack.c.l.b16 %v411
      %v689 = vunpack.c.l.b16 %v425
      %v690 = vunpack.c.l.b16 %v435
      %v691 = vunpack.c.l.b16 %v445
      %v692 = vunpack.c.l.b16 %v455
      %v693 = vunpack.c.l.b16 %v469
      %v694 = vunpack.c.l.b16 %v479
      %v695 = vunpack.c.l.b16 %v489
      %v696 = vunpack.c.l.b16 %v499
      %v697 = vunpack.c.l.b16 %v513
      %v698 = vunpack.c.l.b16 %v523
      %v699 = vunpack.c.l.b16 %v533
      %v700 = vunpack.c.l.b16 %v543
      %v701 = vunpack.c.l.b16 %v557
      %v702 = vunpack.c.l.b16 %v567
      %v703 = vunpack.c.l.b16 %v577
      %v704 = vunpack.c.l.b16 %v587
      %v705 = vunpack.c.l.b16 %v601
      %v706 = vunpack.c.l.b16 %v611
      %v707 = vunpack.c.l.b16 %v621
      %v708 = vunpack.c.l.b16 %v631
      %v709 = vunpack.c.l.b16 %v645
      %v710 = vunpack.c.l.b16 %v655
      %v711 = vunpack.c.l.b16 %v665
      %v712 = vunpack.c.l.b16 %v675
      %v713 = vpack.c.b16 %v682, %v681
      %v714 = vpack.c.b16 %v684, %v683
      %v715 = vpack.c.b16 %v686, %v685
      %v716 = vpack.c.b16 %v688, %v687
      %v717 = vpack.c.b16 %v690, %v689
      %v718 = vpack.c.b16 %v692, %v691
      %v719 = vpack.c.b16 %v694, %v693
      %v720 = vpack.c.b16 %v696, %v695
      %v721 = vpack.c.b16 %v698, %v697
      %v722 = vpack.c.b16 %v700, %v699
      %v723 = vpack.c.b16 %v702, %v701
      %v724 = vpack.c.b16 %v704, %v703
      %v725 = vpack.c.b16 %v706, %v705
      %v726 = vpack.c.b16 %v708, %v707
      %v727 = vpack.c.b16 %v710, %v709
      %v728 = vpack.c.b16 %v712, %v711
      %v733 = vunpack.c.l.b16 %v677
      %v734 = vunpack.c.l.b16 %v678
      %v735 = vunpack.c.l.b16 %v679
      %v736 = vunpack.c.l.b16 %v680
      %v737 = vpack.c.b16 %v734, %v733
      %v738 = vpack.c.b16 %v736, %v735
      %vm741 = vcmask 261120
      %v743 = vsel %vm741, %v713, 0
      %v746 = vsel %vm741, %v714, 0
      %v749 = vsel %vm741, %v715, 0
      %v752 = vsel %vm741, %v716, 0
      %v755 = vsel %vm741, %v717, 0
      %v758 = vsel %vm741, %v718, 0
      %v761 = vsel %vm741, %v719, 0
      %v764 = vsel %vm741, %v720, 0
      %v767 = vsel %vm741, %v721, 0
      %v770 = vsel %vm741, %v722, 0
      %v773 = vsel %vm741, %v723, 0
      %v776 = vsel %vm741, %v724, 0
      %v779 = vsel %vm741, %v725, 0
      %v782 = vsel %vm741, %v726, 0
      %v785 = vsel %vm741, %v727, 0
      %v788 = vsel %vm741, %v728, 0
      %790 = vmatpush.bf16.msra.mxu0 0
      %791 = vmatpush.bf16.msra.mxu0 0
      %792 = vmatpush.bf16.msra.mxu0 0
      %793 = vmatpush.bf16.msra.mxu0 0
      %794 = vmatpush.bf16.msra.mxu0 0
      %795 = vmatpush.bf16.msra.mxu0 0
      %796 = vmatpush.bf16.msra.mxu0 %v738
      %797 = vmatpush.bf16.msra.mxu0 %v737
      %798 = vmatmul.bf16.gmra.mxu0 %v743
      %v799 = vpop.f32.mrf.mxu0
      %v800 = vadd.f32 0.0, %v799
      %v801 = vpop.f32.mrf.mxu0
      %v802 = vadd.f32 0.0, %v801
      %803 = vmatmul.bf16.gmra.mxu0 %v746
      %v804 = vpop.f32.mrf.mxu0
      %v805 = vadd.f32 0.0, %v804
      %v806 = vpop.f32.mrf.mxu0
      %v807 = vadd.f32 0.0, %v806
      %808 = vmatmul.bf16.gmra.mxu0 %v749
      %v809 = vpop.f32.mrf.mxu0
      %v810 = vadd.f32 0.0, %v809
      %v811 = vpop.f32.mrf.mxu0
      %v812 = vadd.f32 0.0, %v811
      %813 = vmatmul.bf16.gmra.mxu0 %v752
      %v814 = vpop.f32.mrf.mxu0
      %v815 = vadd.f32 0.0, %v814
      %v816 = vpop.f32.mrf.mxu0
      %v817 = vadd.f32 0.0, %v816
      %818 = vmatmul.bf16.gmra.mxu0 %v755
      %v819 = vpop.f32.mrf.mxu0
      %v820 = vadd.f32 0.0, %v819
      %v821 = vpop.f32.mrf.mxu0
      %v822 = vadd.f32 0.0, %v821
      %823 = vmatmul.bf16.gmra.mxu0 %v758
      %v824 = vpop.f32.mrf.mxu0
      %v825 = vadd.f32 0.0, %v824
      %v826 = vpop.f32.mrf.mxu0
      %v827 = vadd.f32 0.0, %v826
      %828 = vmatmul.bf16.gmra.mxu0 %v761
      %v829 = vpop.f32.mrf.mxu0
      %v830 = vadd.f32 0.0, %v829
      %v831 = vpop.f32.mrf.mxu0
      %v832 = vadd.f32 0.0, %v831
      %833 = vmatmul.bf16.gmra.mxu0 %v764
      %v834 = vpop.f32.mrf.mxu0
      %v835 = vadd.f32 0.0, %v834
      %v836 = vpop.f32.mrf.mxu0
      %v837 = vadd.f32 0.0, %v836
      %838 = vmatmul.bf16.gmra.mxu0 %v767
      %v839 = vpop.f32.mrf.mxu0
      %v840 = vadd.f32 0.0, %v839
      %v841 = vpop.f32.mrf.mxu0
      %v842 = vadd.f32 0.0, %v841
      %843 = vmatmul.bf16.gmra.mxu0 %v770
      %v844 = vpop.f32.mrf.mxu0
      %v845 = vadd.f32 0.0, %v844
      %v846 = vpop.f32.mrf.mxu0
      %v847 = vadd.f32 0.0, %v846
      %848 = vmatmul.bf16.gmra.mxu0 %v773
      %v849 = vpop.f32.mrf.mxu0
      %v850 = vadd.f32 0.0, %v849
      %v851 = vpop.f32.mrf.mxu0
      %v852 = vadd.f32 0.0, %v851
      %853 = vmatmul.bf16.gmra.mxu0 %v776
      %v854 = vpop.f32.mrf.mxu0
      %v855 = vadd.f32 0.0, %v854
      %v856 = vpop.f32.mrf.mxu0
      %v857 = vadd.f32 0.0, %v856
      %858 = vmatmul.bf16.gmra.mxu0 %v779
      %v859 = vpop.f32.mrf.mxu0
      %v860 = vadd.f32 0.0, %v859
      %v861 = vpop.f32.mrf.mxu0
      %v862 = vadd.f32 0.0, %v861
      %863 = vmatmul.bf16.gmra.mxu0 %v782
      %v864 = vpop.f32.mrf.mxu0
      %v865 = vadd.f32 0.0, %v864
      %v866 = vpop.f32.mrf.mxu0
      %v867 = vadd.f32 0.0, %v866
      %868 = vmatmul.bf16.gmra.mxu0 %v785
      %v869 = vpop.f32.mrf.mxu0
      %v870 = vadd.f32 0.0, %v869
      %v871 = vpop.f32.mrf.mxu0
      %v872 = vadd.f32 0.0, %v871
      %873 = vmatmul.bf16.gmra.mxu0 %v788
      %v874 = vpop.f32.mrf.mxu0
      %v875 = vadd.f32 0.0, %v874
      %v876 = vpop.f32.mrf.mxu0
      %v877 = vadd.f32 0.0, %v876
      %878 = vdwg.mxu0
      %v911 = vunpack.c.l.b16 %v267
      %v912 = vunpack.c.l.b16 %v268
      %v913 = vunpack.c.l.b16 %v269
      %v914 = vunpack.c.l.b16 %v270
      %v915 = vunpack.c.l.b16 %v272
      %v916 = vunpack.c.l.b16 %v273
      %v917 = vunpack.c.l.b16 %v274
      %v918 = vunpack.c.l.b16 %v275
      %v919 = vunpack.c.l.b16 %v277
      %v920 = vunpack.c.l.b16 %v278
      %v921 = vunpack.c.l.b16 %v279
      %v922 = vunpack.c.l.b16 %v280
      %v923 = vunpack.c.l.b16 %v282
      %v924 = vunpack.c.l.b16 %v283
      %v925 = vunpack.c.l.b16 %v284
      %v926 = vunpack.c.l.b16 %v285
      %v927 = vunpack.c.l.b16 %v287
      %v928 = vunpack.c.l.b16 %v288
      %v929 = vunpack.c.l.b16 %v289
      %v930 = vunpack.c.l.b16 %v290
      %v931 = vunpack.c.l.b16 %v292
      %v932 = vunpack.c.l.b16 %v293
      %v933 = vunpack.c.l.b16 %v294
      %v934 = vunpack.c.l.b16 %v295
      %v935 = vunpack.c.l.b16 %v297
      %v936 = vunpack.c.l.b16 %v298
      %v937 = vunpack.c.l.b16 %v299
      %v938 = vunpack.c.l.b16 %v300
      %v939 = vunpack.c.l.b16 %v302
      %v940 = vunpack.c.l.b16 %v303
      %v941 = vunpack.c.l.b16 %v304
      %v942 = vunpack.c.l.b16 %v305
      %v943 = vpack.c.b16 %v912, %v911
      %v944 = vpack.c.b16 %v914, %v913
      %v945 = vpack.c.b16 %v916, %v915
      %v946 = vpack.c.b16 %v918, %v917
      %v947 = vpack.c.b16 %v920, %v919
      %v948 = vpack.c.b16 %v922, %v921
      %v949 = vpack.c.b16 %v924, %v923
      %v950 = vpack.c.b16 %v926, %v925
      %v951 = vpack.c.b16 %v928, %v927
      %v952 = vpack.c.b16 %v930, %v929
      %v953 = vpack.c.b16 %v932, %v931
      %v954 = vpack.c.b16 %v934, %v933
      %v955 = vpack.c.b16 %v936, %v935
      %v956 = vpack.c.b16 %v938, %v937
      %v957 = vpack.c.b16 %v940, %v939
      %v958 = vpack.c.b16 %v942, %v941
      %v963 = vunpack.c.l.b16 %v317
      %v964 = vunpack.c.l.b16 %v318
      %v965 = vunpack.c.l.b16 %v319
      %v966 = vunpack.c.l.b16 %v320
      %v967 = vpack.c.b16 %v964, %v963
      %v968 = vpack.c.b16 %v966, %v965
      %v972 = vsel %vm741, %v943, 0
      %v975 = vsel %vm741, %v944, 0
      %v978 = vsel %vm741, %v945, 0
      %v981 = vsel %vm741, %v946, 0
      %v984 = vsel %vm741, %v947, 0
      %v987 = vsel %vm741, %v948, 0
      %v990 = vsel %vm741, %v949, 0
      %v993 = vsel %vm741, %v950, 0
      %v996 = vsel %vm741, %v951, 0
      %v999 = vsel %vm741, %v952, 0
      %v1002 = vsel %vm741, %v953, 0
      %v1005 = vsel %vm741, %v954, 0
      %v1008 = vsel %vm741, %v955, 0
      %v1011 = vsel %vm741, %v956, 0
      %v1014 = vsel %vm741, %v957, 0
      %v1017 = vsel %vm741, %v958, 0
      %1019 = vmatpush.bf16.msra.mxu0 0
      %1020 = vmatpush.bf16.msra.mxu0 0
      %1021 = vmatpush.bf16.msra.mxu0 0
      %1022 = vmatpush.bf16.msra.mxu0 0
      %1023 = vmatpush.bf16.msra.mxu0 0
      %1024 = vmatpush.bf16.msra.mxu0 0
      %1025 = vmatpush.bf16.msra.mxu0 %v968
      %1026 = vmatpush.bf16.msra.mxu0 %v967
      %1027 = vmatmul.bf16.gmra.mxu0 %v972
      %v1028 = vpop.f32.mrf.mxu0
      %v1029 = vadd.f32 %v800, %v1028
      %v1030 = vpop.f32.mrf.mxu0
      %v1031 = vadd.f32 %v802, %v1030
      %1032 = vmatmul.bf16.gmra.mxu0 %v975
      %v1033 = vpop.f32.mrf.mxu0
      %v1034 = vadd.f32 %v805, %v1033
      %v1035 = vpop.f32.mrf.mxu0
      %v1036 = vadd.f32 %v807, %v1035
      %1037 = vmatmul.bf16.gmra.mxu0 %v978
      %v1038 = vpop.f32.mrf.mxu0
      %v1039 = vadd.f32 %v810, %v1038
      %v1040 = vpop.f32.mrf.mxu0
      %v1041 = vadd.f32 %v812, %v1040
      %1042 = vmatmul.bf16.gmra.mxu0 %v981
      %v1043 = vpop.f32.mrf.mxu0
      %v1044 = vadd.f32 %v815, %v1043
      %v1045 = vpop.f32.mrf.mxu0
      %v1046 = vadd.f32 %v817, %v1045
      %1047 = vmatmul.bf16.gmra.mxu0 %v984
      %v1048 = vpop.f32.mrf.mxu0
      %v1049 = vadd.f32 %v820, %v1048
      %v1050 = vpop.f32.mrf.mxu0
      %v1051 = vadd.f32 %v822, %v1050
      %1052 = vmatmul.bf16.gmra.mxu0 %v987
      %v1053 = vpop.f32.mrf.mxu0
      %v1054 = vadd.f32 %v825, %v1053
      %v1055 = vpop.f32.mrf.mxu0
      %v1056 = vadd.f32 %v827, %v1055
      %1057 = vmatmul.bf16.gmra.mxu0 %v990
      %v1058 = vpop.f32.mrf.mxu0
      %v1059 = vadd.f32 %v830, %v1058
      %v1060 = vpop.f32.mrf.mxu0
      %v1061 = vadd.f32 %v832, %v1060
      %1062 = vmatmul.bf16.gmra.mxu0 %v993
      %v1063 = vpop.f32.mrf.mxu0
      %v1064 = vadd.f32 %v835, %v1063
      %v1065 = vpop.f32.mrf.mxu0
      %v1066 = vadd.f32 %v837, %v1065
      %1067 = vmatmul.bf16.gmra.mxu0 %v996
      %v1068 = vpop.f32.mrf.mxu0
      %v1069 = vadd.f32 %v840, %v1068
      %v1070 = vpop.f32.mrf.mxu0
      %v1071 = vadd.f32 %v842, %v1070
      %1072 = vmatmul.bf16.gmra.mxu0 %v999
      %v1073 = vpop.f32.mrf.mxu0
      %v1074 = vadd.f32 %v845, %v1073
      %v1075 = vpop.f32.mrf.mxu0
      %v1076 = vadd.f32 %v847, %v1075
      %1077 = vmatmul.bf16.gmra.mxu0 %v1002
      %v1078 = vpop.f32.mrf.mxu0
      %v1079 = vadd.f32 %v850, %v1078
      %v1080 = vpop.f32.mrf.mxu0
      %v1081 = vadd.f32 %v852, %v1080
      %1082 = vmatmul.bf16.gmra.mxu0 %v1005
      %v1083 = vpop.f32.mrf.mxu0
      %v1084 = vadd.f32 %v855, %v1083
      %v1085 = vpop.f32.mrf.mxu0
      %v1086 = vadd.f32 %v857, %v1085
      %1087 = vmatmul.bf16.gmra.mxu0 %v1008
      %v1088 = vpop.f32.mrf.mxu0
      %v1089 = vadd.f32 %v860, %v1088
      %v1090 = vpop.f32.mrf.mxu0
      %v1091 = vadd.f32 %v862, %v1090
      %1092 = vmatmul.bf16.gmra.mxu0 %v1011
      %v1093 = vpop.f32.mrf.mxu0
      %v1094 = vadd.f32 %v865, %v1093
      %v1095 = vpop.f32.mrf.mxu0
      %v1096 = vadd.f32 %v867, %v1095
      %1097 = vmatmul.bf16.gmra.mxu0 %v1014
      %v1098 = vpop.f32.mrf.mxu0
      %v1099 = vadd.f32 %v870, %v1098
      %v1100 = vpop.f32.mrf.mxu0
      %v1101 = vadd.f32 %v872, %v1100
      %1102 = vmatmul.bf16.gmra.mxu0 %v1017
      %v1103 = vpop.f32.mrf.mxu0
      %v1104 = vadd.f32 %v875, %v1103
      %v1105 = vpop.f32.mrf.mxu0
      %v1106 = vadd.f32 %v877, %v1105
      %1107 = vdwg.mxu0
      %vm1116 = vcmask 1042432
      %vm1117 = vcmask 1046532
      %vm1118 = vmor %vm1116, %vm1117
      %v1119 = vrot.slane %v267, 5
      %v1120 = vrot.slane %v1119, 4
      %v1121 = vrot.slane %v268, 5
      %v1122 = vsel %vm1118, %v1120, %v1121
      %v1123 = vrot.slane %v1121, 4
      %v1124 = vrot.slane %v269, 5
      %v1125 = vsel %vm1118, %v1123, %v1124
      %v1126 = vrot.slane %v1124, 4
      %v1127 = vrot.slane %v270, 5
      %v1128 = vsel %vm1118, %v1126, %v1127
      %v1129 = vrot.slane %v1127, 4
      %v1130 = vrot.slane %v271, 5
      %v1131 = vsel %vm1118, %v1129, %v1130
      %v1132 = vrot.slane %v272, 5
      %v1133 = vrot.slane %v1132, 4
      %v1134 = vrot.slane %v273, 5
      %v1135 = vsel %vm1118, %v1133, %v1134
      %v1136 = vrot.slane %v1134, 4
      %v1137 = vrot.slane %v274, 5
      %v1138 = vsel %vm1118, %v1136, %v1137
      %v1139 = vrot.slane %v1137, 4
      %v1140 = vrot.slane %v275, 5
      %v1141 = vsel %vm1118, %v1139, %v1140
      %v1142 = vrot.slane %v1140, 4
      %v1143 = vrot.slane %v276, 5
      %v1144 = vsel %vm1118, %v1142, %v1143
      %v1145 = vrot.slane %v277, 5
      %v1146 = vrot.slane %v1145, 4
      %v1147 = vrot.slane %v278, 5
      %v1148 = vsel %vm1118, %v1146, %v1147
      %v1149 = vrot.slane %v1147, 4
      %v1150 = vrot.slane %v279, 5
      %v1151 = vsel %vm1118, %v1149, %v1150
      %v1152 = vrot.slane %v1150, 4
      %v1153 = vrot.slane %v280, 5
      %v1154 = vsel %vm1118, %v1152, %v1153
      %v1155 = vrot.slane %v1153, 4
      %v1156 = vrot.slane %v281, 5
      %v1157 = vsel %vm1118, %v1155, %v1156
      %v1158 = vrot.slane %v282, 5
      %v1159 = vrot.slane %v1158, 4
      %v1160 = vrot.slane %v283, 5
      %v1161 = vsel %vm1118, %v1159, %v1160
      %v1162 = vrot.slane %v1160, 4
      %v1163 = vrot.slane %v284, 5
      %v1164 = vsel %vm1118, %v1162, %v1163
      %v1165 = vrot.slane %v1163, 4
      %v1166 = vrot.slane %v285, 5
      %v1167 = vsel %vm1118, %v1165, %v1166
      %v1168 = vrot.slane %v1166, 4
      %v1169 = vrot.slane %v286, 5
      %v1170 = vsel %vm1118, %v1168, %v1169
      %v1171 = vrot.slane %v287, 5
      %v1172 = vrot.slane %v1171, 4
      %v1173 = vrot.slane %v288, 5
      %v1174 = vsel %vm1118, %v1172, %v1173
      %v1175 = vrot.slane %v1173, 4
      %v1176 = vrot.slane %v289, 5
      %v1177 = vsel %vm1118, %v1175, %v1176
      %v1178 = vrot.slane %v1176, 4
      %v1179 = vrot.slane %v290, 5
      %v1180 = vsel %vm1118, %v1178, %v1179
      %v1181 = vrot.slane %v1179, 4
      %v1182 = vrot.slane %v291, 5
      %v1183 = vsel %vm1118, %v1181, %v1182
      %v1184 = vrot.slane %v292, 5
      %v1185 = vrot.slane %v1184, 4
      %v1186 = vrot.slane %v293, 5
      %v1187 = vsel %vm1118, %v1185, %v1186
      %v1188 = vrot.slane %v1186, 4
      %v1189 = vrot.slane %v294, 5
      %v1190 = vsel %vm1118, %v1188, %v1189
      %v1191 = vrot.slane %v1189, 4
      %v1192 = vrot.slane %v295, 5
      %v1193 = vsel %vm1118, %v1191, %v1192
      %v1194 = vrot.slane %v1192, 4
      %v1195 = vrot.slane %v296, 5
      %v1196 = vsel %vm1118, %v1194, %v1195
      %v1197 = vrot.slane %v297, 5
      %v1198 = vrot.slane %v1197, 4
      %v1199 = vrot.slane %v298, 5
      %v1200 = vsel %vm1118, %v1198, %v1199
      %v1201 = vrot.slane %v1199, 4
      %v1202 = vrot.slane %v299, 5
      %v1203 = vsel %vm1118, %v1201, %v1202
      %v1204 = vrot.slane %v1202, 4
      %v1205 = vrot.slane %v300, 5
      %v1206 = vsel %vm1118, %v1204, %v1205
      %v1207 = vrot.slane %v1205, 4
      %v1208 = vrot.slane %v301, 5
      %v1209 = vsel %vm1118, %v1207, %v1208
      %v1210 = vrot.slane %v302, 5
      %v1211 = vrot.slane %v1210, 4
      %v1212 = vrot.slane %v303, 5
      %v1213 = vsel %vm1118, %v1211, %v1212
      %v1214 = vrot.slane %v1212, 4
      %v1215 = vrot.slane %v304, 5
      %v1216 = vsel %vm1118, %v1214, %v1215
      %v1217 = vrot.slane %v1215, 4
      %v1218 = vrot.slane %v305, 5
      %v1219 = vsel %vm1118, %v1217, %v1218
      %v1220 = vrot.slane %v1218, 4
      %v1221 = vrot.slane %v306, 5
      %v1222 = vsel %vm1118, %v1220, %v1221
      %s1223 = scalar_lea.vmem %s1, 32
      %v1224 = vld [vmem:[%s1223] sm:$0xf]
      %v1225 = vld [vmem:[%s1223 + $0x4] sm:$0xf]
      %v1226 = vld [vmem:[%s1223 + $0x8] sm:$0xf]
      %v1227 = vld [vmem:[%s1223 + $0xc] sm:$0xf]
      %v1228 = vunpack.c.l.b16 %v1122
      %v1229 = vunpack.c.l.b16 %v1125
      %v1230 = vunpack.c.l.b16 %v1128
      %v1231 = vunpack.c.l.b16 %v1131
      %v1232 = vunpack.c.l.b16 %v1135
      %v1233 = vunpack.c.l.b16 %v1138
      %v1234 = vunpack.c.l.b16 %v1141
      %v1235 = vunpack.c.l.b16 %v1144
      %v1236 = vunpack.c.l.b16 %v1148
      %v1237 = vunpack.c.l.b16 %v1151
      %v1238 = vunpack.c.l.b16 %v1154
      %v1239 = vunpack.c.l.b16 %v1157
      %v1240 = vunpack.c.l.b16 %v1161
      %v1241 = vunpack.c.l.b16 %v1164
      %v1242 = vunpack.c.l.b16 %v1167
      %v1243 = vunpack.c.l.b16 %v1170
      %v1244 = vunpack.c.l.b16 %v1174
      %v1245 = vunpack.c.l.b16 %v1177
      %v1246 = vunpack.c.l.b16 %v1180
      %v1247 = vunpack.c.l.b16 %v1183
      %v1248 = vunpack.c.l.b16 %v1187
      %v1249 = vunpack.c.l.b16 %v1190
      %v1250 = vunpack.c.l.b16 %v1193
      %v1251 = vunpack.c.l.b16 %v1196
      %v1252 = vunpack.c.l.b16 %v1200
      %v1253 = vunpack.c.l.b16 %v1203
      %v1254 = vunpack.c.l.b16 %v1206
      %v1255 = vunpack.c.l.b16 %v1209
      %v1256 = vunpack.c.l.b16 %v1213
      %v1257 = vunpack.c.l.b16 %v1216
      %v1258 = vunpack.c.l.b16 %v1219
      %v1259 = vunpack.c.l.b16 %v1222
      %v1260 = vpack.c.b16 %v1229, %v1228
      %v1261 = vpack.c.b16 %v1231, %v1230
      %v1262 = vpack.c.b16 %v1233, %v1232
      %v1263 = vpack.c.b16 %v1235, %v1234
      %v1264 = vpack.c.b16 %v1237, %v1236
      %v1265 = vpack.c.b16 %v1239, %v1238
      %v1266 = vpack.c.b16 %v1241, %v1240
      %v1267 = vpack.c.b16 %v1243, %v1242
      %v1268 = vpack.c.b16 %v1245, %v1244
      %v1269 = vpack.c.b16 %v1247, %v1246
      %v1270 = vpack.c.b16 %v1249, %v1248
      %v1271 = vpack.c.b16 %v1251, %v1250
      %v1272 = vpack.c.b16 %v1253, %v1252
      %v1273 = vpack.c.b16 %v1255, %v1254
      %v1274 = vpack.c.b16 %v1257, %v1256
      %v1275 = vpack.c.b16 %v1259, %v1258
      %v1280 = vunpack.c.l.b16 %v1224
      %v1281 = vunpack.c.l.b16 %v1225
      %v1282 = vunpack.c.l.b16 %v1226
      %v1283 = vunpack.c.l.b16 %v1227
      %v1284 = vpack.c.b16 %v1281, %v1280
      %v1285 = vpack.c.b16 %v1283, %v1282
      %v1289 = vsel %vm741, %v1260, 0
      %v1292 = vsel %vm741, %v1261, 0
      %v1295 = vsel %vm741, %v1262, 0
      %v1298 = vsel %vm741, %v1263, 0
      %v1301 = vsel %vm741, %v1264, 0
      %v1304 = vsel %vm741, %v1265, 0
      %v1307 = vsel %vm741, %v1266, 0
      %v1310 = vsel %vm741, %v1267, 0
      %v1313 = vsel %vm741, %v1268, 0
      %v1316 = vsel %vm741, %v1269, 0
      %v1319 = vsel %vm741, %v1270, 0
      %v1322 = vsel %vm741, %v1271, 0
      %v1325 = vsel %vm741, %v1272, 0
      %v1328 = vsel %vm741, %v1273, 0
      %v1331 = vsel %vm741, %v1274, 0
      %v1334 = vsel %vm741, %v1275, 0
      %1336 = vmatpush.bf16.msra.mxu0 0
      %1337 = vmatpush.bf16.msra.mxu0 0
      %1338 = vmatpush.bf16.msra.mxu0 0
      %1339 = vmatpush.bf16.msra.mxu0 0
      %1340 = vmatpush.bf16.msra.mxu0 0
      %1341 = vmatpush.bf16.msra.mxu0 0
      %1342 = vmatpush.bf16.msra.mxu0 %v1285
      %1343 = vmatpush.bf16.msra.mxu0 %v1284
      %1344 = vmatmul.bf16.gmra.mxu0 %v1289
      %v1345 = vpop.f32.mrf.mxu0
      %v1346 = vadd.f32 0.0, %v1345
      %v1347 = vpop.f32.mrf.mxu0
      %v1348 = vadd.f32 0.0, %v1347
      %1349 = vmatmul.bf16.gmra.mxu0 %v1292
      %v1350 = vpop.f32.mrf.mxu0
      %v1351 = vadd.f32 0.0, %v1350
      %v1352 = vpop.f32.mrf.mxu0
      %v1353 = vadd.f32 0.0, %v1352
      %1354 = vmatmul.bf16.gmra.mxu0 %v1295
      %v1355 = vpop.f32.mrf.mxu0
      %v1356 = vadd.f32 0.0, %v1355
      %v1357 = vpop.f32.mrf.mxu0
      %v1358 = vadd.f32 0.0, %v1357
      %1359 = vmatmul.bf16.gmra.mxu0 %v1298
      %v1360 = vpop.f32.mrf.mxu0
      %v1361 = vadd.f32 0.0, %v1360
      %v1362 = vpop.f32.mrf.mxu0
      %v1363 = vadd.f32 0.0, %v1362
      %1364 = vmatmul.bf16.gmra.mxu0 %v1301
      %v1365 = vpop.f32.mrf.mxu0
      %v1366 = vadd.f32 0.0, %v1365
      %v1367 = vpop.f32.mrf.mxu0
      %v1368 = vadd.f32 0.0, %v1367
      %1369 = vmatmul.bf16.gmra.mxu0 %v1304
      %v1370 = vpop.f32.mrf.mxu0
      %v1371 = vadd.f32 0.0, %v1370
      %v1372 = vpop.f32.mrf.mxu0
      %v1373 = vadd.f32 0.0, %v1372
      %1374 = vmatmul.bf16.gmra.mxu0 %v1307
      %v1375 = vpop.f32.mrf.mxu0
      %v1376 = vadd.f32 0.0, %v1375
      %v1377 = vpop.f32.mrf.mxu0
      %v1378 = vadd.f32 0.0, %v1377
      %1379 = vmatmul.bf16.gmra.mxu0 %v1310
      %v1380 = vpop.f32.mrf.mxu0
      %v1381 = vadd.f32 0.0, %v1380
      %v1382 = vpop.f32.mrf.mxu0
      %v1383 = vadd.f32 0.0, %v1382
      %1384 = vmatmul.bf16.gmra.mxu0 %v1313
      %v1385 = vpop.f32.mrf.mxu0
      %v1386 = vadd.f32 0.0, %v1385
      %v1387 = vpop.f32.mrf.mxu0
      %v1388 = vadd.f32 0.0, %v1387
      %1389 = vmatmul.bf16.gmra.mxu0 %v1316
      %v1390 = vpop.f32.mrf.mxu0
      %v1391 = vadd.f32 0.0, %v1390
      %v1392 = vpop.f32.mrf.mxu0
      %v1393 = vadd.f32 0.0, %v1392
      %1394 = vmatmul.bf16.gmra.mxu0 %v1319
      %v1395 = vpop.f32.mrf.mxu0
      %v1396 = vadd.f32 0.0, %v1395
      %v1397 = vpop.f32.mrf.mxu0
      %v1398 = vadd.f32 0.0, %v1397
      %1399 = vmatmul.bf16.gmra.mxu0 %v1322
      %v1400 = vpop.f32.mrf.mxu0
      %v1401 = vadd.f32 0.0, %v1400
      %v1402 = vpop.f32.mrf.mxu0
      %v1403 = vadd.f32 0.0, %v1402
      %1404 = vmatmul.bf16.gmra.mxu0 %v1325
      %v1405 = vpop.f32.mrf.mxu0
      %v1406 = vadd.f32 0.0, %v1405
      %v1407 = vpop.f32.mrf.mxu0
      %v1408 = vadd.f32 0.0, %v1407
      %1409 = vmatmul.bf16.gmra.mxu0 %v1328
      %v1410 = vpop.f32.mrf.mxu0
      %v1411 = vadd.f32 0.0, %v1410
      %v1412 = vpop.f32.mrf.mxu0
      %v1413 = vadd.f32 0.0, %v1412
      %1414 = vmatmul.bf16.gmra.mxu0 %v1331
      %v1415 = vpop.f32.mrf.mxu0
      %v1416 = vadd.f32 0.0, %v1415
      %v1417 = vpop.f32.mrf.mxu0
      %v1418 = vadd.f32 0.0, %v1417
      %1419 = vmatmul.bf16.gmra.mxu0 %v1334
      %v1420 = vpop.f32.mrf.mxu0
      %v1421 = vadd.f32 0.0, %v1420
      %v1422 = vpop.f32.mrf.mxu0
      %v1423 = vadd.f32 0.0, %v1422
      %1424 = vdwg.mxu0
      %v1425 = vadd.f32 %v1029, %v1346
      %v1426 = vadd.f32 %v1031, %v1348
      %v1427 = vadd.f32 %v1034, %v1351
      %v1428 = vadd.f32 %v1036, %v1353
      %v1429 = vadd.f32 %v1039, %v1356
      %v1430 = vadd.f32 %v1041, %v1358
      %v1431 = vadd.f32 %v1044, %v1361
      %v1432 = vadd.f32 %v1046, %v1363
      %v1433 = vadd.f32 %v1049, %v1366
      %v1434 = vadd.f32 %v1051, %v1368
      %v1435 = vadd.f32 %v1054, %v1371
      %v1436 = vadd.f32 %v1056, %v1373
      %v1437 = vadd.f32 %v1059, %v1376
      %v1438 = vadd.f32 %v1061, %v1378
      %v1439 = vadd.f32 %v1064, %v1381
      %v1440 = vadd.f32 %v1066, %v1383
      %v1441 = vadd.f32 %v1069, %v1386
      %v1442 = vadd.f32 %v1071, %v1388
      %v1443 = vadd.f32 %v1074, %v1391
      %v1444 = vadd.f32 %v1076, %v1393
      %v1445 = vadd.f32 %v1079, %v1396
      %v1446 = vadd.f32 %v1081, %v1398
      %v1447 = vadd.f32 %v1084, %v1401
      %v1448 = vadd.f32 %v1086, %v1403
      %v1449 = vadd.f32 %v1089, %v1406
      %v1450 = vadd.f32 %v1091, %v1408
      %v1451 = vadd.f32 %v1094, %v1411
      %v1452 = vadd.f32 %v1096, %v1413
      %v1453 = vadd.f32 %v1099, %v1416
      %v1454 = vadd.f32 %v1101, %v1418
      %v1455 = vadd.f32 %v1104, %v1421
      %v1456 = vadd.f32 %v1106, %v1423
      %s1457 = scalar_lea.vmem %s1, 48
      %v1458 = vld [vmem:[%s1457] sm:$0xf]
      %v1459 = vld [vmem:[%s1457 + $0x4] sm:$0xf]
      %v1460 = vld [vmem:[%s1457 + $0x8] sm:$0xf]
      %v1461 = vld [vmem:[%s1457 + $0xc] sm:$0xf]
      %v1466 = vunpack.c.l.b16 %v307
      %v1467 = vunpack.c.l.b16 %v308
      %v1468 = vunpack.c.l.b16 %v309
      %v1469 = vunpack.c.l.b16 %v310
      %v1470 = vpack.c.b16 %v1467, %v1466
      %v1471 = vpack.c.b16 %v1469, %v1468
      %v1476 = vunpack.c.l.b16 %v1458
      %v1477 = vunpack.c.l.b16 %v1459
      %v1478 = vunpack.c.l.b16 %v1460
      %v1479 = vunpack.c.l.b16 %v1461
      %v1480 = vpack.c.b16 %v1477, %v1476
      %v1481 = vpack.c.b16 %v1479, %v1478
      %v1485 = vsel %vm741, %v1470, 0
      %v1488 = vsel %vm741, %v1471, 0
      %1490 = vmatpush.bf16.msra.mxu0 0
      %1491 = vmatpush.bf16.msra.mxu0 0
      %1492 = vmatpush.bf16.msra.mxu0 0
      %1493 = vmatpush.bf16.msra.mxu0 0
      %1494 = vmatpush.bf16.msra.mxu0 0
      %1495 = vmatpush.bf16.msra.mxu0 0
      %1496 = vmatpush.bf16.msra.mxu0 %v1481
      %1497 = vmatpush.bf16.msra.mxu0 %v1480
      %1498 = vmatmul.bf16.gmra.mxu0 %v978
      %v1499 = vpop.f32.mrf.mxu0
      %v1500 = vadd.f32 0.0, %v1499
      %v1501 = vpop.f32.mrf.mxu0
      %v1502 = vadd.f32 0.0, %v1501
      %1503 = vmatmul.bf16.gmra.mxu0 %v981
      %v1504 = vpop.f32.mrf.mxu0
      %v1505 = vadd.f32 0.0, %v1504
      %v1506 = vpop.f32.mrf.mxu0
      %v1507 = vadd.f32 0.0, %v1506
      %1508 = vmatmul.bf16.gmra.mxu0 %v984
      %v1509 = vpop.f32.mrf.mxu0
      %v1510 = vadd.f32 0.0, %v1509
      %v1511 = vpop.f32.mrf.mxu0
      %v1512 = vadd.f32 0.0, %v1511
      %1513 = vmatmul.bf16.gmra.mxu0 %v987
      %v1514 = vpop.f32.mrf.mxu0
      %v1515 = vadd.f32 0.0, %v1514
      %v1516 = vpop.f32.mrf.mxu0
      %v1517 = vadd.f32 0.0, %v1516
      %1518 = vmatmul.bf16.gmra.mxu0 %v990
      %v1519 = vpop.f32.mrf.mxu0
      %v1520 = vadd.f32 0.0, %v1519
      %v1521 = vpop.f32.mrf.mxu0
      %v1522 = vadd.f32 0.0, %v1521
      %1523 = vmatmul.bf16.gmra.mxu0 %v993
      %v1524 = vpop.f32.mrf.mxu0
      %v1525 = vadd.f32 0.0, %v1524
      %v1526 = vpop.f32.mrf.mxu0
      %v1527 = vadd.f32 0.0, %v1526
      %1528 = vmatmul.bf16.gmra.mxu0 %v996
      %v1529 = vpop.f32.mrf.mxu0
      %v1530 = vadd.f32 0.0, %v1529
      %v1531 = vpop.f32.mrf.mxu0
      %v1532 = vadd.f32 0.0, %v1531
      %1533 = vmatmul.bf16.gmra.mxu0 %v999
      %v1534 = vpop.f32.mrf.mxu0
      %v1535 = vadd.f32 0.0, %v1534
      %v1536 = vpop.f32.mrf.mxu0
      %v1537 = vadd.f32 0.0, %v1536
      %1538 = vmatmul.bf16.gmra.mxu0 %v1002
      %v1539 = vpop.f32.mrf.mxu0
      %v1540 = vadd.f32 0.0, %v1539
      %v1541 = vpop.f32.mrf.mxu0
      %v1542 = vadd.f32 0.0, %v1541
      %1543 = vmatmul.bf16.gmra.mxu0 %v1005
      %v1544 = vpop.f32.mrf.mxu0
      %v1545 = vadd.f32 0.0, %v1544
      %v1546 = vpop.f32.mrf.mxu0
      %v1547 = vadd.f32 0.0, %v1546
      %1548 = vmatmul.bf16.gmra.mxu0 %v1008
      %v1549 = vpop.f32.mrf.mxu0
      %v1550 = vadd.f32 0.0, %v1549
      %v1551 = vpop.f32.mrf.mxu0
      %v1552 = vadd.f32 0.0, %v1551
      %1553 = vmatmul.bf16.gmra.mxu0 %v1011
      %v1554 = vpop.f32.mrf.mxu0
      %v1555 = vadd.f32 0.0, %v1554
      %v1556 = vpop.f32.mrf.mxu0
      %v1557 = vadd.f32 0.0, %v1556
      %1558 = vmatmul.bf16.gmra.mxu0 %v1014
      %v1559 = vpop.f32.mrf.mxu0
      %v1560 = vadd.f32 0.0, %v1559
      %v1561 = vpop.f32.mrf.mxu0
      %v1562 = vadd.f32 0.0, %v1561
      %1563 = vmatmul.bf16.gmra.mxu0 %v1017
      %v1564 = vpop.f32.mrf.mxu0
      %v1565 = vadd.f32 0.0, %v1564
      %v1566 = vpop.f32.mrf.mxu0
      %v1567 = vadd.f32 0.0, %v1566
      %1568 = vmatmul.bf16.gmra.mxu0 %v1485
      %v1569 = vpop.f32.mrf.mxu0
      %v1570 = vadd.f32 0.0, %v1569
      %v1571 = vpop.f32.mrf.mxu0
      %v1572 = vadd.f32 0.0, %v1571
      %1573 = vmatmul.bf16.gmra.mxu0 %v1488
      %v1574 = vpop.f32.mrf.mxu0
      %v1575 = vadd.f32 0.0, %v1574
      %v1576 = vpop.f32.mrf.mxu0
      %v1577 = vadd.f32 0.0, %v1576
      %1578 = vdwg.mxu0
      %v1579 = vadd.f32 %v1425, %v1500
      %v1580 = vadd.f32 %v1426, %v1502
      %v1581 = vadd.f32 %v1427, %v1505
      %v1582 = vadd.f32 %v1428, %v1507
      %v1583 = vadd.f32 %v1429, %v1510
      %v1584 = vadd.f32 %v1430, %v1512
      %v1585 = vadd.f32 %v1431, %v1515
      %v1586 = vadd.f32 %v1432, %v1517
      %v1587 = vadd.f32 %v1433, %v1520
      %v1588 = vadd.f32 %v1434, %v1522
      %v1589 = vadd.f32 %v1435, %v1525
      %v1590 = vadd.f32 %v1436, %v1527
      %v1591 = vadd.f32 %v1437, %v1530
      %v1592 = vadd.f32 %v1438, %v1532
      %v1593 = vadd.f32 %v1439, %v1535
      %v1594 = vadd.f32 %v1440, %v1537
      %v1595 = vadd.f32 %v1441, %v1540
      %v1596 = vadd.f32 %v1442, %v1542
      %v1597 = vadd.f32 %v1443, %v1545
      %v1598 = vadd.f32 %v1444, %v1547
      %v1599 = vadd.f32 %v1445, %v1550
      %v1600 = vadd.f32 %v1446, %v1552
      %v1601 = vadd.f32 %v1447, %v1555
      %v1602 = vadd.f32 %v1448, %v1557
      %v1603 = vadd.f32 %v1449, %v1560
      %v1604 = vadd.f32 %v1450, %v1562
      %v1605 = vadd.f32 %v1451, %v1565
      %v1606 = vadd.f32 %v1452, %v1567
      %v1607 = vadd.f32 %v1453, %v1570
      %v1608 = vadd.f32 %v1454, %v1572
      %v1609 = vadd.f32 %v1455, %v1575
      %v1610 = vadd.f32 %v1456, %v1577
      %v1612 = vshrl.u32 %v307, 16
      %v1614 = vrot.slane %v1612, 4
      %v1615 = vshll.u32 %v307, 16
      %v1617 = vrot.slane %v1615, 5
      %v1618 = vor.u32 %v1614, %v1617
      %v1619 = vrot.slane %v1618, 4
      %v1621 = vshll.u32 %v308, 16
      %v1623 = vrot.slane %v1621, 5
      %v1624 = vsel %vm323, %v1619, %v1623
      %v1625 = vshrl.u32 %v308, 16
      %v1627 = vrot.slane %v1625, 4
      %v1628 = vor.u32 %v1627, %v1623
      %v1629 = vrot.slane %v1628, 4
      %v1631 = vshll.u32 %v309, 16
      %v1633 = vrot.slane %v1631, 5
      %v1634 = vsel %vm323, %v1629, %v1633
      %v1635 = vshrl.u32 %v309, 16
      %v1637 = vrot.slane %v1635, 4
      %v1638 = vor.u32 %v1637, %v1633
      %v1639 = vrot.slane %v1638, 4
      %v1641 = vshll.u32 %v310, 16
      %v1643 = vrot.slane %v1641, 5
      %v1644 = vsel %vm323, %v1639, %v1643
      %v1645 = vshrl.u32 %v310, 16
      %v1647 = vrot.slane %v1645, 4
      %v1648 = vor.u32 %v1647, %v1643
      %v1649 = vrot.slane %v1648, 4
      %v1651 = vshll.u32 %v311, 16
      %v1653 = vrot.slane %v1651, 5
      %v1654 = vsel %vm323, %v1649, %v1653
      %s1655 = scalar_lea.vmem %s1, 64
      %v1656 = vld [vmem:[%s1655] sm:$0xf]
      %v1657 = vld [vmem:[%s1655 + $0x4] sm:$0xf]
      %v1658 = vld [vmem:[%s1655 + $0x8] sm:$0xf]
      %v1659 = vld [vmem:[%s1655 + $0xc] sm:$0xf]
      %v1660 = vunpack.c.l.b16 %v1624
      %v1661 = vunpack.c.l.b16 %v1634
      %v1662 = vunpack.c.l.b16 %v1644
      %v1663 = vunpack.c.l.b16 %v1654
      %v1664 = vpack.c.b16 %v1661, %v1660
      %v1665 = vpack.c.b16 %v1663, %v1662
      %v1670 = vunpack.c.l.b16 %v1656
      %v1671 = vunpack.c.l.b16 %v1657
      %v1672 = vunpack.c.l.b16 %v1658
      %v1673 = vunpack.c.l.b16 %v1659
      %v1674 = vpack.c.b16 %v1671, %v1670
      %v1675 = vpack.c.b16 %v1673, %v1672
      %v1679 = vsel %vm741, %v1664, 0
      %v1682 = vsel %vm741, %v1665, 0
      %1684 = vmatpush.bf16.msra.mxu0 0
      %1685 = vmatpush.bf16.msra.mxu0 0
      %1686 = vmatpush.bf16.msra.mxu0 0
      %1687 = vmatpush.bf16.msra.mxu0 0
      %1688 = vmatpush.bf16.msra.mxu0 0
      %1689 = vmatpush.bf16.msra.mxu0 0
      %1690 = vmatpush.bf16.msra.mxu0 %v1675
      %1691 = vmatpush.bf16.msra.mxu0 %v1674
      %1692 = vmatmul.bf16.gmra.mxu0 %v749
      %v1693 = vpop.f32.mrf.mxu0
      %v1694 = vadd.f32 0.0, %v1693
      %v1695 = vpop.f32.mrf.mxu0
      %v1696 = vadd.f32 0.0, %v1695
      %1697 = vmatmul.bf16.gmra.mxu0 %v752
      %v1698 = vpop.f32.mrf.mxu0
      %v1699 = vadd.f32 0.0, %v1698
      %v1700 = vpop.f32.mrf.mxu0
      %v1701 = vadd.f32 0.0, %v1700
      %1702 = vmatmul.bf16.gmra.mxu0 %v755
      %v1703 = vpop.f32.mrf.mxu0
      %v1704 = vadd.f32 0.0, %v1703
      %v1705 = vpop.f32.mrf.mxu0
      %v1706 = vadd.f32 0.0, %v1705
      %1707 = vmatmul.bf16.gmra.mxu0 %v758
      %v1708 = vpop.f32.mrf.mxu0
      %v1709 = vadd.f32 0.0, %v1708
      %v1710 = vpop.f32.mrf.mxu0
      %v1711 = vadd.f32 0.0, %v1710
      %1712 = vmatmul.bf16.gmra.mxu0 %v761
      %v1713 = vpop.f32.mrf.mxu0
      %v1714 = vadd.f32 0.0, %v1713
      %v1715 = vpop.f32.mrf.mxu0
      %v1716 = vadd.f32 0.0, %v1715
      %1717 = vmatmul.bf16.gmra.mxu0 %v764
      %v1718 = vpop.f32.mrf.mxu0
      %v1719 = vadd.f32 0.0, %v1718
      %v1720 = vpop.f32.mrf.mxu0
      %v1721 = vadd.f32 0.0, %v1720
      %1722 = vmatmul.bf16.gmra.mxu0 %v767
      %v1723 = vpop.f32.mrf.mxu0
      %v1724 = vadd.f32 0.0, %v1723
      %v1725 = vpop.f32.mrf.mxu0
      %v1726 = vadd.f32 0.0, %v1725
      %1727 = vmatmul.bf16.gmra.mxu0 %v770
      %v1728 = vpop.f32.mrf.mxu0
      %v1729 = vadd.f32 0.0, %v1728
      %v1730 = vpop.f32.mrf.mxu0
      %v1731 = vadd.f32 0.0, %v1730
      %1732 = vmatmul.bf16.gmra.mxu0 %v773
      %v1733 = vpop.f32.mrf.mxu0
      %v1734 = vadd.f32 0.0, %v1733
      %v1735 = vpop.f32.mrf.mxu0
      %v1736 = vadd.f32 0.0, %v1735
      %1737 = vmatmul.bf16.gmra.mxu0 %v776
      %v1738 = vpop.f32.mrf.mxu0
      %v1739 = vadd.f32 0.0, %v1738
      %v1740 = vpop.f32.mrf.mxu0
      %v1741 = vadd.f32 0.0, %v1740
      %1742 = vmatmul.bf16.gmra.mxu0 %v779
      %v1743 = vpop.f32.mrf.mxu0
      %v1744 = vadd.f32 0.0, %v1743
      %v1745 = vpop.f32.mrf.mxu0
      %v1746 = vadd.f32 0.0, %v1745
      %1747 = vmatmul.bf16.gmra.mxu0 %v782
      %v1748 = vpop.f32.mrf.mxu0
      %v1749 = vadd.f32 0.0, %v1748
      %v1750 = vpop.f32.mrf.mxu0
      %v1751 = vadd.f32 0.0, %v1750
      %1752 = vmatmul.bf16.gmra.mxu0 %v785
      %v1753 = vpop.f32.mrf.mxu0
      %v1754 = vadd.f32 0.0, %v1753
      %v1755 = vpop.f32.mrf.mxu0
      %v1756 = vadd.f32 0.0, %v1755
      %1757 = vmatmul.bf16.gmra.mxu0 %v788
      %v1758 = vpop.f32.mrf.mxu0
      %v1759 = vadd.f32 0.0, %v1758
      %v1760 = vpop.f32.mrf.mxu0
      %v1761 = vadd.f32 0.0, %v1760
      %1762 = vmatmul.bf16.gmra.mxu0 %v1679
      %v1763 = vpop.f32.mrf.mxu0
      %v1764 = vadd.f32 0.0, %v1763
      %v1765 = vpop.f32.mrf.mxu0
      %v1766 = vadd.f32 0.0, %v1765
      %1767 = vmatmul.bf16.gmra.mxu0 %v1682
      %v1768 = vpop.f32.mrf.mxu0
      %v1769 = vadd.f32 0.0, %v1768
      %v1770 = vpop.f32.mrf.mxu0
      %v1771 = vadd.f32 0.0, %v1770
      %1772 = vdwg.mxu0
      %v1773 = vadd.f32 %v1579, %v1694
      %v1774 = vadd.f32 %v1580, %v1696
      %v1775 = vadd.f32 %v1581, %v1699
      %v1776 = vadd.f32 %v1582, %v1701
      %v1777 = vadd.f32 %v1583, %v1704
      %v1778 = vadd.f32 %v1584, %v1706
      %v1779 = vadd.f32 %v1585, %v1709
      %v1780 = vadd.f32 %v1586, %v1711
      %v1781 = vadd.f32 %v1587, %v1714
      %v1782 = vadd.f32 %v1588, %v1716
      %v1783 = vadd.f32 %v1589, %v1719
      %v1784 = vadd.f32 %v1590, %v1721
      %v1785 = vadd.f32 %v1591, %v1724
      %v1786 = vadd.f32 %v1592, %v1726
      %v1787 = vadd.f32 %v1593, %v1729
      %v1788 = vadd.f32 %v1594, %v1731
      %v1789 = vadd.f32 %v1595, %v1734
      %v1790 = vadd.f32 %v1596, %v1736
      %v1791 = vadd.f32 %v1597, %v1739
      %v1792 = vadd.f32 %v1598, %v1741
      %v1793 = vadd.f32 %v1599, %v1744
      %v1794 = vadd.f32 %v1600, %v1746
      %v1795 = vadd.f32 %v1601, %v1749
      %v1796 = vadd.f32 %v1602, %v1751
      %v1797 = vadd.f32 %v1603, %v1754
      %v1798 = vadd.f32 %v1604, %v1756
      %v1799 = vadd.f32 %v1605, %v1759
      %v1800 = vadd.f32 %v1606, %v1761
      %v1801 = vadd.f32 %v1607, %v1764
      %v1802 = vadd.f32 %v1608, %v1766
      %v1803 = vadd.f32 %v1609, %v1769
      %v1804 = vadd.f32 %v1610, %v1771
      %v1806 = vrot.slane %v307, 5
      %v1807 = vrot.slane %v1806, 4
      %v1808 = vrot.slane %v308, 5
      %v1809 = vsel %vm1118, %v1807, %v1808
      %v1810 = vrot.slane %v1808, 4
      %v1811 = vrot.slane %v309, 5
      %v1812 = vsel %vm1118, %v1810, %v1811
      %v1813 = vrot.slane %v1811, 4
      %v1814 = vrot.slane %v310, 5
      %v1815 = vsel %vm1118, %v1813, %v1814
      %v1816 = vrot.slane %v1814, 4
      %v1817 = vrot.slane %v311, 5
      %v1818 = vsel %vm1118, %v1816, %v1817
      %s1819 = scalar_lea.vmem %s1, 80
      %v1820 = vld [vmem:[%s1819] sm:$0xf]
      %v1821 = vld [vmem:[%s1819 + $0x4] sm:$0xf]
      %v1822 = vld [vmem:[%s1819 + $0x8] sm:$0xf]
      %v1823 = vld [vmem:[%s1819 + $0xc] sm:$0xf]
      %v1824 = vunpack.c.l.b16 %v1809
      %v1825 = vunpack.c.l.b16 %v1812
      %v1826 = vunpack.c.l.b16 %v1815
      %v1827 = vunpack.c.l.b16 %v1818
      %v1828 = vpack.c.b16 %v1825, %v1824
      %v1829 = vpack.c.b16 %v1827, %v1826
      %v1834 = vunpack.c.l.b16 %v1820
      %v1835 = vunpack.c.l.b16 %v1821
      %v1836 = vunpack.c.l.b16 %v1822
      %v1837 = vunpack.c.l.b16 %v1823
      %v1838 = vpack.c.b16 %v1835, %v1834
      %v1839 = vpack.c.b16 %v1837, %v1836
      %v1843 = vsel %vm741, %v1828, 0
      %v1846 = vsel %vm741, %v1829, 0
      %1848 = vmatpush.bf16.msra.mxu0 0
      %1849 = vmatpush.bf16.msra.mxu0 0
      %1850 = vmatpush.bf16.msra.mxu0 0
      %1851 = vmatpush.bf16.msra.mxu0 0
      %1852 = vmatpush.bf16.msra.mxu0 0
      %1853 = vmatpush.bf16.msra.mxu0 0
      %1854 = vmatpush.bf16.msra.mxu0 %v1839
      %1855 = vmatpush.bf16.msra.mxu0 %v1838
      %1856 = vmatmul.bf16.gmra.mxu0 %v1295
      %v1857 = vpop.f32.mrf.mxu0
      %v1858 = vadd.f32 0.0, %v1857
      %v1859 = vpop.f32.mrf.mxu0
      %v1860 = vadd.f32 0.0, %v1859
      %1861 = vmatmul.bf16.gmra.mxu0 %v1298
      %v1862 = vpop.f32.mrf.mxu0
      %v1863 = vadd.f32 0.0, %v1862
      %v1864 = vpop.f32.mrf.mxu0
      %v1865 = vadd.f32 0.0, %v1864
      %1866 = vmatmul.bf16.gmra.mxu0 %v1301
      %v1867 = vpop.f32.mrf.mxu0
      %v1868 = vadd.f32 0.0, %v1867
      %v1869 = vpop.f32.mrf.mxu0
      %v1870 = vadd.f32 0.0, %v1869
      %1871 = vmatmul.bf16.gmra.mxu0 %v1304
      %v1872 = vpop.f32.mrf.mxu0
      %v1873 = vadd.f32 0.0, %v1872
      %v1874 = vpop.f32.mrf.mxu0
      %v1875 = vadd.f32 0.0, %v1874
      %1876 = vmatmul.bf16.gmra.mxu0 %v1307
      %v1877 = vpop.f32.mrf.mxu0
      %v1878 = vadd.f32 0.0, %v1877
      %v1879 = vpop.f32.mrf.mxu0
      %v1880 = vadd.f32 0.0, %v1879
      %1881 = vmatmul.bf16.gmra.mxu0 %v1310
      %v1882 = vpop.f32.mrf.mxu0
      %v1883 = vadd.f32 0.0, %v1882
      %v1884 = vpop.f32.mrf.mxu0
      %v1885 = vadd.f32 0.0, %v1884
      %1886 = vmatmul.bf16.gmra.mxu0 %v1313
      %v1887 = vpop.f32.mrf.mxu0
      %v1888 = vadd.f32 0.0, %v1887
      %v1889 = vpop.f32.mrf.mxu0
      %v1890 = vadd.f32 0.0, %v1889
      %1891 = vmatmul.bf16.gmra.mxu0 %v1316
      %v1892 = vpop.f32.mrf.mxu0
      %v1893 = vadd.f32 0.0, %v1892
      %v1894 = vpop.f32.mrf.mxu0
      %v1895 = vadd.f32 0.0, %v1894
      %1896 = vmatmul.bf16.gmra.mxu0 %v1319
      %v1897 = vpop.f32.mrf.mxu0
      %v1898 = vadd.f32 0.0, %v1897
      %v1899 = vpop.f32.mrf.mxu0
      %v1900 = vadd.f32 0.0, %v1899
      %1901 = vmatmul.bf16.gmra.mxu0 %v1322
      %v1902 = vpop.f32.mrf.mxu0
      %v1903 = vadd.f32 0.0, %v1902
      %v1904 = vpop.f32.mrf.mxu0
      %v1905 = vadd.f32 0.0, %v1904
      %1906 = vmatmul.bf16.gmra.mxu0 %v1325
      %v1907 = vpop.f32.mrf.mxu0
      %v1908 = vadd.f32 0.0, %v1907
      %v1909 = vpop.f32.mrf.mxu0
      %v1910 = vadd.f32 0.0, %v1909
      %1911 = vmatmul.bf16.gmra.mxu0 %v1328
      %v1912 = vpop.f32.mrf.mxu0
      %v1913 = vadd.f32 0.0, %v1912
      %v1914 = vpop.f32.mrf.mxu0
      %v1915 = vadd.f32 0.0, %v1914
      %1916 = vmatmul.bf16.gmra.mxu0 %v1331
      %v1917 = vpop.f32.mrf.mxu0
      %v1918 = vadd.f32 0.0, %v1917
      %v1919 = vpop.f32.mrf.mxu0
      %v1920 = vadd.f32 0.0, %v1919
      %1921 = vmatmul.bf16.gmra.mxu0 %v1334
      %v1922 = vpop.f32.mrf.mxu0
      %v1923 = vadd.f32 0.0, %v1922
      %v1924 = vpop.f32.mrf.mxu0
      %v1925 = vadd.f32 0.0, %v1924
      %1926 = vmatmul.bf16.gmra.mxu0 %v1843
      %v1927 = vpop.f32.mrf.mxu0
      %v1928 = vadd.f32 0.0, %v1927
      %v1929 = vpop.f32.mrf.mxu0
      %v1930 = vadd.f32 0.0, %v1929
      %1931 = vmatmul.bf16.gmra.mxu0 %v1846
      %v1932 = vpop.f32.mrf.mxu0
      %v1933 = vadd.f32 0.0, %v1932
      %v1934 = vpop.f32.mrf.mxu0
      %v1935 = vadd.f32 0.0, %v1934
      %1936 = vdwg.mxu0
      %v1937 = vadd.f32 %v1773, %v1858
      %v1938 = vadd.f32 %v1774, %v1860
      %v1939 = vadd.f32 %v1775, %v1863
      %v1940 = vadd.f32 %v1776, %v1865
      %v1941 = vadd.f32 %v1777, %v1868
      %v1942 = vadd.f32 %v1778, %v1870
      %v1943 = vadd.f32 %v1779, %v1873
      %v1944 = vadd.f32 %v1780, %v1875
      %v1945 = vadd.f32 %v1781, %v1878
      %v1946 = vadd.f32 %v1782, %v1880
      %v1947 = vadd.f32 %v1783, %v1883
      %v1948 = vadd.f32 %v1784, %v1885
      %v1949 = vadd.f32 %v1785, %v1888
      %v1950 = vadd.f32 %v1786, %v1890
      %v1951 = vadd.f32 %v1787, %v1893
      %v1952 = vadd.f32 %v1788, %v1895
      %v1953 = vadd.f32 %v1789, %v1898
      %v1954 = vadd.f32 %v1790, %v1900
      %v1955 = vadd.f32 %v1791, %v1903
      %v1956 = vadd.f32 %v1792, %v1905
      %v1957 = vadd.f32 %v1793, %v1908
      %v1958 = vadd.f32 %v1794, %v1910
      %v1959 = vadd.f32 %v1795, %v1913
      %v1960 = vadd.f32 %v1796, %v1915
      %v1961 = vadd.f32 %v1797, %v1918
      %v1962 = vadd.f32 %v1798, %v1920
      %v1963 = vadd.f32 %v1799, %v1923
      %v1964 = vadd.f32 %v1800, %v1925
      %v1965 = vadd.f32 %v1801, %v1928
      %v1966 = vadd.f32 %v1802, %v1930
      %v1967 = vadd.f32 %v1803, %v1933
      %v1968 = vadd.f32 %v1804, %v1935
      %s1969 = scalar_lea.vmem %s1, 96
      %v1970 = vld [vmem:[%s1969] sm:$0xf]
      %v1971 = vld [vmem:[%s1969 + $0x4] sm:$0xf]
      %v1972 = vld [vmem:[%s1969 + $0x8] sm:$0xf]
      %v1973 = vld [vmem:[%s1969 + $0xc] sm:$0xf]
      %v1978 = vunpack.c.l.b16 %v312
      %v1979 = vunpack.c.l.b16 %v313
      %v1980 = vunpack.c.l.b16 %v314
      %v1981 = vunpack.c.l.b16 %v315
      %v1982 = vpack.c.b16 %v1979, %v1978
      %v1983 = vpack.c.b16 %v1981, %v1980
      %v1988 = vunpack.c.l.b16 %v1970
      %v1989 = vunpack.c.l.b16 %v1971
      %v1990 = vunpack.c.l.b16 %v1972
      %v1991 = vunpack.c.l.b16 %v1973
      %v1992 = vpack.c.b16 %v1989, %v1988
      %v1993 = vpack.c.b16 %v1991, %v1990
      %v1997 = vsel %vm741, %v1982, 0
      %v2000 = vsel %vm741, %v1983, 0
      %2002 = vmatpush.bf16.msra.mxu0 0
      %2003 = vmatpush.bf16.msra.mxu0 0
      %2004 = vmatpush.bf16.msra.mxu0 0
      %2005 = vmatpush.bf16.msra.mxu0 0
      %2006 = vmatpush.bf16.msra.mxu0 0
      %2007 = vmatpush.bf16.msra.mxu0 0
      %2008 = vmatpush.bf16.msra.mxu0 %v1993
      %2009 = vmatpush.bf16.msra.mxu0 %v1992
      %2010 = vmatmul.bf16.gmra.mxu0 %v984
      %v2011 = vpop.f32.mrf.mxu0
      %v2012 = vadd.f32 0.0, %v2011
      %v2013 = vpop.f32.mrf.mxu0
      %v2014 = vadd.f32 0.0, %v2013
      %2015 = vmatmul.bf16.gmra.mxu0 %v987
      %v2016 = vpop.f32.mrf.mxu0
      %v2017 = vadd.f32 0.0, %v2016
      %v2018 = vpop.f32.mrf.mxu0
      %v2019 = vadd.f32 0.0, %v2018
      %2020 = vmatmul.bf16.gmra.mxu0 %v990
      %v2021 = vpop.f32.mrf.mxu0
      %v2022 = vadd.f32 0.0, %v2021
      %v2023 = vpop.f32.mrf.mxu0
      %v2024 = vadd.f32 0.0, %v2023
      %2025 = vmatmul.bf16.gmra.mxu0 %v993
      %v2026 = vpop.f32.mrf.mxu0
      %v2027 = vadd.f32 0.0, %v2026
      %v2028 = vpop.f32.mrf.mxu0
      %v2029 = vadd.f32 0.0, %v2028
      %2030 = vmatmul.bf16.gmra.mxu0 %v996
      %v2031 = vpop.f32.mrf.mxu0
      %v2032 = vadd.f32 0.0, %v2031
      %v2033 = vpop.f32.mrf.mxu0
      %v2034 = vadd.f32 0.0, %v2033
      %2035 = vmatmul.bf16.gmra.mxu0 %v999
      %v2036 = vpop.f32.mrf.mxu0
      %v2037 = vadd.f32 0.0, %v2036
      %v2038 = vpop.f32.mrf.mxu0
      %v2039 = vadd.f32 0.0, %v2038
      %2040 = vmatmul.bf16.gmra.mxu0 %v1002
      %v2041 = vpop.f32.mrf.mxu0
      %v2042 = vadd.f32 0.0, %v2041
      %v2043 = vpop.f32.mrf.mxu0
      %v2044 = vadd.f32 0.0, %v2043
      %2045 = vmatmul.bf16.gmra.mxu0 %v1005
      %v2046 = vpop.f32.mrf.mxu0
      %v2047 = vadd.f32 0.0, %v2046
      %v2048 = vpop.f32.mrf.mxu0
      %v2049 = vadd.f32 0.0, %v2048
      %2050 = vmatmul.bf16.gmra.mxu0 %v1008
      %v2051 = vpop.f32.mrf.mxu0
      %v2052 = vadd.f32 0.0, %v2051
      %v2053 = vpop.f32.mrf.mxu0
      %v2054 = vadd.f32 0.0, %v2053
      %2055 = vmatmul.bf16.gmra.mxu0 %v1011
      %v2056 = vpop.f32.mrf.mxu0
      %v2057 = vadd.f32 0.0, %v2056
      %v2058 = vpop.f32.mrf.mxu0
      %v2059 = vadd.f32 0.0, %v2058
      %2060 = vmatmul.bf16.gmra.mxu0 %v1014
      %v2061 = vpop.f32.mrf.mxu0
      %v2062 = vadd.f32 0.0, %v2061
      %v2063 = vpop.f32.mrf.mxu0
      %v2064 = vadd.f32 0.0, %v2063
      %2065 = vmatmul.bf16.gmra.mxu0 %v1017
      %v2066 = vpop.f32.mrf.mxu0
      %v2067 = vadd.f32 0.0, %v2066
      %v2068 = vpop.f32.mrf.mxu0
      %v2069 = vadd.f32 0.0, %v2068
      %2070 = vmatmul.bf16.gmra.mxu0 %v1485
      %v2071 = vpop.f32.mrf.mxu0
      %v2072 = vadd.f32 0.0, %v2071
      %v2073 = vpop.f32.mrf.mxu0
      %v2074 = vadd.f32 0.0, %v2073
      %2075 = vmatmul.bf16.gmra.mxu0 %v1488
      %v2076 = vpop.f32.mrf.mxu0
      %v2077 = vadd.f32 0.0, %v2076
      %v2078 = vpop.f32.mrf.mxu0
      %v2079 = vadd.f32 0.0, %v2078
      %2080 = vmatmul.bf16.gmra.mxu0 %v1997
      %v2081 = vpop.f32.mrf.mxu0
      %v2082 = vadd.f32 0.0, %v2081
      %v2083 = vpop.f32.mrf.mxu0
      %v2084 = vadd.f32 0.0, %v2083
      %2085 = vmatmul.bf16.gmra.mxu0 %v2000
      %v2086 = vpop.f32.mrf.mxu0
      %v2087 = vadd.f32 0.0, %v2086
      %v2088 = vpop.f32.mrf.mxu0
      %v2089 = vadd.f32 0.0, %v2088
      %2090 = vdwg.mxu0
      %v2091 = vadd.f32 %v1937, %v2012
      %v2092 = vadd.f32 %v1938, %v2014
      %v2093 = vadd.f32 %v1939, %v2017
      %v2094 = vadd.f32 %v1940, %v2019
      %v2095 = vadd.f32 %v1941, %v2022
      %v2096 = vadd.f32 %v1942, %v2024
      %v2097 = vadd.f32 %v1943, %v2027
      %v2098 = vadd.f32 %v1944, %v2029
      %v2099 = vadd.f32 %v1945, %v2032
      %v2100 = vadd.f32 %v1946, %v2034
      %v2101 = vadd.f32 %v1947, %v2037
      %v2102 = vadd.f32 %v1948, %v2039
      %v2103 = vadd.f32 %v1949, %v2042
      %v2104 = vadd.f32 %v1950, %v2044
      %v2105 = vadd.f32 %v1951, %v2047
      %v2106 = vadd.f32 %v1952, %v2049
      %v2107 = vadd.f32 %v1953, %v2052
      %v2108 = vadd.f32 %v1954, %v2054
      %v2109 = vadd.f32 %v1955, %v2057
      %v2110 = vadd.f32 %v1956, %v2059
      %v2111 = vadd.f32 %v1957, %v2062
      %v2112 = vadd.f32 %v1958, %v2064
      %v2113 = vadd.f32 %v1959, %v2067
      %v2114 = vadd.f32 %v1960, %v2069
      %v2115 = vadd.f32 %v1961, %v2072
      %v2116 = vadd.f32 %v1962, %v2074
      %v2117 = vadd.f32 %v1963, %v2077
      %v2118 = vadd.f32 %v1964, %v2079
      %v2119 = vadd.f32 %v1965, %v2082
      %v2120 = vadd.f32 %v1966, %v2084
      %v2121 = vadd.f32 %v1967, %v2087
      %v2122 = vadd.f32 %v1968, %v2089
      %v2124 = vshrl.u32 %v312, 16
      %v2126 = vrot.slane %v2124, 4
      %v2127 = vshll.u32 %v312, 16
      %v2129 = vrot.slane %v2127, 5
      %v2130 = vor.u32 %v2126, %v2129
      %v2131 = vrot.slane %v2130, 4
      %v2133 = vshll.u32 %v313, 16
      %v2135 = vrot.slane %v2133, 5
      %v2136 = vsel %vm323, %v2131, %v2135
      %v2137 = vshrl.u32 %v313, 16
      %v2139 = vrot.slane %v2137, 4
      %v2140 = vor.u32 %v2139, %v2135
      %v2141 = vrot.slane %v2140, 4
      %v2143 = vshll.u32 %v314, 16
      %v2145 = vrot.slane %v2143, 5
      %v2146 = vsel %vm323, %v2141, %v2145
      %v2147 = vshrl.u32 %v314, 16
      %v2149 = vrot.slane %v2147, 4
      %v2150 = vor.u32 %v2149, %v2145
      %v2151 = vrot.slane %v2150, 4
      %v2153 = vshll.u32 %v315, 16
      %v2155 = vrot.slane %v2153, 5
      %v2156 = vsel %vm323, %v2151, %v2155
      %v2157 = vshrl.u32 %v315, 16
      %v2159 = vrot.slane %v2157, 4
      %v2160 = vor.u32 %v2159, %v2155
      %v2161 = vrot.slane %v2160, 4
      %v2163 = vshll.u32 %v316, 16
      %v2165 = vrot.slane %v2163, 5
      %v2166 = vsel %vm323, %v2161, %v2165
      %s2167 = scalar_lea.vmem %s1, 112
      %v2168 = vld [vmem:[%s2167] sm:$0xf]
      %v2169 = vld [vmem:[%s2167 + $0x4] sm:$0xf]
      %v2170 = vld [vmem:[%s2167 + $0x8] sm:$0xf]
      %v2171 = vld [vmem:[%s2167 + $0xc] sm:$0xf]
      %v2172 = vunpack.c.l.b16 %v2136
      %v2173 = vunpack.c.l.b16 %v2146
      %v2174 = vunpack.c.l.b16 %v2156
      %v2175 = vunpack.c.l.b16 %v2166
      %v2176 = vpack.c.b16 %v2173, %v2172
      %v2177 = vpack.c.b16 %v2175, %v2174
      %v2182 = vunpack.c.l.b16 %v2168
      %v2183 = vunpack.c.l.b16 %v2169
      %v2184 = vunpack.c.l.b16 %v2170
      %v2185 = vunpack.c.l.b16 %v2171
      %v2186 = vpack.c.b16 %v2183, %v2182
      %v2187 = vpack.c.b16 %v2185, %v2184
      %v2191 = vsel %vm741, %v2176, 0
      %v2194 = vsel %vm741, %v2177, 0
      %2196 = vmatpush.bf16.msra.mxu0 0
      %2197 = vmatpush.bf16.msra.mxu0 0
      %2198 = vmatpush.bf16.msra.mxu0 0
      %2199 = vmatpush.bf16.msra.mxu0 0
      %2200 = vmatpush.bf16.msra.mxu0 0
      %2201 = vmatpush.bf16.msra.mxu0 0
      %2202 = vmatpush.bf16.msra.mxu0 %v2187
      %2203 = vmatpush.bf16.msra.mxu0 %v2186
      %2204 = vmatmul.bf16.gmra.mxu0 %v755
      %v2205 = vpop.f32.mrf.mxu0
      %v2206 = vadd.f32 0.0, %v2205
      %v2207 = vpop.f32.mrf.mxu0
      %v2208 = vadd.f32 0.0, %v2207
      %2209 = vmatmul.bf16.gmra.mxu0 %v758
      %v2210 = vpop.f32.mrf.mxu0
      %v2211 = vadd.f32 0.0, %v2210
      %v2212 = vpop.f32.mrf.mxu0
      %v2213 = vadd.f32 0.0, %v2212
      %2214 = vmatmul.bf16.gmra.mxu0 %v761
      %v2215 = vpop.f32.mrf.mxu0
      %v2216 = vadd.f32 0.0, %v2215
      %v2217 = vpop.f32.mrf.mxu0
      %v2218 = vadd.f32 0.0, %v2217
      %2219 = vmatmul.bf16.gmra.mxu0 %v764
      %v2220 = vpop.f32.mrf.mxu0
      %v2221 = vadd.f32 0.0, %v2220
      %v2222 = vpop.f32.mrf.mxu0
      %v2223 = vadd.f32 0.0, %v2222
      %2224 = vmatmul.bf16.gmra.mxu0 %v767
      %v2225 = vpop.f32.mrf.mxu0
      %v2226 = vadd.f32 0.0, %v2225
      %v2227 = vpop.f32.mrf.mxu0
      %v2228 = vadd.f32 0.0, %v2227
      %2229 = vmatmul.bf16.gmra.mxu0 %v770
      %v2230 = vpop.f32.mrf.mxu0
      %v2231 = vadd.f32 0.0, %v2230
      %v2232 = vpop.f32.mrf.mxu0
      %v2233 = vadd.f32 0.0, %v2232
      %2234 = vmatmul.bf16.gmra.mxu0 %v773
      %v2235 = vpop.f32.mrf.mxu0
      %v2236 = vadd.f32 0.0, %v2235
      %v2237 = vpop.f32.mrf.mxu0
      %v2238 = vadd.f32 0.0, %v2237
      %2239 = vmatmul.bf16.gmra.mxu0 %v776
      %v2240 = vpop.f32.mrf.mxu0
      %v2241 = vadd.f32 0.0, %v2240
      %v2242 = vpop.f32.mrf.mxu0
      %v2243 = vadd.f32 0.0, %v2242
      %2244 = vmatmul.bf16.gmra.mxu0 %v779
      %v2245 = vpop.f32.mrf.mxu0
      %v2246 = vadd.f32 0.0, %v2245
      %v2247 = vpop.f32.mrf.mxu0
      %v2248 = vadd.f32 0.0, %v2247
      %2249 = vmatmul.bf16.gmra.mxu0 %v782
      %v2250 = vpop.f32.mrf.mxu0
      %v2251 = vadd.f32 0.0, %v2250
      %v2252 = vpop.f32.mrf.mxu0
      %v2253 = vadd.f32 0.0, %v2252
      %2254 = vmatmul.bf16.gmra.mxu0 %v785
      %v2255 = vpop.f32.mrf.mxu0
      %v2256 = vadd.f32 0.0, %v2255
      %v2257 = vpop.f32.mrf.mxu0
      %v2258 = vadd.f32 0.0, %v2257
      %2259 = vmatmul.bf16.gmra.mxu0 %v788
      %v2260 = vpop.f32.mrf.mxu0
      %v2261 = vadd.f32 0.0, %v2260
      %v2262 = vpop.f32.mrf.mxu0
      %v2263 = vadd.f32 0.0, %v2262
      %2264 = vmatmul.bf16.gmra.mxu0 %v1679
      %v2265 = vpop.f32.mrf.mxu0
      %v2266 = vadd.f32 0.0, %v2265
      %v2267 = vpop.f32.mrf.mxu0
      %v2268 = vadd.f32 0.0, %v2267
      %2269 = vmatmul.bf16.gmra.mxu0 %v1682
      %v2270 = vpop.f32.mrf.mxu0
      %v2271 = vadd.f32 0.0, %v2270
      %v2272 = vpop.f32.mrf.mxu0
      %v2273 = vadd.f32 0.0, %v2272
      %2274 = vmatmul.bf16.gmra.mxu0 %v2191
      %v2275 = vpop.f32.mrf.mxu0
      %v2276 = vadd.f32 0.0, %v2275
      %v2277 = vpop.f32.mrf.mxu0
      %v2278 = vadd.f32 0.0, %v2277
      %2279 = vmatmul.bf16.gmra.mxu0 %v2194
      %v2280 = vpop.f32.mrf.mxu0
      %v2281 = vadd.f32 0.0, %v2280
      %v2282 = vpop.f32.mrf.mxu0
      %v2283 = vadd.f32 0.0, %v2282
      %2284 = vdwg.mxu0
      %v2285 = vadd.f32 %v2091, %v2206
      %v2286 = vadd.f32 %v2092, %v2208
      %v2287 = vadd.f32 %v2093, %v2211
      %v2288 = vadd.f32 %v2094, %v2213
      %v2289 = vadd.f32 %v2095, %v2216
      %v2290 = vadd.f32 %v2096, %v2218
      %v2291 = vadd.f32 %v2097, %v2221
      %v2292 = vadd.f32 %v2098, %v2223
      %v2293 = vadd.f32 %v2099, %v2226
      %v2294 = vadd.f32 %v2100, %v2228
      %v2295 = vadd.f32 %v2101, %v2231
      %v2296 = vadd.f32 %v2102, %v2233
      %v2297 = vadd.f32 %v2103, %v2236
      %v2298 = vadd.f32 %v2104, %v2238
      %v2299 = vadd.f32 %v2105, %v2241
      %v2300 = vadd.f32 %v2106, %v2243
      %v2301 = vadd.f32 %v2107, %v2246
      %v2302 = vadd.f32 %v2108, %v2248
      %v2303 = vadd.f32 %v2109, %v2251
      %v2304 = vadd.f32 %v2110, %v2253
      %v2305 = vadd.f32 %v2111, %v2256
      %v2306 = vadd.f32 %v2112, %v2258
      %v2307 = vadd.f32 %v2113, %v2261
      %v2308 = vadd.f32 %v2114, %v2263
      %v2309 = vadd.f32 %v2115, %v2266
      %v2310 = vadd.f32 %v2116, %v2268
      %v2311 = vadd.f32 %v2117, %v2271
      %v2312 = vadd.f32 %v2118, %v2273
      %v2313 = vadd.f32 %v2119, %v2276
      %v2314 = vadd.f32 %v2120, %v2278
      %v2315 = vadd.f32 %v2121, %v2281
      %v2316 = vadd.f32 %v2122, %v2283
      %v2318 = vrot.slane %v312, 5
      %v2319 = vrot.slane %v2318, 4
      %v2320 = vrot.slane %v313, 5
      %v2321 = vsel %vm1118, %v2319, %v2320
      %v2322 = vrot.slane %v2320, 4
      %v2323 = vrot.slane %v314, 5
      %v2324 = vsel %vm1118, %v2322, %v2323
      %v2325 = vrot.slane %v2323, 4
      %v2326 = vrot.slane %v315, 5
      %v2327 = vsel %vm1118, %v2325, %v2326
      %v2328 = vrot.slane %v2326, 4
      %v2329 = vrot.slane %v316, 5
      %v2330 = vsel %vm1118, %v2328, %v2329
      %s2331 = scalar_lea.vmem %s1, 128
      %v2332 = vld [vmem:[%s2331] sm:$0xf]
      %v2333 = vld [vmem:[%s2331 + $0x4] sm:$0xf]
      %v2334 = vld [vmem:[%s2331 + $0x8] sm:$0xf]
      %v2335 = vld [vmem:[%s2331 + $0xc] sm:$0xf]
      %v2336 = vunpack.c.l.b16 %v2321
      %v2337 = vunpack.c.l.b16 %v2324
      %v2338 = vunpack.c.l.b16 %v2327
      %v2339 = vunpack.c.l.b16 %v2330
      %v2340 = vpack.c.b16 %v2337, %v2336
      %v2341 = vpack.c.b16 %v2339, %v2338
      %v2346 = vunpack.c.l.b16 %v2332
      %v2347 = vunpack.c.l.b16 %v2333
      %v2348 = vunpack.c.l.b16 %v2334
      %v2349 = vunpack.c.l.b16 %v2335
      %v2350 = vpack.c.b16 %v2347, %v2346
      %v2351 = vpack.c.b16 %v2349, %v2348
      %v2355 = vsel %vm741, %v2340, 0
      %v2358 = vsel %vm741, %v2341, 0
      %2360 = vmatpush.bf16.msra.mxu0 0
      %2361 = vmatpush.bf16.msra.mxu0 0
      %2362 = vmatpush.bf16.msra.mxu0 0
      %2363 = vmatpush.bf16.msra.mxu0 0
      %2364 = vmatpush.bf16.msra.mxu0 0
      %2365 = vmatpush.bf16.msra.mxu0 0
      %2366 = vmatpush.bf16.msra.mxu0 %v2351
      %2367 = vmatpush.bf16.msra.mxu0 %v2350
      %2368 = vmatmul.bf16.gmra.mxu0 %v1301
      %v2369 = vpop.f32.mrf.mxu0
      %v2370 = vadd.f32 0.0, %v2369
      %v2371 = vpop.f32.mrf.mxu0
      %v2372 = vadd.f32 0.0, %v2371
      %2373 = vmatmul.bf16.gmra.mxu0 %v1304
      %v2374 = vpop.f32.mrf.mxu0
      %v2375 = vadd.f32 0.0, %v2374
      %v2376 = vpop.f32.mrf.mxu0
      %v2377 = vadd.f32 0.0, %v2376
      %2378 = vmatmul.bf16.gmra.mxu0 %v1307
      %v2379 = vpop.f32.mrf.mxu0
      %v2380 = vadd.f32 0.0, %v2379
      %v2381 = vpop.f32.mrf.mxu0
      %v2382 = vadd.f32 0.0, %v2381
      %2383 = vmatmul.bf16.gmra.mxu0 %v1310
      %v2384 = vpop.f32.mrf.mxu0
      %v2385 = vadd.f32 0.0, %v2384
      %v2386 = vpop.f32.mrf.mxu0
      %v2387 = vadd.f32 0.0, %v2386
      %2388 = vmatmul.bf16.gmra.mxu0 %v1313
      %v2389 = vpop.f32.mrf.mxu0
      %v2390 = vadd.f32 0.0, %v2389
      %v2391 = vpop.f32.mrf.mxu0
      %v2392 = vadd.f32 0.0, %v2391
      %2393 = vmatmul.bf16.gmra.mxu0 %v1316
      %v2394 = vpop.f32.mrf.mxu0
      %v2395 = vadd.f32 0.0, %v2394
      %v2396 = vpop.f32.mrf.mxu0
      %v2397 = vadd.f32 0.0, %v2396
      %2398 = vmatmul.bf16.gmra.mxu0 %v1319
      %v2399 = vpop.f32.mrf.mxu0
      %v2400 = vadd.f32 0.0, %v2399
      %v2401 = vpop.f32.mrf.mxu0
      %v2402 = vadd.f32 0.0, %v2401
      %2403 = vmatmul.bf16.gmra.mxu0 %v1322
      %v2404 = vpop.f32.mrf.mxu0
      %v2405 = vadd.f32 0.0, %v2404
      %v2406 = vpop.f32.mrf.mxu0
      %v2407 = vadd.f32 0.0, %v2406
      %2408 = vmatmul.bf16.gmra.mxu0 %v1325
      %v2409 = vpop.f32.mrf.mxu0
      %v2410 = vadd.f32 0.0, %v2409
      %v2411 = vpop.f32.mrf.mxu0
      %v2412 = vadd.f32 0.0, %v2411
      %2413 = vmatmul.bf16.gmra.mxu0 %v1328
      %v2414 = vpop.f32.mrf.mxu0
      %v2415 = vadd.f32 0.0, %v2414
      %v2416 = vpop.f32.mrf.mxu0
      %v2417 = vadd.f32 0.0, %v2416
      %2418 = vmatmul.bf16.gmra.mxu0 %v1331
      %v2419 = vpop.f32.mrf.mxu0
      %v2420 = vadd.f32 0.0, %v2419
      %v2421 = vpop.f32.mrf.mxu0
      %v2422 = vadd.f32 0.0, %v2421
      %2423 = vmatmul.bf16.gmra.mxu0 %v1334
      %v2424 = vpop.f32.mrf.mxu0
      %v2425 = vadd.f32 0.0, %v2424
      %v2426 = vpop.f32.mrf.mxu0
      %v2427 = vadd.f32 0.0, %v2426
      %2428 = vmatmul.bf16.gmra.mxu0 %v1843
      %v2429 = vpop.f32.mrf.mxu0
      %v2430 = vadd.f32 0.0, %v2429
      %v2431 = vpop.f32.mrf.mxu0
      %v2432 = vadd.f32 0.0, %v2431
      %2433 = vmatmul.bf16.gmra.mxu0 %v1846
      %v2434 = vpop.f32.mrf.mxu0
      %v2435 = vadd.f32 0.0, %v2434
      %v2436 = vpop.f32.mrf.mxu0
      %v2437 = vadd.f32 0.0, %v2436
      %2438 = vmatmul.bf16.gmra.mxu0 %v2355
      %v2439 = vpop.f32.mrf.mxu0
      %v2440 = vadd.f32 0.0, %v2439
      %v2441 = vpop.f32.mrf.mxu0
      %v2442 = vadd.f32 0.0, %v2441
      %2443 = vmatmul.bf16.gmra.mxu0 %v2358
      %v2444 = vpop.f32.mrf.mxu0
      %v2445 = vadd.f32 0.0, %v2444
      %v2446 = vpop.f32.mrf.mxu0
      %v2447 = vadd.f32 0.0, %v2446
      %2448 = vdwg.mxu0
      %v2449 = vadd.f32 %v2285, %v2370
      %v2450 = vadd.f32 %v2286, %v2372
      %v2451 = vadd.f32 %v2287, %v2375
      %v2452 = vadd.f32 %v2288, %v2377
      %v2453 = vadd.f32 %v2289, %v2380
      %v2454 = vadd.f32 %v2290, %v2382
      %v2455 = vadd.f32 %v2291, %v2385
      %v2456 = vadd.f32 %v2292, %v2387
      %v2457 = vadd.f32 %v2293, %v2390
      %v2458 = vadd.f32 %v2294, %v2392
      %v2459 = vadd.f32 %v2295, %v2395
      %v2460 = vadd.f32 %v2296, %v2397
      %v2461 = vadd.f32 %v2297, %v2400
      %v2462 = vadd.f32 %v2298, %v2402
      %v2463 = vadd.f32 %v2299, %v2405
      %v2464 = vadd.f32 %v2300, %v2407
      %v2465 = vadd.f32 %v2301, %v2410
      %v2466 = vadd.f32 %v2302, %v2412
      %v2467 = vadd.f32 %v2303, %v2415
      %v2468 = vadd.f32 %v2304, %v2417
      %v2469 = vadd.f32 %v2305, %v2420
      %v2470 = vadd.f32 %v2306, %v2422
      %v2471 = vadd.f32 %v2307, %v2425
      %v2472 = vadd.f32 %v2308, %v2427
      %v2473 = vadd.f32 %v2309, %v2430
      %v2474 = vadd.f32 %v2310, %v2432
      %v2475 = vadd.f32 %v2311, %v2435
      %v2476 = vadd.f32 %v2312, %v2437
      %v2477 = vadd.f32 %v2313, %v2440
      %v2478 = vadd.f32 %v2314, %v2442
      %v2479 = vadd.f32 %v2315, %v2445
      %v2480 = vadd.f32 %v2316, %v2447
      %v2481 = vpack.c.bf16 %v2449, %v2449
      %v2482 = vpack.c.bf16 %v2450, %v2450
      %v2483 = vpack.c.bf16 %v2451, %v2451
      %v2484 = vpack.c.bf16 %v2452, %v2452
      %v2485 = vpack.c.bf16 %v2453, %v2453
      %v2486 = vpack.c.bf16 %v2454, %v2454
      %v2487 = vpack.c.bf16 %v2455, %v2455
      %v2488 = vpack.c.bf16 %v2456, %v2456
      %v2489 = vpack.c.bf16 %v2457, %v2457
      %v2490 = vpack.c.bf16 %v2458, %v2458
      %v2491 = vpack.c.bf16 %v2459, %v2459
      %v2492 = vpack.c.bf16 %v2460, %v2460
      %v2493 = vpack.c.bf16 %v2461, %v2461
      %v2494 = vpack.c.bf16 %v2462, %v2462
      %v2495 = vpack.c.bf16 %v2463, %v2463
      %v2496 = vpack.c.bf16 %v2464, %v2464
      %v2497 = vpack.c.bf16 %v2465, %v2465
      %v2498 = vpack.c.bf16 %v2466, %v2466
      %v2499 = vpack.c.bf16 %v2467, %v2467
      %v2500 = vpack.c.bf16 %v2468, %v2468
      %v2501 = vpack.c.bf16 %v2469, %v2469
      %v2502 = vpack.c.bf16 %v2470, %v2470
      %v2503 = vpack.c.bf16 %v2471, %v2471
      %v2504 = vpack.c.bf16 %v2472, %v2472
      %v2505 = vpack.c.bf16 %v2473, %v2473
      %v2506 = vpack.c.bf16 %v2474, %v2474
      %v2507 = vpack.c.bf16 %v2475, %v2475
      %v2508 = vpack.c.bf16 %v2476, %v2476
      %v2509 = vpack.c.bf16 %v2477, %v2477
      %v2510 = vpack.c.bf16 %v2478, %v2478
      %v2511 = vpack.c.bf16 %v2479, %v2479
      %v2512 = vpack.c.bf16 %v2480, %v2480
      %2513 = vst [vmem:[%s242] sm:$0xf] %v2481
      %2514 = vst [vmem:[%s242 + $0x4] sm:$0xf] %v2482
      %2515 = vst [vmem:[%s242 + $0x8] sm:$0xf] %v2483
      %2516 = vst [vmem:[%s242 + $0xc] sm:$0xf] %v2484
      %2517 = vst [vmem:[%s242 + $0x10] sm:$0xf] %v2485
      %2518 = vst [vmem:[%s242 + $0x14] sm:$0xf] %v2486
      %2519 = vst [vmem:[%s242 + $0x18] sm:$0xf] %v2487
      %2520 = vst [vmem:[%s242 + $0x1c] sm:$0xf] %v2488
      %2521 = vst [vmem:[%s242 + $0x20] sm:$0xf] %v2489
      %2522 = vst [vmem:[%s242 + $0x24] sm:$0xf] %v2490
      %2523 = vst [vmem:[%s242 + $0x28] sm:$0xf] %v2491
      %2524 = vst [vmem:[%s242 + $0x2c] sm:$0xf] %v2492
      %2525 = vst [vmem:[%s242 + $0x30] sm:$0xf] %v2493
      %2526 = vst [vmem:[%s242 + $0x34] sm:$0xf] %v2494
      %2527 = vst [vmem:[%s242 + $0x38] sm:$0xf] %v2495
      %2528 = vst [vmem:[%s242 + $0x3c] sm:$0xf] %v2496
      %2529 = vst [vmem:[%s242 + $0x40] sm:$0xf] %v2497
      %2530 = vst [vmem:[%s242 + $0x44] sm:$0xf] %v2498
      %2531 = vst [vmem:[%s242 + $0x48] sm:$0xf] %v2499
      %2532 = vst [vmem:[%s242 + $0x4c] sm:$0xf] %v2500
      %2533 = vst [vmem:[%s242 + $0x50] sm:$0xf] %v2501
      %2534 = vst [vmem:[%s242 + $0x54] sm:$0xf] %v2502
      %2535 = vst [vmem:[%s242 + $0x58] sm:$0xf] %v2503
      %2536 = vst [vmem:[%s242 + $0x5c] sm:$0xf] %v2504
      %2537 = vst [vmem:[%s242 + $0x60] sm:$0xf] %v2505
      %2538 = vst [vmem:[%s242 + $0x64] sm:$0xf] %v2506
      %2539 = vst [vmem:[%s242 + $0x68] sm:$0xf] %v2507
      %2540 = vst [vmem:[%s242 + $0x6c] sm:$0xf] %v2508
      %2541 = vst [vmem:[%s242 + $0x70] sm:$0xf] %v2509
      %2542 = vst [vmem:[%s242 + $0x74] sm:$0xf] %v2510
      %2543 = vst [vmem:[%s242 + $0x78] sm:$0xf] %v2511
      %2544 = vst [vmem:[%s242 + $0x7c] sm:$0xf] %v2512
      %v2545 = vadd.f32 %v2449, %v2450
      %v2546 = vadd.f32 %v2545, %v2451
      %v2547 = vadd.f32 %v2546, %v2452
      %v2548 = vadd.f32 %v2547, %v2453
      %v2549 = vadd.f32 %v2548, %v2454
      %v2550 = vadd.f32 %v2549, %v2455
      %v2551 = vadd.f32 %v2550, %v2456
      %v2552 = vadd.f32 %v2551, %v2457
      %v2553 = vadd.f32 %v2552, %v2458
      %v2554 = vadd.f32 %v2553, %v2459
      %v2555 = vadd.f32 %v2554, %v2460
      %v2556 = vadd.f32 %v2555, %v2461
      %v2557 = vadd.f32 %v2556, %v2462
      %v2558 = vadd.f32 %v2557, %v2463
      %v2559 = vadd.f32 %v2558, %v2464
      %v2560 = vadd.f32 %v2559, %v2465
      %v2561 = vadd.f32 %v2560, %v2466
      %v2562 = vadd.f32 %v2561, %v2467
      %v2563 = vadd.f32 %v2562, %v2468
      %v2564 = vadd.f32 %v2563, %v2469
      %v2565 = vadd.f32 %v2564, %v2470
      %v2566 = vadd.f32 %v2565, %v2471
      %v2567 = vadd.f32 %v2566, %v2472
      %v2568 = vadd.f32 %v2567, %v2473
      %v2569 = vadd.f32 %v2568, %v2474
      %v2570 = vadd.f32 %v2569, %v2475
      %v2571 = vadd.f32 %v2570, %v2476
      %v2572 = vadd.f32 %v2571, %v2477
      %v2573 = vadd.f32 %v2572, %v2478
      %v2574 = vadd.f32 %v2573, %v2479
      %v2575 = vadd.f32 %v2574, %v2480
      %2576 = vst [vmem:[%s251] sm:$0xff] %v2575
      %v2577 = vmul.f32 %v2449, %v2449
      %v2578 = vmul.f32 %v2450, %v2450
      %v2579 = vmul.f32 %v2451, %v2451
      %v2580 = vmul.f32 %v2452, %v2452
      %v2581 = vmul.f32 %v2453, %v2453
      %v2582 = vmul.f32 %v2454, %v2454
      %v2583 = vmul.f32 %v2455, %v2455
      %v2584 = vmul.f32 %v2456, %v2456
      %v2585 = vmul.f32 %v2457, %v2457
      %v2586 = vmul.f32 %v2458, %v2458
      %v2587 = vmul.f32 %v2459, %v2459
      %v2588 = vmul.f32 %v2460, %v2460
      %v2589 = vmul.f32 %v2461, %v2461
      %v2590 = vmul.f32 %v2462, %v2462
      %v2591 = vmul.f32 %v2463, %v2463
      %v2592 = vmul.f32 %v2464, %v2464
      %v2593 = vmul.f32 %v2465, %v2465
      %v2594 = vmul.f32 %v2466, %v2466
      %v2595 = vmul.f32 %v2467, %v2467
      %v2596 = vmul.f32 %v2468, %v2468
      %v2597 = vmul.f32 %v2469, %v2469
      %v2598 = vmul.f32 %v2470, %v2470
      %v2599 = vmul.f32 %v2471, %v2471
      %v2600 = vmul.f32 %v2472, %v2472
      %v2601 = vmul.f32 %v2473, %v2473
      %v2602 = vmul.f32 %v2474, %v2474
      %v2603 = vmul.f32 %v2475, %v2475
      %v2604 = vmul.f32 %v2476, %v2476
      %v2605 = vmul.f32 %v2477, %v2477
      %v2606 = vmul.f32 %v2478, %v2478
      %v2607 = vmul.f32 %v2479, %v2479
      %v2608 = vmul.f32 %v2480, %v2480
      %v2609 = vadd.f32 %v2577, %v2578
      %v2610 = vadd.f32 %v2609, %v2579
      %v2611 = vadd.f32 %v2610, %v2580
      %v2612 = vadd.f32 %v2611, %v2581
      %v2613 = vadd.f32 %v2612, %v2582
      %v2614 = vadd.f32 %v2613, %v2583
      %v2615 = vadd.f32 %v2614, %v2584
      %v2616 = vadd.f32 %v2615, %v2585
      %v2617 = vadd.f32 %v2616, %v2586
      %v2618 = vadd.f32 %v2617, %v2587
      %v2619 = vadd.f32 %v2618, %v2588
      %v2620 = vadd.f32 %v2619, %v2589
      %v2621 = vadd.f32 %v2620, %v2590
      %v2622 = vadd.f32 %v2621, %v2591
      %v2623 = vadd.f32 %v2622, %v2592
      %v2624 = vadd.f32 %v2623, %v2593
      %v2625 = vadd.f32 %v2624, %v2594
      %v2626 = vadd.f32 %v2625, %v2595
      %v2627 = vadd.f32 %v2626, %v2596
      %v2628 = vadd.f32 %v2627, %v2597
      %v2629 = vadd.f32 %v2628, %v2598
      %v2630 = vadd.f32 %v2629, %v2599
      %v2631 = vadd.f32 %v2630, %v2600
      %v2632 = vadd.f32 %v2631, %v2601
      %v2633 = vadd.f32 %v2632, %v2602
      %v2634 = vadd.f32 %v2633, %v2603
      %v2635 = vadd.f32 %v2634, %v2604
      %v2636 = vadd.f32 %v2635, %v2605
      %v2637 = vadd.f32 %v2636, %v2606
      %v2638 = vadd.f32 %v2637, %v2607
      %v2639 = vadd.f32 %v2638, %v2608
      %2640 = vst [vmem:[%s259] sm:$0xff] %v2639
      %s2641 = smul.u32 %s20, 4
      %s2642 = sadd.s32 %s2641, %s21
      %s2643 = smul.u32 32, %s2642
      %p2644 = scmp.lt.s32.totalorder %s2643, 255
      %s2645 = scalar_select %p2644, %s2643, 255
      %s2646 = smul.addr %s2645, 4
      %s2647 = scalar_lea.vmem %s2, %s2646
      %s2648 = smul.u32 %s20, 4
      %s2649 = sadd.s32 %s2648, %s21
      %p2650 = scmp.lt.s32.totalorder %s2649, 7
      %s2651 = scalar_select %p2650, %s2649, 7
      %s2652 = smul.addr %s2651, 8
      %s2653 = scalar_lea.vmem %s3, %s2652
      %s2654 = smul.u32 %s20, 4
      %s2655 = sadd.s32 %s2654, %s21
      %p2656 = scmp.lt.s32.totalorder %s2655, 7
      %s2657 = scalar_select %p2656, %s2655, 7
      %s2658 = smul.addr %s2657, 8
      %s2659 = scalar_lea.vmem %s4, %s2658
      // Predicated region
      $region29: #{inpainting_net_forward.6} parent=27 // pred_check
        %p2660 = pneg %p97
      $region30: #{inpainting_net_forward.6} parent=27 // pred_check_branch
        %2662 = sbr.rel (%p2660) target = $region32
      $region31: #{inpainting_net_forward.6} parent=27 // pred_region
        %s2663 = smul.u32 %s20, 4
        %s2664 = sadd.s32 %s2663, %s21
        %s2665 = smul.u32 32, %s2664
      $region32: #{inpainting_net_forward.6} parent=27 // pred_fallthru
        _
      // Predicated region
      $region33: #{inpainting_net_forward.6} parent=27 // pred_check
        %p2666 = pneg %p127
      $region34: #{inpainting_net_forward.6} parent=27 // pred_check_branch
        %2668 = sbr.rel (%p2666) target = $region36
      $region35: #{inpainting_net_forward.6} parent=27 // pred_region
        %s2669 = smul.u32 %s20, 4
        %s2670 = sadd.s32 %s2669, %s21
      $region36: #{inpainting_net_forward.6} parent=27 // pred_fallthru
        _
      // Predicated region
      $region37: #{inpainting_net_forward.6} parent=27 // pred_check
        %p2671 = pneg %p157
      $region38: #{inpainting_net_forward.6} parent=27 // pred_check_branch
        %2673 = sbr.rel (%p2671) target = $region40
      $region39: #{inpainting_net_forward.6} parent=27 // pred_region
        %s2674 = smul.u32 %s20, 4
        %s2675 = sadd.s32 %s2674, %s21
      $region40: #{inpainting_net_forward.6} parent=27 // pred_fallthru
        _
    $region28: #{inpainting_net_forward.6} parent=5 // pred_fallthru
      _
    %p2676 = scmp.le.s32.totalorder 2, %s11
    // Predicated region
    $region41: #{inpainting_net_forward.6} parent=5 // pred_check
      %p2677 = pneg %p2676
    $region42: #{inpainting_net_forward.6} parent=5 // pred_check_branch
      %2679 = sbr.rel (%p2677) target = $region44
    $region43: #{inpainting_net_forward.6} parent=5 // pred_region
      %s2680 = ssub.s32 %s11, 2
      // Predicated region
      $region45: #{inpainting_net_forward.6} parent=43 // pred_check
        %p2681 = pneg %p103
      $region46: #{inpainting_net_forward.6} parent=43 // pred_check_branch
        %2683 = sbr.rel (%p2681) target = $region48
      $region47: #{inpainting_net_forward.6} parent=43 // pred_region
        %s2684 = smul.u32 %s22, 4
        %s2685 = sadd.s32 %s2684, %s23
        %s2686 = smul.u32 32, %s2685
        %p2687 = scmp.lt.s32.totalorder %s2686, 255
        %s2688 = scalar_select %p2687, %s2686, 255
        %s2689 = smul.addr %s2688, 4
        %s2690 = scalar_lea.vmem %s2, %s2689
      $region48: #{inpainting_net_forward.6} parent=43 // pred_fallthru
        _
      // Predicated region
      $region49: #{inpainting_net_forward.6} parent=43 // pred_check
        %p2691 = pneg %p133
      $region50: #{inpainting_net_forward.6} parent=43 // pred_check_branch
        %2693 = sbr.rel (%p2691) target = $region52
      $region51: #{inpainting_net_forward.6} parent=43 // pred_region
        %s2694 = smul.u32 %s22, 4
        %s2695 = sadd.s32 %s2694, %s23
        %p2696 = scmp.lt.s32.totalorder %s2695, 7
        %s2697 = scalar_select %p2696, %s2695, 7
        %s2698 = smul.addr %s2697, 8
        %s2699 = scalar_lea.vmem %s3, %s2698
      $region52: #{inpainting_net_forward.6} parent=43 // pred_fallthru
        _
      // Predicated region
      $region53: #{inpainting_net_forward.6} parent=43 // pred_check
        %p2700 = pneg %p163
      $region54: #{inpainting_net_forward.6} parent=43 // pred_check_branch
        %2702 = sbr.rel (%p2700) target = $region56
      $region55: #{inpainting_net_forward.6} parent=43 // pred_region
        %s2703 = smul.u32 %s22, 4
        %s2704 = sadd.s32 %s2703, %s23
        %p2705 = scmp.lt.s32.totalorder %s2704, 7
        %s2706 = scalar_select %p2705, %s2704, 7
        %s2707 = smul.addr %s2706, 8
        %s2708 = scalar_lea.vmem %s4, %s2707
      $region56: #{inpainting_net_forward.6} parent=43 // pred_fallthru
        _
    $region44: #{inpainting_net_forward.6} parent=5 // pred_fallthru
      _
  $region6: #{inpainting_net_forward.6} parent=0 // loop_footer
    %s15 = sadd.s32 1, %s11
  $region7: #{inpainting_net_forward.6} parent=0 // loop_footer_branch
    %10 = sbr.rel target = $region3
  $region8: #{inpainting_net_forward.6} parent=0 // loop_exit
    _

// kernel: inpainting_net_forward.7
$region0: #{inpainting_net_forward.7}
  #allocation0 [shape = 'u32[]', space=smem, size = 0x4, offset = 0x4, fixed_abs, tag = 'smem constant byte address 0x4 - core index']
  #allocation1 [shape = 'u32[72,128]{1,0:T(1,128)}', space=vmem, size = 0x9000, scoped, tag = 'internal scratch']
  %s0 = inlined_call_operand.vmem [shape: bf16[2048,128], index: 0, kind: input, shape index: {}]
  %s1 = inlined_call_operand.vmem [shape: f32[1,128], index: 1, kind: input, shape index: {}]
  %s2 = inlined_call_operand.vmem [shape: f32[1,128], index: 2, kind: input, shape index: {}]
  %s3 = inlined_call_operand.vmem [shape: bf16[128,128], index: 3, kind: input, shape index: {}]
  %s4 = inlined_call_operand.vmem [shape: f32[1,128], index: 4, kind: input, shape index: {}]
  %s5 = inlined_call_operand.vmem [shape: f32[2048,128], index: 5, kind: output, shape index: {}]
  %s6 = sld [smem:[#allocation0]]
  $region53: #{inpainting_net_forward.7} parent=0
    _
  %s8 = ssub.s32 1, %s6
  %s9 = scalar_select 0, %s8, %s6
  loop: start=0, step=1, limit=6
  $region2: #{inpainting_net_forward.7} parent=0 // loop_pre_header
    _
  $region3: #{inpainting_net_forward.7} parent=0 // loop_header
    %s11 = sphi 0, %s15
    %p12 = scmp.ge.s32.totalorder %s11, 6
    %s21 = sphi 0, %s23
    %s24 = sphi 0, %s21
    %s25 = sphi 0, %s24
    %s41 = sphi 0, %s25
    %s45 = sphi 0, %s45
    %s47 = sphi 0, %s45
    %s48 = sphi 0, %s47
    %s62 = sphi 0, %s48
    %s66 = sphi 0, %s66
    %s68 = sphi 0, %s66
    %s69 = sphi 0, %s68
    %s83 = sphi 0, %s69
    %s87 = sphi 0, %s87
    %s89 = sphi 0, %s87
    %s90 = sphi 0, %s89
    %s104 = sphi 0, %s90
    %s108 = sphi 0, %s108
    %s110 = sphi 0, %s108
    %s111 = sphi 0, %s110
    %s125 = sphi 0, %s111
    %s131 = sphi 0, %s133
    %s134 = sphi 0, %s131
    %s135 = sphi 0, %s134
    %s151 = sphi 0, %s135
  $region4: #{inpainting_net_forward.7} parent=0 // loop_header_branch
    %14 = sbr.rel (%p12) target = $region8
  $region5: #{inpainting_net_forward.7} parent=0 // loop_body
    %s16 = ssub.s32 %s11, 1
    %s17 = ssub.s32 %s11, 2
    %s18 = sadd.s32 %s11, 1
    %s19 = ssub.s32 %s11, %s18
    %p20 = scmp.eq.s32.totalorder %s19, 0
    %s22 = sadd.s32 %s21, 1
    %s23 = scalar_select %p20, %s21, %s22
    %p26 = pneg %p20
    %p27 = scmp.eq.s32.totalorder %s11, 3
    %p28 = por %p26, %p27
    %p29 = scmp.ne.s32.totalorder %s21, %s24
    %p30 = scmp.eq.s32.totalorder %s11, 0
    %p31 = por %p29, %p30
    %p32 = scmp.ne.s32.totalorder %s21, %s24
    %p33 = scmp.eq.s32.totalorder %s16, 3
    %p34 = por %p32, %p33
    %p35 = scmp.ne.s32.totalorder %s24, %s25
    %p36 = scmp.eq.s32.totalorder %s16, 0
    %p37 = por %p35, %p36
    %p38 = scmp.ne.s32.totalorder %s24, %s25
    %p39 = scmp.eq.s32.totalorder %s17, 3
    %p40 = por %p38, %p39
    %p42 = scmp.ne.s32.totalorder %s25, %s41
    %p43 = scmp.eq.s32.totalorder %s17, 0
    %p44 = por %p42, %p43
    %s46 = sadd.s32 %s45, 1
    %p49 = scmp.eq.s32.totalorder %s11, 3
    %p50 = scmp.ne.s32.totalorder %s45, %s47
    %p51 = scmp.eq.s32.totalorder %s11, 0
    %p52 = por %p50, %p51
    %p53 = scmp.ne.s32.totalorder %s45, %s47
    %p54 = scmp.eq.s32.totalorder %s16, 3
    %p55 = por %p53, %p54
    %p56 = scmp.ne.s32.totalorder %s47, %s48
    %p57 = scmp.eq.s32.totalorder %s16, 0
    %p58 = por %p56, %p57
    %p59 = scmp.ne.s32.totalorder %s47, %s48
    %p60 = scmp.eq.s32.totalorder %s17, 3
    %p61 = por %p59, %p60
    %p63 = scmp.ne.s32.totalorder %s48, %s62
    %p64 = scmp.eq.s32.totalorder %s17, 0
    %p65 = por %p63, %p64
    %s67 = sadd.s32 %s66, 1
    %p70 = scmp.eq.s32.totalorder %s11, 3
    %p71 = scmp.ne.s32.totalorder %s66, %s68
    %p72 = scmp.eq.s32.totalorder %s11, 0
    %p73 = por %p71, %p72
    %p74 = scmp.ne.s32.totalorder %s66, %s68
    %p75 = scmp.eq.s32.totalorder %s16, 3
    %p76 = por %p74, %p75
    %p77 = scmp.ne.s32.totalorder %s68, %s69
    %p78 = scmp.eq.s32.totalorder %s16, 0
    %p79 = por %p77, %p78
    %p80 = scmp.ne.s32.totalorder %s68, %s69
    %p81 = scmp.eq.s32.totalorder %s17, 3
    %p82 = por %p80, %p81
    %p84 = scmp.ne.s32.totalorder %s69, %s83
    %p85 = scmp.eq.s32.totalorder %s17, 0
    %p86 = por %p84, %p85
    %s88 = sadd.s32 %s87, 1
    %p91 = scmp.eq.s32.totalorder %s11, 3
    %p92 = scmp.ne.s32.totalorder %s87, %s89
    %p93 = scmp.eq.s32.totalorder %s11, 0
    %p94 = por %p92, %p93
    %p95 = scmp.ne.s32.totalorder %s87, %s89
    %p96 = scmp.eq.s32.totalorder %s16, 3
    %p97 = por %p95, %p96
    %p98 = scmp.ne.s32.totalorder %s89, %s90
    %p99 = scmp.eq.s32.totalorder %s16, 0
    %p100 = por %p98, %p99
    %p101 = scmp.ne.s32.totalorder %s89, %s90
    %p102 = scmp.eq.s32.totalorder %s17, 3
    %p103 = por %p101, %p102
    %p105 = scmp.ne.s32.totalorder %s90, %s104
    %p106 = scmp.eq.s32.totalorder %s17, 0
    %p107 = por %p105, %p106
    %s109 = sadd.s32 %s108, 1
    %p112 = scmp.eq.s32.totalorder %s11, 3
    %p113 = scmp.ne.s32.totalorder %s108, %s110
    %p114 = scmp.eq.s32.totalorder %s11, 0
    %p115 = por %p113, %p114
    %p116 = scmp.ne.s32.totalorder %s108, %s110
    %p117 = scmp.eq.s32.totalorder %s16, 3
    %p118 = por %p116, %p117
    %p119 = scmp.ne.s32.totalorder %s110, %s111
    %p120 = scmp.eq.s32.totalorder %s16, 0
    %p121 = por %p119, %p120
    %p122 = scmp.ne.s32.totalorder %s110, %s111
    %p123 = scmp.eq.s32.totalorder %s17, 3
    %p124 = por %p122, %p123
    %p126 = scmp.ne.s32.totalorder %s111, %s125
    %p127 = scmp.eq.s32.totalorder %s17, 0
    %p128 = por %p126, %p127
    %s129 = ssub.s32 %s11, %s18
    %p130 = scmp.eq.s32.totalorder %s129, 0
    %s132 = sadd.s32 %s131, 1
    %s133 = scalar_select %p130, %s131, %s132
    %p136 = pneg %p130
    %p137 = scmp.eq.s32.totalorder %s11, 3
    %p138 = por %p136, %p137
    %p139 = scmp.ne.s32.totalorder %s131, %s134
    %p140 = scmp.eq.s32.totalorder %s11, 0
    %p141 = por %p139, %p140
    %p142 = scmp.ne.s32.totalorder %s131, %s134
    %p143 = scmp.eq.s32.totalorder %s16, 3
    %p144 = por %p142, %p143
    %p145 = scmp.ne.s32.totalorder %s134, %s135
    %p146 = scmp.eq.s32.totalorder %s16, 0
    %p147 = por %p145, %p146
    %p148 = scmp.ne.s32.totalorder %s134, %s135
    %p149 = scmp.eq.s32.totalorder %s17, 3
    %p150 = por %p148, %p149
    %p152 = scmp.ne.s32.totalorder %s135, %s151
    %p153 = scmp.eq.s32.totalorder %s17, 0
    %p154 = por %p152, %p153
    %p155 = scmp.le.s32.totalorder 1, %s11
    %p156 = scmp.lt.s32.totalorder %s11, 5
    %p157 = pnand %p155, %p156
    %p158 = pneg %p157
    // Predicated region
    $region9: #{inpainting_net_forward.7} parent=5 // pred_check
      _
    $region10: #{inpainting_net_forward.7} parent=5 // pred_check_branch
      %160 = sbr.rel (%p157) target = $region12
    $region11: #{inpainting_net_forward.7} parent=5 // pred_region
      %s161 = ssub.s32 %s11, 1
      // Predicated region
      $region13: #{inpainting_net_forward.7} parent=11 // pred_check
        %p162 = pneg %p58
      $region14: #{inpainting_net_forward.7} parent=11 // pred_check_branch
        %164 = sbr.rel (%p162) target = $region16
      $region15: #{inpainting_net_forward.7} parent=11 // pred_region
        _
      $region16: #{inpainting_net_forward.7} parent=11 // pred_fallthru
        _
      // Predicated region
      $region17: #{inpainting_net_forward.7} parent=11 // pred_check
        %p165 = pneg %p79
      $region18: #{inpainting_net_forward.7} parent=11 // pred_check_branch
        %167 = sbr.rel (%p165) target = $region20
      $region19: #{inpainting_net_forward.7} parent=11 // pred_region
        _
      $region20: #{inpainting_net_forward.7} parent=11 // pred_fallthru
        _
      // Predicated region
      $region21: #{inpainting_net_forward.7} parent=11 // pred_check
        %p168 = pneg %p100
      $region22: #{inpainting_net_forward.7} parent=11 // pred_check_branch
        %170 = sbr.rel (%p168) target = $region24
      $region23: #{inpainting_net_forward.7} parent=11 // pred_region
        _
      $region24: #{inpainting_net_forward.7} parent=11 // pred_fallthru
        _
      // Predicated region
      $region25: #{inpainting_net_forward.7} parent=11 // pred_check
        %p171 = pneg %p121
      $region26: #{inpainting_net_forward.7} parent=11 // pred_check_branch
        %173 = sbr.rel (%p171) target = $region28
      $region27: #{inpainting_net_forward.7} parent=11 // pred_region
        _
      $region28: #{inpainting_net_forward.7} parent=11 // pred_fallthru
        _
    $region12: #{inpainting_net_forward.7} parent=5 // pred_fallthru
      _
    %p174 = scmp.lt.s32.totalorder %s11, 4
    // Predicated region
    $region29: #{inpainting_net_forward.7} parent=5 // pred_check
      %p175 = pneg %p174
    $region30: #{inpainting_net_forward.7} parent=5 // pred_check_branch
      %177 = sbr.rel (%p175) target = $region32
    $region31: #{inpainting_net_forward.7} parent=5 // pred_region
      // Predicated region
      $region33: #{inpainting_net_forward.7} parent=31 // pred_check
        %p178 = pneg %p31
      $region34: #{inpainting_net_forward.7} parent=31 // pred_check_branch
        %180 = sbr.rel (%p178) target = $region36
      $region35: #{inpainting_net_forward.7} parent=31 // pred_region
        %s181 = smul.u32 64, %s11
        %p182 = scmp.lt.s32.totalorder %s181, 255
        %s183 = scalar_select %p182, %s181, 255
        %s184 = smul.addr %s183, 4
        %s185 = scalar_lea.vmem %s0, %s184
        %s186 = smul.u32 64, %s11
      $region36: #{inpainting_net_forward.7} parent=31 // pred_fallthru
        _
    $region32: #{inpainting_net_forward.7} parent=5 // pred_fallthru
      _
    %p187 = scmp.le.s32.totalorder 1, %s11
    %p188 = scmp.lt.s32.totalorder %s11, 5
    %p189 = pnand %p187, %p188
    %p190 = pneg %p189
    // Predicated region
    $region37: #{inpainting_net_forward.7} parent=5 // pred_check
      _
    $region38: #{inpainting_net_forward.7} parent=5 // pred_check_branch
      %192 = sbr.rel (%p189) target = $region40
    $region39: #{inpainting_net_forward.7} parent=5 // pred_region
      %s193 = ssub.s32 %s11, 1
      %s194 = smul.u32 64, %s16
      %p195 = scmp.lt.s32.totalorder %s194, 255
      %s196 = scalar_select %p195, %s194, 255
      %s197 = smul.addr %s196, 4
      %s198 = scalar_lea.vmem %s0, %s197
      %p199 = pneg %p37
      %p200 = pneg %p34
      %p201 = pneg %p58
      %p202 = pneg %p55
      %p203 = pneg %p79
      %p204 = pneg %p76
      %p205 = pneg %p100
      %p206 = pneg %p97
      %p207 = pneg %p121
      %p208 = pneg %p118
      %p209 = pneg %p147
      %p210 = pneg %p144
      %s211 = smul.u32 64, %s16
      %p212 = scmp.lt.s32.totalorder %s211, 255
      %s213 = scalar_select %p212, %s211, 255
      %s214 = smul.addr %s213, 8
      %s215 = scalar_lea.vmem %s5, %s214
      %s216 = smul.u32 64, %s16
      %p217 = scmp.lt.s32.totalorder %s216, 255
      %s218 = scalar_select %p217, %s216, 255
      %s219 = smul.addr %s218, 4
      %s220 = scalar_lea.vmem %s0, %s219
      %s221 = smul.u32 64, %s16
      %s222 = smul.u32 64, %s16
      %p223 = scmp.lt.s32.totalorder %s222, 255
      %s224 = scalar_select %p223, %s222, 255
      %s225 = smul.addr %s224, 8
      %s226 = scalar_lea.vmem %s5, %s225
      %s227 = smul.u32 64, %s16
      %v228 = vld [vmem:[%s220] sm:$0xf]
      %v229 = vld [vmem:[%s220 + $0x4] sm:$0xf]
      %v230 = vld [vmem:[%s220 + $0x8] sm:$0xf]
      %v231 = vld [vmem:[%s220 + $0xc] sm:$0xf]
      %v232 = vld [vmem:[%s220 + $0x10] sm:$0xf]
      %v233 = vld [vmem:[%s220 + $0x14] sm:$0xf]
      %v234 = vld [vmem:[%s220 + $0x18] sm:$0xf]
      %v235 = vld [vmem:[%s220 + $0x1c] sm:$0xf]
      %v236 = vld [vmem:[%s220 + $0x20] sm:$0xf]
      %v237 = vld [vmem:[%s220 + $0x24] sm:$0xf]
      %v238 = vld [vmem:[%s220 + $0x28] sm:$0xf]
      %v239 = vld [vmem:[%s220 + $0x2c] sm:$0xf]
      %v240 = vld [vmem:[%s220 + $0x30] sm:$0xf]
      %v241 = vld [vmem:[%s220 + $0x34] sm:$0xf]
      %v242 = vld [vmem:[%s220 + $0x38] sm:$0xf]
      %v243 = vld [vmem:[%s220 + $0x3c] sm:$0xf]
      %v244 = vld [vmem:[%s220 + $0x40] sm:$0xf]
      %v245 = vld [vmem:[%s220 + $0x44] sm:$0xf]
      %v246 = vld [vmem:[%s220 + $0x48] sm:$0xf]
      %v247 = vld [vmem:[%s220 + $0x4c] sm:$0xf]
      %v248 = vld [vmem:[%s220 + $0x50] sm:$0xf]
      %v249 = vld [vmem:[%s220 + $0x54] sm:$0xf]
      %v250 = vld [vmem:[%s220 + $0x58] sm:$0xf]
      %v251 = vld [vmem:[%s220 + $0x5c] sm:$0xf]
      %v252 = vld [vmem:[%s220 + $0x60] sm:$0xf]
      %v253 = vld [vmem:[%s220 + $0x64] sm:$0xf]
      %v254 = vld [vmem:[%s220 + $0x68] sm:$0xf]
      %v255 = vld [vmem:[%s220 + $0x6c] sm:$0xf]
      %v256 = vld [vmem:[%s220 + $0x70] sm:$0xf]
      %v257 = vld [vmem:[%s220 + $0x74] sm:$0xf]
      %v258 = vld [vmem:[%s220 + $0x78] sm:$0xf]
      %v259 = vld [vmem:[%s220 + $0x7c] sm:$0xf]
      %v260 = vld [vmem:[%s220 + $0x80] sm:$0xf]
      %v261 = vld [vmem:[%s220 + $0x84] sm:$0xf]
      %v262 = vld [vmem:[%s220 + $0x88] sm:$0xf]
      %v263 = vld [vmem:[%s220 + $0x8c] sm:$0xf]
      %v264 = vld [vmem:[%s220 + $0x90] sm:$0xf]
      %v265 = vld [vmem:[%s220 + $0x94] sm:$0xf]
      %v266 = vld [vmem:[%s220 + $0x98] sm:$0xf]
      %v267 = vld [vmem:[%s220 + $0x9c] sm:$0xf]
      %v268 = vld [vmem:[%s220 + $0xa0] sm:$0xf]
      %v269 = vld [vmem:[%s220 + $0xa4] sm:$0xf]
      %v270 = vld [vmem:[%s220 + $0xa8] sm:$0xf]
      %v271 = vld [vmem:[%s220 + $0xac] sm:$0xf]
      %v272 = vld [vmem:[%s220 + $0xb0] sm:$0xf]
      %v273 = vld [vmem:[%s220 + $0xb4] sm:$0xf]
      %v274 = vld [vmem:[%s220 + $0xb8] sm:$0xf]
      %v275 = vld [vmem:[%s220 + $0xbc] sm:$0xf]
      %v276 = vld [vmem:[%s220 + $0xc0] sm:$0xf]
      %v277 = vld [vmem:[%s220 + $0xc4] sm:$0xf]
      %v278 = vld [vmem:[%s220 + $0xc8] sm:$0xf]
      %v279 = vld [vmem:[%s220 + $0xcc] sm:$0xf]
      %v280 = vld [vmem:[%s220 + $0xd0] sm:$0xf]
      %v281 = vld [vmem:[%s220 + $0xd4] sm:$0xf]
      %v282 = vld [vmem:[%s220 + $0xd8] sm:$0xf]
      %v283 = vld [vmem:[%s220 + $0xdc] sm:$0xf]
      %v284 = vld [vmem:[%s220 + $0xe0] sm:$0xf]
      %v285 = vld [vmem:[%s220 + $0xe4] sm:$0xf]
      %v286 = vld [vmem:[%s220 + $0xe8] sm:$0xf]
      %v287 = vld [vmem:[%s220 + $0xec] sm:$0xf]
      %v288 = vld [vmem:[%s220 + $0xf0] sm:$0xf]
      %v289 = vld [vmem:[%s220 + $0xf4] sm:$0xf]
      %v290 = vld [vmem:[%s220 + $0xf8] sm:$0xf]
      %v291 = vld [vmem:[%s220 + $0xfc] sm:$0xf]
      %v292 = vunpack.c.l.bf16 %v228
      %v293 = vunpack.c.l.bf16 %v229
      %v294 = vunpack.c.l.bf16 %v230
      %v295 = vunpack.c.l.bf16 %v231
      %v296 = vunpack.c.l.bf16 %v232
      %v297 = vunpack.c.l.bf16 %v233
      %v298 = vunpack.c.l.bf16 %v234
      %v299 = vunpack.c.l.bf16 %v235
      %v300 = vunpack.c.l.bf16 %v236
      %v301 = vunpack.c.l.bf16 %v237
      %v302 = vunpack.c.l.bf16 %v238
      %v303 = vunpack.c.l.bf16 %v239
      %v304 = vunpack.c.l.bf16 %v240
      %v305 = vunpack.c.l.bf16 %v241
      %v306 = vunpack.c.l.bf16 %v242
      %v307 = vunpack.c.l.bf16 %v243
      %v308 = vunpack.c.l.bf16 %v244
      %v309 = vunpack.c.l.bf16 %v245
      %v310 = vunpack.c.l.bf16 %v246
      %v311 = vunpack.c.l.bf16 %v247
      %v312 = vunpack.c.l.bf16 %v248
      %v313 = vunpack.c.l.bf16 %v249
      %v314 = vunpack.c.l.bf16 %v250
      %v315 = vunpack.c.l.bf16 %v251
      %v316 = vunpack.c.l.bf16 %v252
      %v317 = vunpack.c.l.bf16 %v253
      %v318 = vunpack.c.l.bf16 %v254
      %v319 = vunpack.c.l.bf16 %v255
      %v320 = vunpack.c.l.bf16 %v256
      %v321 = vunpack.c.l.bf16 %v257
      %v322 = vunpack.c.l.bf16 %v258
      %v323 = vunpack.c.l.bf16 %v259
      %v324 = vunpack.c.l.bf16 %v260
      %v325 = vunpack.c.l.bf16 %v261
      %v326 = vunpack.c.l.bf16 %v262
      %v327 = vunpack.c.l.bf16 %v263
      %v328 = vunpack.c.l.bf16 %v264
      %v329 = vunpack.c.l.bf16 %v265
      %v330 = vunpack.c.l.bf16 %v266
      %v331 = vunpack.c.l.bf16 %v267
      %v332 = vunpack.c.l.bf16 %v268
      %v333 = vunpack.c.l.bf16 %v269
      %v334 = vunpack.c.l.bf16 %v270
      %v335 = vunpack.c.l.bf16 %v271
      %v336 = vunpack.c.l.bf16 %v272
      %v337 = vunpack.c.l.bf16 %v273
      %v338 = vunpack.c.l.bf16 %v274
      %v339 = vunpack.c.l.bf16 %v275
      %v340 = vunpack.c.l.bf16 %v276
      %v341 = vunpack.c.l.bf16 %v277
      %v342 = vunpack.c.l.bf16 %v278
      %v343 = vunpack.c.l.bf16 %v279
      %v344 = vunpack.c.l.bf16 %v280
      %v345 = vunpack.c.l.bf16 %v281
      %v346 = vunpack.c.l.bf16 %v282
      %v347 = vunpack.c.l.bf16 %v283
      %v348 = vunpack.c.l.bf16 %v284
      %v349 = vunpack.c.l.bf16 %v285
      %v350 = vunpack.c.l.bf16 %v286
      %v351 = vunpack.c.l.bf16 %v287
      %v352 = vunpack.c.l.bf16 %v288
      %v353 = vunpack.c.l.bf16 %v289
      %v354 = vunpack.c.l.bf16 %v290
      %v355 = vunpack.c.l.bf16 %v291
      %v356 = vld [vmem:[%s1] sm:$0x1]
      %v358 = vperm.slane %v356, 0
      %v360 = vmul.f32 %v292, %v358
      %v361 = vmul.f32 %v293, %v358
      %v362 = vmul.f32 %v294, %v358
      %v363 = vmul.f32 %v295, %v358
      %v364 = vmul.f32 %v296, %v358
      %v365 = vmul.f32 %v297, %v358
      %v366 = vmul.f32 %v298, %v358
      %v367 = vmul.f32 %v299, %v358
      %v368 = vmul.f32 %v300, %v358
      %v369 = vmul.f32 %v301, %v358
      %v370 = vmul.f32 %v302, %v358
      %v371 = vmul.f32 %v303, %v358
      %v372 = vmul.f32 %v304, %v358
      %v373 = vmul.f32 %v305, %v358
      %v374 = vmul.f32 %v306, %v358
      %v375 = vmul.f32 %v307, %v358
      %v376 = vmul.f32 %v308, %v358
      %v377 = vmul.f32 %v309, %v358
      %v378 = vmul.f32 %v310, %v358
      %v379 = vmul.f32 %v311, %v358
      %v380 = vmul.f32 %v312, %v358
      %v381 = vmul.f32 %v313, %v358
      %v382 = vmul.f32 %v314, %v358
      %v383 = vmul.f32 %v315, %v358
      %v384 = vmul.f32 %v316, %v358
      %v385 = vmul.f32 %v317, %v358
      %v386 = vmul.f32 %v318, %v358
      %v387 = vmul.f32 %v319, %v358
      %v388 = vmul.f32 %v320, %v358
      %v389 = vmul.f32 %v321, %v358
      %v390 = vmul.f32 %v322, %v358
      %v391 = vmul.f32 %v323, %v358
      %v392 = vmul.f32 %v324, %v358
      %v393 = vmul.f32 %v325, %v358
      %v394 = vmul.f32 %v326, %v358
      %v395 = vmul.f32 %v327, %v358
      %v396 = vmul.f32 %v328, %v358
      %v397 = vmul.f32 %v329, %v358
      %v398 = vmul.f32 %v330, %v358
      %v399 = vmul.f32 %v331, %v358
      %v400 = vmul.f32 %v332, %v358
      %v401 = vmul.f32 %v333, %v358
      %v402 = vmul.f32 %v334, %v358
      %v403 = vmul.f32 %v335, %v358
      %v404 = vmul.f32 %v336, %v358
      %v405 = vmul.f32 %v337, %v358
      %v406 = vmul.f32 %v338, %v358
      %v407 = vmul.f32 %v339, %v358
      %v408 = vmul.f32 %v340, %v358
      %v409 = vmul.f32 %v341, %v358
      %v410 = vmul.f32 %v342, %v358
      %v411 = vmul.f32 %v343, %v358
      %v412 = vmul.f32 %v344, %v358
      %v413 = vmul.f32 %v345, %v358
      %v414 = vmul.f32 %v346, %v358
      %v415 = vmul.f32 %v347, %v358
      %v416 = vmul.f32 %v348, %v358
      %v417 = vmul.f32 %v349, %v358
      %v418 = vmul.f32 %v350, %v358
      %v419 = vmul.f32 %v351, %v358
      %v420 = vmul.f32 %v352, %v358
      %v421 = vmul.f32 %v353, %v358
      %v422 = vmul.f32 %v354, %v358
      %v423 = vmul.f32 %v355, %v358
      %v424 = vld [vmem:[%s2] sm:$0x1]
      %v426 = vperm.slane %v424, 0
      %v428 = vadd.f32 %v360, %v426
      %v429 = vadd.f32 %v361, %v426
      %v430 = vadd.f32 %v362, %v426
      %v431 = vadd.f32 %v363, %v426
      %v432 = vadd.f32 %v364, %v426
      %v433 = vadd.f32 %v365, %v426
      %v434 = vadd.f32 %v366, %v426
      %v435 = vadd.f32 %v367, %v426
      %v436 = vadd.f32 %v368, %v426
      %v437 = vadd.f32 %v369, %v426
      %v438 = vadd.f32 %v370, %v426
      %v439 = vadd.f32 %v371, %v426
      %v440 = vadd.f32 %v372, %v426
      %v441 = vadd.f32 %v373, %v426
      %v442 = vadd.f32 %v374, %v426
      %v443 = vadd.f32 %v375, %v426
      %v444 = vadd.f32 %v376, %v426
      %v445 = vadd.f32 %v377, %v426
      %v446 = vadd.f32 %v378, %v426
      %v447 = vadd.f32 %v379, %v426
      %v448 = vadd.f32 %v380, %v426
      %v449 = vadd.f32 %v381, %v426
      %v450 = vadd.f32 %v382, %v426
      %v451 = vadd.f32 %v383, %v426
      %v452 = vadd.f32 %v384, %v426
      %v453 = vadd.f32 %v385, %v426
      %v454 = vadd.f32 %v386, %v426
      %v455 = vadd.f32 %v387, %v426
      %v456 = vadd.f32 %v388, %v426
      %v457 = vadd.f32 %v389, %v426
      %v458 = vadd.f32 %v390, %v426
      %v459 = vadd.f32 %v391, %v426
      %v460 = vadd.f32 %v392, %v426
      %v461 = vadd.f32 %v393, %v426
      %v462 = vadd.f32 %v394, %v426
      %v463 = vadd.f32 %v395, %v426
      %v464 = vadd.f32 %v396, %v426
      %v465 = vadd.f32 %v397, %v426
      %v466 = vadd.f32 %v398, %v426
      %v467 = vadd.f32 %v399, %v426
      %v468 = vadd.f32 %v400, %v426
      %v469 = vadd.f32 %v401, %v426
      %v470 = vadd.f32 %v402, %v426
      %v471 = vadd.f32 %v403, %v426
      %v472 = vadd.f32 %v404, %v426
      %v473 = vadd.f32 %v405, %v426
      %v474 = vadd.f32 %v406, %v426
      %v475 = vadd.f32 %v407, %v426
      %v476 = vadd.f32 %v408, %v426
      %v477 = vadd.f32 %v409, %v426
      %v478 = vadd.f32 %v410, %v426
      %v479 = vadd.f32 %v411, %v426
      %v480 = vadd.f32 %v412, %v426
      %v481 = vadd.f32 %v413, %v426
      %v482 = vadd.f32 %v414, %v426
      %v483 = vadd.f32 %v415, %v426
      %v484 = vadd.f32 %v416, %v426
      %v485 = vadd.f32 %v417, %v426
      %v486 = vadd.f32 %v418, %v426
      %v487 = vadd.f32 %v419, %v426
      %v488 = vadd.f32 %v420, %v426
      %v489 = vadd.f32 %v421, %v426
      %v490 = vadd.f32 %v422, %v426
      %v491 = vadd.f32 %v423, %v426
      %vm492 = vcmp.ge.f32.partialorder %v428, 0.0
      %vm493 = vcmp.ge.f32.partialorder %v429, 0.0
      %vm494 = vcmp.ge.f32.partialorder %v430, 0.0
      %vm495 = vcmp.ge.f32.partialorder %v431, 0.0
      %vm496 = vcmp.ge.f32.partialorder %v432, 0.0
      %vm497 = vcmp.ge.f32.partialorder %v433, 0.0
      %vm498 = vcmp.ge.f32.partialorder %v434, 0.0
      %vm499 = vcmp.ge.f32.partialorder %v435, 0.0
      %vm500 = vcmp.ge.f32.partialorder %v436, 0.0
      %vm501 = vcmp.ge.f32.partialorder %v437, 0.0
      %vm502 = vcmp.ge.f32.partialorder %v438, 0.0
      %vm503 = vcmp.ge.f32.partialorder %v439, 0.0
      %vm504 = vcmp.ge.f32.partialorder %v440, 0.0
      %vm505 = vcmp.ge.f32.partialorder %v441, 0.0
      %vm506 = vcmp.ge.f32.partialorder %v442, 0.0
      %vm507 = vcmp.ge.f32.partialorder %v443, 0.0
      %vm508 = vcmp.ge.f32.partialorder %v444, 0.0
      %vm509 = vcmp.ge.f32.partialorder %v445, 0.0
      %vm510 = vcmp.ge.f32.partialorder %v446, 0.0
      %vm511 = vcmp.ge.f32.partialorder %v447, 0.0
      %vm512 = vcmp.ge.f32.partialorder %v448, 0.0
      %vm513 = vcmp.ge.f32.partialorder %v449, 0.0
      %vm514 = vcmp.ge.f32.partialorder %v450, 0.0
      %vm515 = vcmp.ge.f32.partialorder %v451, 0.0
      %vm516 = vcmp.ge.f32.partialorder %v452, 0.0
      %vm517 = vcmp.ge.f32.partialorder %v453, 0.0
      %vm518 = vcmp.ge.f32.partialorder %v454, 0.0
      %vm519 = vcmp.ge.f32.partialorder %v455, 0.0
      %vm520 = vcmp.ge.f32.partialorder %v456, 0.0
      %vm521 = vcmp.ge.f32.partialorder %v457, 0.0
      %vm522 = vcmp.ge.f32.partialorder %v458, 0.0
      %vm523 = vcmp.ge.f32.partialorder %v459, 0.0
      %vm524 = vcmp.ge.f32.partialorder %v460, 0.0
      %vm525 = vcmp.ge.f32.partialorder %v461, 0.0
      %vm526 = vcmp.ge.f32.partialorder %v462, 0.0
      %vm527 = vcmp.ge.f32.partialorder %v463, 0.0
      %vm528 = vcmp.ge.f32.partialorder %v464, 0.0
      %vm529 = vcmp.ge.f32.partialorder %v465, 0.0
      %vm530 = vcmp.ge.f32.partialorder %v466, 0.0
      %vm531 = vcmp.ge.f32.partialorder %v467, 0.0
      %vm532 = vcmp.ge.f32.partialorder %v468, 0.0
      %vm533 = vcmp.ge.f32.partialorder %v469, 0.0
      %vm534 = vcmp.ge.f32.partialorder %v470, 0.0
      %vm535 = vcmp.ge.f32.partialorder %v471, 0.0
      %vm536 = vcmp.ge.f32.partialorder %v472, 0.0
      %vm537 = vcmp.ge.f32.partialorder %v473, 0.0
      %vm538 = vcmp.ge.f32.partialorder %v474, 0.0
      %vm539 = vcmp.ge.f32.partialorder %v475, 0.0
      %vm540 = vcmp.ge.f32.partialorder %v476, 0.0
      %vm541 = vcmp.ge.f32.partialorder %v477, 0.0
      %vm542 = vcmp.ge.f32.partialorder %v478, 0.0
      %vm543 = vcmp.ge.f32.partialorder %v479, 0.0
      %vm544 = vcmp.ge.f32.partialorder %v480, 0.0
      %vm545 = vcmp.ge.f32.partialorder %v481, 0.0
      %vm546 = vcmp.ge.f32.partialorder %v482, 0.0
      %vm547 = vcmp.ge.f32.partialorder %v483, 0.0
      %vm548 = vcmp.ge.f32.partialorder %v484, 0.0
      %vm549 = vcmp.ge.f32.partialorder %v485, 0.0
      %vm550 = vcmp.ge.f32.partialorder %v486, 0.0
      %vm551 = vcmp.ge.f32.partialorder %v487, 0.0
      %vm552 = vcmp.ge.f32.partialorder %v488, 0.0
      %vm553 = vcmp.ge.f32.partialorder %v489, 0.0
      %vm554 = vcmp.ge.f32.partialorder %v490, 0.0
      %vm555 = vcmp.ge.f32.partialorder %v491, 0.0
      %v556 = vmul.f32 %v428, 0.01
      %v557 = vmul.f32 %v429, 0.01
      %v558 = vmul.f32 %v430, 0.01
      %v559 = vmul.f32 %v431, 0.01
      %v560 = vmul.f32 %v432, 0.01
      %v561 = vmul.f32 %v433, 0.01
      %v562 = vmul.f32 %v434, 0.01
      %v563 = vmul.f32 %v435, 0.01
      %v564 = vmul.f32 %v436, 0.01
      %v565 = vmul.f32 %v437, 0.01
      %v566 = vmul.f32 %v438, 0.01
      %v567 = vmul.f32 %v439, 0.01
      %v568 = vmul.f32 %v440, 0.01
      %v569 = vmul.f32 %v441, 0.01
      %v570 = vmul.f32 %v442, 0.01
      %v571 = vmul.f32 %v443, 0.01
      %v572 = vmul.f32 %v444, 0.01
      %v573 = vmul.f32 %v445, 0.01
      %v574 = vmul.f32 %v446, 0.01
      %v575 = vmul.f32 %v447, 0.01
      %v576 = vmul.f32 %v448, 0.01
      %v577 = vmul.f32 %v449, 0.01
      %v578 = vmul.f32 %v450, 0.01
      %v579 = vmul.f32 %v451, 0.01
      %v580 = vmul.f32 %v452, 0.01
      %v581 = vmul.f32 %v453, 0.01
      %v582 = vmul.f32 %v454, 0.01
      %v583 = vmul.f32 %v455, 0.01
      %v584 = vmul.f32 %v456, 0.01
      %v585 = vmul.f32 %v457, 0.01
      %v586 = vmul.f32 %v458, 0.01
      %v587 = vmul.f32 %v459, 0.01
      %v588 = vmul.f32 %v460, 0.01
      %v589 = vmul.f32 %v461, 0.01
      %v590 = vmul.f32 %v462, 0.01
      %v591 = vmul.f32 %v463, 0.01
      %v592 = vmul.f32 %v464, 0.01
      %v593 = vmul.f32 %v465, 0.01
      %v594 = vmul.f32 %v466, 0.01
      %v595 = vmul.f32 %v467, 0.01
      %v596 = vmul.f32 %v468, 0.01
      %v597 = vmul.f32 %v469, 0.01
      %v598 = vmul.f32 %v470, 0.01
      %v599 = vmul.f32 %v471, 0.01
      %v600 = vmul.f32 %v472, 0.01
      %v601 = vmul.f32 %v473, 0.01
      %v602 = vmul.f32 %v474, 0.01
      %v603 = vmul.f32 %v475, 0.01
      %v604 = vmul.f32 %v476, 0.01
      %v605 = vmul.f32 %v477, 0.01
      %v606 = vmul.f32 %v478, 0.01
      %v607 = vmul.f32 %v479, 0.01
      %v608 = vmul.f32 %v480, 0.01
      %v609 = vmul.f32 %v481, 0.01
      %v610 = vmul.f32 %v482, 0.01
      %v611 = vmul.f32 %v483, 0.01
      %v612 = vmul.f32 %v484, 0.01
      %v613 = vmul.f32 %v485, 0.01
      %v614 = vmul.f32 %v486, 0.01
      %v615 = vmul.f32 %v487, 0.01
      %v616 = vmul.f32 %v488, 0.01
      %v617 = vmul.f32 %v489, 0.01
      %v618 = vmul.f32 %v490, 0.01
      %v619 = vmul.f32 %v491, 0.01
      %v620 = vsel %vm492, %v428, %v556
      %v621 = vsel %vm493, %v429, %v557
      %v622 = vsel %vm494, %v430, %v558
      %v623 = vsel %vm495, %v431, %v559
      %v624 = vsel %vm496, %v432, %v560
      %v625 = vsel %vm497, %v433, %v561
      %v626 = vsel %vm498, %v434, %v562
      %v627 = vsel %vm499, %v435, %v563
      %v628 = vsel %vm500, %v436, %v564
      %v629 = vsel %vm501, %v437, %v565
      %v630 = vsel %vm502, %v438, %v566
      %v631 = vsel %vm503, %v439, %v567
      %v632 = vsel %vm504, %v440, %v568
      %v633 = vsel %vm505, %v441, %v569
      %v634 = vsel %vm506, %v442, %v570
      %v635 = vsel %vm507, %v443, %v571
      %v636 = vsel %vm508, %v444, %v572
      %v637 = vsel %vm509, %v445, %v573
      %v638 = vsel %vm510, %v446, %v574
      %v639 = vsel %vm511, %v447, %v575
      %v640 = vsel %vm512, %v448, %v576
      %v641 = vsel %vm513, %v449, %v577
      %v642 = vsel %vm514, %v450, %v578
      %v643 = vsel %vm515, %v451, %v579
      %v644 = vsel %vm516, %v452, %v580
      %v645 = vsel %vm517, %v453, %v581
      %v646 = vsel %vm518, %v454, %v582
      %v647 = vsel %vm519, %v455, %v583
      %v648 = vsel %vm520, %v456, %v584
      %v649 = vsel %vm521, %v457, %v585
      %v650 = vsel %vm522, %v458, %v586
      %v651 = vsel %vm523, %v459, %v587
      %v652 = vsel %vm524, %v460, %v588
      %v653 = vsel %vm525, %v461, %v589
      %v654 = vsel %vm526, %v462, %v590
      %v655 = vsel %vm527, %v463, %v591
      %v656 = vsel %vm528, %v464, %v592
      %v657 = vsel %vm529, %v465, %v593
      %v658 = vsel %vm530, %v466, %v594
      %v659 = vsel %vm531, %v467, %v595
      %v660 = vsel %vm532, %v468, %v596
      %v661 = vsel %vm533, %v469, %v597
      %v662 = vsel %vm534, %v470, %v598
      %v663 = vsel %vm535, %v471, %v599
      %v664 = vsel %vm536, %v472, %v600
      %v665 = vsel %vm537, %v473, %v601
      %v666 = vsel %vm538, %v474, %v602
      %v667 = vsel %vm539, %v475, %v603
      %v668 = vsel %vm540, %v476, %v604
      %v669 = vsel %vm541, %v477, %v605
      %v670 = vsel %vm542, %v478, %v606
      %v671 = vsel %vm543, %v479, %v607
      %v672 = vsel %vm544, %v480, %v608
      %v673 = vsel %vm545, %v481, %v609
      %v674 = vsel %vm546, %v482, %v610
      %v675 = vsel %vm547, %v483, %v611
      %v676 = vsel %vm548, %v484, %v612
      %v677 = vsel %vm549, %v485, %v613
      %v678 = vsel %vm550, %v486, %v614
      %v679 = vsel %vm551, %v487, %v615
      %v680 = vsel %vm552, %v488, %v616
      %v681 = vsel %vm553, %v489, %v617
      %v682 = vsel %vm554, %v490, %v618
      %v683 = vsel %vm555, %v491, %v619
      %v684 = vpack.c.bf16 %v621, %v620
      %v685 = vpack.c.bf16 %v623, %v622
      %v686 = vpack.c.bf16 %v625, %v624
      %v687 = vpack.c.bf16 %v627, %v626
      %v688 = vpack.c.bf16 %v629, %v628
      %v689 = vpack.c.bf16 %v631, %v630
      %v690 = vpack.c.bf16 %v633, %v632
      %v691 = vpack.c.bf16 %v635, %v634
      %v692 = vpack.c.bf16 %v637, %v636
      %v693 = vpack.c.bf16 %v639, %v638
      %v694 = vpack.c.bf16 %v641, %v640
      %v695 = vpack.c.bf16 %v643, %v642
      %v696 = vpack.c.bf16 %v645, %v644
      %v697 = vpack.c.bf16 %v647, %v646
      %v698 = vpack.c.bf16 %v649, %v648
      %v699 = vpack.c.bf16 %v651, %v650
      %v700 = vpack.c.bf16 %v653, %v652
      %v701 = vpack.c.bf16 %v655, %v654
      %v702 = vpack.c.bf16 %v657, %v656
      %v703 = vpack.c.bf16 %v659, %v658
      %v704 = vpack.c.bf16 %v661, %v660
      %v705 = vpack.c.bf16 %v663, %v662
      %v706 = vpack.c.bf16 %v665, %v664
      %v707 = vpack.c.bf16 %v667, %v666
      %v708 = vpack.c.bf16 %v669, %v668
      %v709 = vpack.c.bf16 %v671, %v670
      %v710 = vpack.c.bf16 %v673, %v672
      %v711 = vpack.c.bf16 %v675, %v674
      %v712 = vpack.c.bf16 %v677, %v676
      %v713 = vpack.c.bf16 %v679, %v678
      %v714 = vpack.c.bf16 %v681, %v680
      %v715 = vpack.c.bf16 %v683, %v682
      %v716 = vld [vmem:[%s3] sm:$0xf]
      %v717 = vld [vmem:[%s3 + $0x4] sm:$0xf]
      %v718 = vld [vmem:[%s3 + $0x8] sm:$0xf]
      %v719 = vld [vmem:[%s3 + $0xc] sm:$0xf]
      %v720 = vld [vmem:[%s3 + $0x10] sm:$0xf]
      %v721 = vld [vmem:[%s3 + $0x14] sm:$0xf]
      %v722 = vld [vmem:[%s3 + $0x18] sm:$0xf]
      %v723 = vld [vmem:[%s3 + $0x1c] sm:$0xf]
      %v724 = vld [vmem:[%s3 + $0x20] sm:$0xf]
      %v725 = vld [vmem:[%s3 + $0x24] sm:$0xf]
      %v726 = vld [vmem:[%s3 + $0x28] sm:$0xf]
      %v727 = vld [vmem:[%s3 + $0x2c] sm:$0xf]
      %v728 = vld [vmem:[%s3 + $0x30] sm:$0xf]
      %v729 = vld [vmem:[%s3 + $0x34] sm:$0xf]
      %v730 = vld [vmem:[%s3 + $0x38] sm:$0xf]
      %v731 = vld [vmem:[%s3 + $0x3c] sm:$0xf]
      %v732 = vld [vmem:[%s4] sm:$0x1]
      %v734 = vperm.slane %v732, 0
      %v752 = vunpack.c.l.b16 %v716
      %v753 = vunpack.c.l.b16 %v717
      %v754 = vunpack.c.l.b16 %v718
      %v755 = vunpack.c.l.b16 %v719
      %v756 = vunpack.c.l.b16 %v720
      %v757 = vunpack.c.l.b16 %v721
      %v758 = vunpack.c.l.b16 %v722
      %v759 = vunpack.c.l.b16 %v723
      %v760 = vunpack.c.l.b16 %v724
      %v761 = vunpack.c.l.b16 %v725
      %v762 = vunpack.c.l.b16 %v726
      %v763 = vunpack.c.l.b16 %v727
      %v764 = vunpack.c.l.b16 %v728
      %v765 = vunpack.c.l.b16 %v729
      %v766 = vunpack.c.l.b16 %v730
      %v767 = vunpack.c.l.b16 %v731
      %v768 = vpack.c.b16 %v753, %v752
      %v769 = vpack.c.b16 %v755, %v754
      %v770 = vpack.c.b16 %v757, %v756
      %v771 = vpack.c.b16 %v759, %v758
      %v772 = vpack.c.b16 %v761, %v760
      %v773 = vpack.c.b16 %v763, %v762
      %v774 = vpack.c.b16 %v765, %v764
      %v775 = vpack.c.b16 %v767, %v766
      %784 = vmatpush.bf16.msra.mxu0 %v775
      %785 = vmatpush.bf16.msra.mxu0 %v774
      %786 = vmatpush.bf16.msra.mxu0 %v773
      %787 = vmatpush.bf16.msra.mxu0 %v772
      %788 = vmatpush.bf16.msra.mxu0 %v771
      %789 = vmatpush.bf16.msra.mxu0 %v770
      %790 = vmatpush.bf16.msra.mxu0 %v769
      %791 = vmatpush.bf16.msra.mxu0 %v768
      %792 = vmatmul.bf16.gmra.mxu0 %v684
      %v793 = vpop.f32.mrf.mxu0
      %v794 = vadd.f32 %v734, %v793
      %v795 = vpop.f32.mrf.mxu0
      %v796 = vadd.f32 %v734, %v795
      %797 = vmatmul.bf16.gmra.mxu0 %v685
      %v798 = vpop.f32.mrf.mxu0
      %v799 = vadd.f32 %v734, %v798
      %v800 = vpop.f32.mrf.mxu0
      %v801 = vadd.f32 %v734, %v800
      %802 = vmatmul.bf16.gmra.mxu0 %v686
      %v803 = vpop.f32.mrf.mxu0
      %v804 = vadd.f32 %v734, %v803
      %v805 = vpop.f32.mrf.mxu0
      %v806 = vadd.f32 %v734, %v805
      %807 = vmatmul.bf16.gmra.mxu0 %v687
      %v808 = vpop.f32.mrf.mxu0
      %v809 = vadd.f32 %v734, %v808
      %v810 = vpop.f32.mrf.mxu0
      %v811 = vadd.f32 %v734, %v810
      %812 = vmatmul.bf16.gmra.mxu0 %v688
      %v813 = vpop.f32.mrf.mxu0
      %v814 = vadd.f32 %v734, %v813
      %v815 = vpop.f32.mrf.mxu0
      %v816 = vadd.f32 %v734, %v815
      %817 = vmatmul.bf16.gmra.mxu0 %v689
      %v818 = vpop.f32.mrf.mxu0
      %v819 = vadd.f32 %v734, %v818
      %v820 = vpop.f32.mrf.mxu0
      %v821 = vadd.f32 %v734, %v820
      %822 = vmatmul.bf16.gmra.mxu0 %v690
      %v823 = vpop.f32.mrf.mxu0
      %v824 = vadd.f32 %v734, %v823
      %v825 = vpop.f32.mrf.mxu0
      %v826 = vadd.f32 %v734, %v825
      %827 = vmatmul.bf16.gmra.mxu0 %v691
      %v828 = vpop.f32.mrf.mxu0
      %v829 = vadd.f32 %v734, %v828
      %v830 = vpop.f32.mrf.mxu0
      %v831 = vadd.f32 %v734, %v830
      %832 = vmatmul.bf16.gmra.mxu0 %v692
      %v833 = vpop.f32.mrf.mxu0
      %v834 = vadd.f32 %v734, %v833
      %v835 = vpop.f32.mrf.mxu0
      %v836 = vadd.f32 %v734, %v835
      %837 = vmatmul.bf16.gmra.mxu0 %v693
      %v838 = vpop.f32.mrf.mxu0
      %v839 = vadd.f32 %v734, %v838
      %v840 = vpop.f32.mrf.mxu0
      %v841 = vadd.f32 %v734, %v840
      %842 = vmatmul.bf16.gmra.mxu0 %v694
      %v843 = vpop.f32.mrf.mxu0
      %v844 = vadd.f32 %v734, %v843
      %v845 = vpop.f32.mrf.mxu0
      %v846 = vadd.f32 %v734, %v845
      %847 = vmatmul.bf16.gmra.mxu0 %v695
      %v848 = vpop.f32.mrf.mxu0
      %v849 = vadd.f32 %v734, %v848
      %v850 = vpop.f32.mrf.mxu0
      %v851 = vadd.f32 %v734, %v850
      %852 = vmatmul.bf16.gmra.mxu0 %v696
      %v853 = vpop.f32.mrf.mxu0
      %v854 = vadd.f32 %v734, %v853
      %v855 = vpop.f32.mrf.mxu0
      %v856 = vadd.f32 %v734, %v855
      %857 = vmatmul.bf16.gmra.mxu0 %v697
      %v858 = vpop.f32.mrf.mxu0
      %v859 = vadd.f32 %v734, %v858
      %v860 = vpop.f32.mrf.mxu0
      %v861 = vadd.f32 %v734, %v860
      %862 = vmatmul.bf16.gmra.mxu0 %v698
      %v863 = vpop.f32.mrf.mxu0
      %v864 = vadd.f32 %v734, %v863
      %v865 = vpop.f32.mrf.mxu0
      %v866 = vadd.f32 %v734, %v865
      %867 = vmatmul.bf16.gmra.mxu0 %v699
      %v868 = vpop.f32.mrf.mxu0
      %v869 = vadd.f32 %v734, %v868
      %v870 = vpop.f32.mrf.mxu0
      %v871 = vadd.f32 %v734, %v870
      %872 = vmatmul.bf16.gmra.mxu0 %v700
      %v873 = vpop.f32.mrf.mxu0
      %v874 = vadd.f32 %v734, %v873
      %v875 = vpop.f32.mrf.mxu0
      %v876 = vadd.f32 %v734, %v875
      %877 = vmatmul.bf16.gmra.mxu0 %v701
      %v878 = vpop.f32.mrf.mxu0
      %v879 = vadd.f32 %v734, %v878
      %v880 = vpop.f32.mrf.mxu0
      %v881 = vadd.f32 %v734, %v880
      %882 = vmatmul.bf16.gmra.mxu0 %v702
      %v883 = vpop.f32.mrf.mxu0
      %v884 = vadd.f32 %v734, %v883
      %v885 = vpop.f32.mrf.mxu0
      %v886 = vadd.f32 %v734, %v885
      %887 = vmatmul.bf16.gmra.mxu0 %v703
      %v888 = vpop.f32.mrf.mxu0
      %v889 = vadd.f32 %v734, %v888
      %v890 = vpop.f32.mrf.mxu0
      %v891 = vadd.f32 %v734, %v890
      %892 = vmatmul.bf16.gmra.mxu0 %v704
      %v893 = vpop.f32.mrf.mxu0
      %v894 = vadd.f32 %v734, %v893
      %v895 = vpop.f32.mrf.mxu0
      %v896 = vadd.f32 %v734, %v895
      %897 = vmatmul.bf16.gmra.mxu0 %v705
      %v898 = vpop.f32.mrf.mxu0
      %v899 = vadd.f32 %v734, %v898
      %v900 = vpop.f32.mrf.mxu0
      %v901 = vadd.f32 %v734, %v900
      %902 = vmatmul.bf16.gmra.mxu0 %v706
      %v903 = vpop.f32.mrf.mxu0
      %v904 = vadd.f32 %v734, %v903
      %v905 = vpop.f32.mrf.mxu0
      %v906 = vadd.f32 %v734, %v905
      %907 = vmatmul.bf16.gmra.mxu0 %v707
      %v908 = vpop.f32.mrf.mxu0
      %v909 = vadd.f32 %v734, %v908
      %v910 = vpop.f32.mrf.mxu0
      %v911 = vadd.f32 %v734, %v910
      %912 = vmatmul.bf16.gmra.mxu0 %v708
      %v913 = vpop.f32.mrf.mxu0
      %v914 = vadd.f32 %v734, %v913
      %v915 = vpop.f32.mrf.mxu0
      %v916 = vadd.f32 %v734, %v915
      %917 = vmatmul.bf16.gmra.mxu0 %v709
      %v918 = vpop.f32.mrf.mxu0
      %v919 = vadd.f32 %v734, %v918
      %v920 = vpop.f32.mrf.mxu0
      %v921 = vadd.f32 %v734, %v920
      %922 = vmatmul.bf16.gmra.mxu0 %v710
      %v923 = vpop.f32.mrf.mxu0
      %v924 = vadd.f32 %v734, %v923
      %v925 = vpop.f32.mrf.mxu0
      %v926 = vadd.f32 %v734, %v925
      %927 = vmatmul.bf16.gmra.mxu0 %v711
      %v928 = vpop.f32.mrf.mxu0
      %v929 = vadd.f32 %v734, %v928
      %v930 = vpop.f32.mrf.mxu0
      %v931 = vadd.f32 %v734, %v930
      %932 = vmatmul.bf16.gmra.mxu0 %v712
      %v933 = vpop.f32.mrf.mxu0
      %v934 = vadd.f32 %v734, %v933
      %v935 = vpop.f32.mrf.mxu0
      %v936 = vadd.f32 %v734, %v935
      %937 = vmatmul.bf16.gmra.mxu0 %v713
      %v938 = vpop.f32.mrf.mxu0
      %v939 = vadd.f32 %v734, %v938
      %v940 = vpop.f32.mrf.mxu0
      %v941 = vadd.f32 %v734, %v940
      %942 = vmatmul.bf16.gmra.mxu0 %v714
      %v943 = vpop.f32.mrf.mxu0
      %v944 = vadd.f32 %v734, %v943
      %v945 = vpop.f32.mrf.mxu0
      %v946 = vadd.f32 %v734, %v945
      %947 = vmatmul.bf16.gmra.mxu0 %v715
      %v948 = vpop.f32.mrf.mxu0
      %v949 = vadd.f32 %v734, %v948
      %v950 = vpop.f32.mrf.mxu0
      %v951 = vadd.f32 %v734, %v950
      %952 = vdwg.mxu0
      %953 = vst [vmem:[%s226] sm:$0xff] %v794
      %954 = vst [vmem:[%s226 + $0x8] sm:$0xff] %v796
      %955 = vst [vmem:[%s226 + $0x10] sm:$0xff] %v799
      %956 = vst [vmem:[%s226 + $0x18] sm:$0xff] %v801
      %957 = vst [vmem:[%s226 + $0x20] sm:$0xff] %v804
      %958 = vst [vmem:[%s226 + $0x28] sm:$0xff] %v806
      %959 = vst [vmem:[%s226 + $0x30] sm:$0xff] %v809
      %960 = vst [vmem:[%s226 + $0x38] sm:$0xff] %v811
      %961 = vst [vmem:[%s226 + $0x40] sm:$0xff] %v814
      %962 = vst [vmem:[%s226 + $0x48] sm:$0xff] %v816
      %963 = vst [vmem:[%s226 + $0x50] sm:$0xff] %v819
      %964 = vst [vmem:[%s226 + $0x58] sm:$0xff] %v821
      %965 = vst [vmem:[%s226 + $0x60] sm:$0xff] %v824
      %966 = vst [vmem:[%s226 + $0x68] sm:$0xff] %v826
      %967 = vst [vmem:[%s226 + $0x70] sm:$0xff] %v829
      %968 = vst [vmem:[%s226 + $0x78] sm:$0xff] %v831
      %969 = vst [vmem:[%s226 + $0x80] sm:$0xff] %v834
      %970 = vst [vmem:[%s226 + $0x88] sm:$0xff] %v836
      %971 = vst [vmem:[%s226 + $0x90] sm:$0xff] %v839
      %972 = vst [vmem:[%s226 + $0x98] sm:$0xff] %v841
      %973 = vst [vmem:[%s226 + $0xa0] sm:$0xff] %v844
      %974 = vst [vmem:[%s226 + $0xa8] sm:$0xff] %v846
      %975 = vst [vmem:[%s226 + $0xb0] sm:$0xff] %v849
      %976 = vst [vmem:[%s226 + $0xb8] sm:$0xff] %v851
      %977 = vst [vmem:[%s226 + $0xc0] sm:$0xff] %v854
      %978 = vst [vmem:[%s226 + $0xc8] sm:$0xff] %v856
      %979 = vst [vmem:[%s226 + $0xd0] sm:$0xff] %v859
      %980 = vst [vmem:[%s226 + $0xd8] sm:$0xff] %v861
      %981 = vst [vmem:[%s226 + $0xe0] sm:$0xff] %v864
      %982 = vst [vmem:[%s226 + $0xe8] sm:$0xff] %v866
      %983 = vst [vmem:[%s226 + $0xf0] sm:$0xff] %v869
      %984 = vst [vmem:[%s226 + $0xf8] sm:$0xff] %v871
      %985 = vst [vmem:[%s226 + $0x100] sm:$0xff] %v874
      %986 = vst [vmem:[%s226 + $0x108] sm:$0xff] %v876
      %987 = vst [vmem:[%s226 + $0x110] sm:$0xff] %v879
      %988 = vst [vmem:[%s226 + $0x118] sm:$0xff] %v881
      %989 = vst [vmem:[%s226 + $0x120] sm:$0xff] %v884
      %990 = vst [vmem:[%s226 + $0x128] sm:$0xff] %v886
      %991 = vst [vmem:[%s226 + $0x130] sm:$0xff] %v889
      %992 = vst [vmem:[%s226 + $0x138] sm:$0xff] %v891
      %993 = vst [vmem:[%s226 + $0x140] sm:$0xff] %v894
      %994 = vst [vmem:[%s226 + $0x148] sm:$0xff] %v896
      %995 = vst [vmem:[%s226 + $0x150] sm:$0xff] %v899
      %996 = vst [vmem:[%s226 + $0x158] sm:$0xff] %v901
      %997 = vst [vmem:[%s226 + $0x160] sm:$0xff] %v904
      %998 = vst [vmem:[%s226 + $0x168] sm:$0xff] %v906
      %999 = vst [vmem:[%s226 + $0x170] sm:$0xff] %v909
      %1000 = vst [vmem:[%s226 + $0x178] sm:$0xff] %v911
      %1001 = vst [vmem:[%s226 + $0x180] sm:$0xff] %v914
      %1002 = vst [vmem:[%s226 + $0x188] sm:$0xff] %v916
      %1003 = vst [vmem:[%s226 + $0x190] sm:$0xff] %v919
      %1004 = vst [vmem:[%s226 + $0x198] sm:$0xff] %v921
      %1005 = vst [vmem:[%s226 + $0x1a0] sm:$0xff] %v924
      %1006 = vst [vmem:[%s226 + $0x1a8] sm:$0xff] %v926
      %1007 = vst [vmem:[%s226 + $0x1b0] sm:$0xff] %v929
      %1008 = vst [vmem:[%s226 + $0x1b8] sm:$0xff] %v931
      %1009 = vst [vmem:[%s226 + $0x1c0] sm:$0xff] %v934
      %1010 = vst [vmem:[%s226 + $0x1c8] sm:$0xff] %v936
      %1011 = vst [vmem:[%s226 + $0x1d0] sm:$0xff] %v939
      %1012 = vst [vmem:[%s226 + $0x1d8] sm:$0xff] %v941
      %1013 = vst [vmem:[%s226 + $0x1e0] sm:$0xff] %v944
      %1014 = vst [vmem:[%s226 + $0x1e8] sm:$0xff] %v946
      %1015 = vst [vmem:[%s226 + $0x1f0] sm:$0xff] %v949
      %1016 = vst [vmem:[%s226 + $0x1f8] sm:$0xff] %v951
      %s1017 = smul.u32 64, %s16
      %p1018 = scmp.lt.s32.totalorder %s1017, 255
      %s1019 = scalar_select %p1018, %s1017, 255
      %s1020 = smul.addr %s1019, 8
      %s1021 = scalar_lea.vmem %s5, %s1020
      // Predicated region
      $region41: #{inpainting_net_forward.7} parent=39 // pred_check
        %p1022 = pneg %p144
      $region42: #{inpainting_net_forward.7} parent=39 // pred_check_branch
        %1024 = sbr.rel (%p1022) target = $region44
      $region43: #{inpainting_net_forward.7} parent=39 // pred_region
        %s1025 = smul.u32 64, %s16
      $region44: #{inpainting_net_forward.7} parent=39 // pred_fallthru
        _
    $region40: #{inpainting_net_forward.7} parent=5 // pred_fallthru
      _
    %p1026 = scmp.le.s32.totalorder 2, %s11
    // Predicated region
    $region45: #{inpainting_net_forward.7} parent=5 // pred_check
      %p1027 = pneg %p1026
    $region46: #{inpainting_net_forward.7} parent=5 // pred_check_branch
      %1029 = sbr.rel (%p1027) target = $region48
    $region47: #{inpainting_net_forward.7} parent=5 // pred_region
      %s1030 = ssub.s32 %s11, 2
      // Predicated region
      $region49: #{inpainting_net_forward.7} parent=47 // pred_check
        %p1031 = pneg %p150
      $region50: #{inpainting_net_forward.7} parent=47 // pred_check_branch
        %1033 = sbr.rel (%p1031) target = $region52
      $region51: #{inpainting_net_forward.7} parent=47 // pred_region
        %s1034 = smul.u32 64, %s17
        %p1035 = scmp.lt.s32.totalorder %s1034, 255
        %s1036 = scalar_select %p1035, %s1034, 255
        %s1037 = smul.addr %s1036, 8
        %s1038 = scalar_lea.vmem %s5, %s1037
      $region52: #{inpainting_net_forward.7} parent=47 // pred_fallthru
        _
    $region48: #{inpainting_net_forward.7} parent=5 // pred_fallthru
      _
  $region6: #{inpainting_net_forward.7} parent=0 // loop_footer
    %s15 = sadd.s32 1, %s11
  $region7: #{inpainting_net_forward.7} parent=0 // loop_footer_branch
    %10 = sbr.rel target = $region3
  $region8: #{inpainting_net_forward.7} parent=0 // loop_exit
    _

</llo_original>
